<compile_context>
chip_gen: v5e
topology: v5e:2x2
jax: 0.10.0
libtpu: 0.0.40
codegen_flags: <defaults>
</compile_context>

<pallas_src>
import functools
import numpy as np
import jax
import jax.numpy as jnp
from jax import lax
from jax.experimental import pallas as pl
from jax.experimental.pallas import tpu as pltpu


# -----------------------------------------------------------------------------
# Fused kernel: ConvLSTM gates + Self-Attention Memory
# -----------------------------------------------------------------------------
def sa_convlstm_kernel(xh_ref, c_ref, m_ref,
                       w_lstm_ref, b_lstm_ref,
                       w_hp_ref, b_hp_ref, w_mp_ref, b_mp_ref,
                       wz_h_ref, wz_m_ref, bz_ref,
                       w_gz_ref, w_gh_ref, b_g_ref,
                       ct_ref, ht_ref, mt_ref):
    cf = c_ref.shape[1]
    ci = (w_hp_ref.shape[0] - cf) // 2

    xh = xh_ref[0]                      # (Cin*K*K + Cf, N)  bf16
    c = c_ref[0]                        # (Cf, N)            f32
    m = m_ref[0]                        # (Cf, N)            f32

    # ---- stage 1: fused ConvLSTM gates (one fat GEMM), gate order i, f, g, o --
    gates = (jnp.dot(w_lstm_ref[...], xh, preferred_element_type=jnp.float32)
             + b_lstm_ref[...])         # (4*Cf, N)
    i = jax.nn.sigmoid(gates[0 * cf:1 * cf])
    f = jax.nn.sigmoid(gates[1 * cf:2 * cf])
    g = jnp.tanh(gates[2 * cf:3 * cf])
    o = jax.nn.sigmoid(gates[3 * cf:4 * cf])
    ct = f * c + i * g
    ht = o * jnp.tanh(ct)               # kept on-chip; never written to HBM
    ct_ref[0] = ct

    ht_b = ht.astype(jnp.bfloat16)

    # ---- stage 2: Self-Attention Memory ------------------------------------
    # fused projections: [q; kh; vh] = Whp @ ht ,  [km; vm] = Wmp @ m
    ph = (jnp.dot(w_hp_ref[...], ht_b, preferred_element_type=jnp.float32)
          + b_hp_ref[...])              # (2*Ci + Cf, N)
    pm = (jnp.dot(w_mp_ref[...], m.astype(jnp.bfloat16),
                  preferred_element_type=jnp.float32)
          + b_mp_ref[...])              # (Ci + Cf, N)
    q, kh, vh = ph[0:ci], ph[ci:2 * ci], ph[2 * ci:2 * ci + cf]
    km, vm = pm[0:ci], pm[ci:ci + cf]

    # attention scores (N, N): contract the channel (sublane) dim -> q^T @ k
    # TODO(synk): flash-style query-block tiling of these (N, N) maps for large
    # frames (N >= 2048) to stay inside v7x's 64 MiB VMEM.
    cdim0 = (((0,), (0,)), ((), ()))
    q_b = q.astype(jnp.bfloat16)
    sh = lax.dot_general(q_b, kh.astype(jnp.bfloat16), cdim0,
                         preferred_element_type=jnp.float32)   # (N, N)
    sm = lax.dot_general(q_b, km.astype(jnp.bfloat16), cdim0,
                         preferred_element_type=jnp.float32)   # (N, N)

    def softmax_rows(s):                # explicit softmax, divide on the EUP
        p = jnp.exp(s - jnp.max(s, axis=-1, keepdims=True))
        return p * pl.reciprocal(jnp.sum(p, axis=-1, keepdims=True), approx=True)

    ah = softmax_rows(sh)
    am = softmax_rows(sm)

    # zh[c, q] = sum_k vh[c, k] * ah[q, k]   (== Vh @ Ah^T)
    cdim1 = (((1,), (1,)), ((), ()))
    zh = lax.dot_general(vh.astype(jnp.bfloat16), ah.astype(jnp.bfloat16), cdim1,
                         preferred_element_type=jnp.float32)   # (Cf, N)
    zm = lax.dot_general(vm.astype(jnp.bfloat16), am.astype(jnp.bfloat16), cdim1,
                         preferred_element_type=jnp.float32)   # (Cf, N)
    z = (jnp.dot(wz_h_ref[...], zh.astype(jnp.bfloat16),
                 preferred_element_type=jnp.float32)
         + jnp.dot(wz_m_ref[...], zm.astype(jnp.bfloat16),
                   preferred_element_type=jnp.float32)
         + bz_ref[...])                 # (Cf, N)

    # fused SAM memory gates, order i, g, o
    g2 = (jnp.dot(w_gz_ref[...], z.astype(jnp.bfloat16),
                  preferred_element_type=jnp.float32)
          + jnp.dot(w_gh_ref[...], ht_b, preferred_element_type=jnp.float32)
          + b_g_ref[...])               # (3*Cf, N)
    i2 = jax.nn.sigmoid(g2[0 * cf:1 * cf])
    gg = jnp.tanh(g2[1 * cf:2 * cf])
    o2 = jax.nn.sigmoid(g2[2 * cf:3 * cf])

    mt = (1.0 - i2) * m + i2 * gg
    ht_ref[0] = o2 * mt
    mt_ref[0] = mt


# -----------------------------------------------------------------------------
# pallas_call plumbing
# -----------------------------------------------------------------------------
def cell_step(xh, c, m, p):
    B, CK, N = xh.shape
    Cf = c.shape[1]
    act = lambda ch: pl.BlockSpec((1, ch, N), lambda b: (b, 0, 0))
    wsp = lambda a: pl.BlockSpec(a.shape, lambda b: (0, 0))   # constant index: resident
    out = jax.ShapeDtypeStruct((B, Cf, N), jnp.float32)
    weight_names = ("w_lstm", "b_lstm", "w_hp", "b_hp", "w_mp", "b_mp",
                    "wz_h", "wz_m", "bz", "w_gz", "w_gh", "b_g")
    return pl.pallas_call(
        sa_convlstm_kernel,
        out_shape=(out, out, out),
        grid=(B,),
        in_specs=[act(CK), act(Cf), act(Cf)] + [wsp(p[n]) for n in weight_names],
        out_specs=(act(Cf), act(Cf), act(Cf)),
        compiler_params=pltpu.CompilerParams(
            dimension_semantics=("parallel",),      # v7x: one batch per TensorCore
            vmem_limit_bytes=32 * 1024 * 1024),
    )(xh, c, m, *[p[n] for n in weight_names])


# -----------------------------------------------------------------------------
# Glue: channel-major flattening, im2col, parameter packing
# -----------------------------------------------------------------------------
def im2col_cn(x, k, pad):
    # x: (B, Cin, H, W) -> (B, Cin*k*k, H*W); patch order (cin, kh, kw), channel-major.
    B, C, H, W = x.shape
    xp = jnp.pad(x, ((0, 0), (0, 0), (pad, pad), (pad, pad)))
    cols = [xp[:, :, kh:kh + H, kw:kw + W] for kh in range(k) for kw in range(k)]
    patches = jnp.stack(cols, axis=2)               # (B, C, k*k, H, W)
    return patches.reshape(B, C * k * k, H * W)


def conv_to_mat(w):
    # torch conv weight (Cout, Cin, kh, kw) -> (Cout, Cin*kh*kw) for out = W @ x_cols
    return w.reshape(w.shape[0], -1)


def init_params(key, Cin, Cf, Ci, K):
    """Deterministic PyTorch-style conv weights (OIHW) + biases."""
    def conv_init(k, cout, cin, ks):
        k1, k2 = jax.random.split(k)
        bound = 1.0 / np.sqrt(cin * ks * ks)
        w = jax.random.uniform(k1, (cout, cin, ks, ks), jnp.float32, -bound, bound)
        b = jax.random.uniform(k2, (cout,), jnp.float32, -bound, bound)
        return w, b

    names = [("Wxi", Cf, Cin, K), ("Whi", Cf, Cf, 1),
             ("Wxf", Cf, Cin, K), ("Whf", Cf, Cf, 1),
             ("Wxg", Cf, Cin, K), ("Whg", Cf, Cf, 1),
             ("Wxo", Cf, Cin, K), ("Who", Cf, Cf, 1),
             ("Wq", Ci, Cf, 1), ("Whk", Ci, Cf, 1), ("Whv", Cf, Cf, 1),
             ("Wmk", Ci, Cf, 1), ("Wmv", Cf, Cf, 1), ("Wz", Cf, 2 * Cf, 1),
             ("Wmzo", Cf, Cf, 1), ("Wmho", Cf, Cf, 1),
             ("Wmzg", Cf, Cf, 1), ("Wmhg", Cf, Cf, 1),
             ("Wmzi", Cf, Cf, 1), ("Wmhi", Cf, Cf, 1)]
    P = {}
    keys = jax.random.split(key, len(names))
    for kk, (name, cout, cin, ks) in zip(keys, names):
        w, b = conv_init(kk, cout, cin, ks)
        P[name] = w
        P["b" + name[1:]] = b
    return P


def pack_params(P):
    """Pack per-gate torch weights into fused channel-major matmul weights."""
    bf = lambda a: a.astype(jnp.bfloat16)
    col = lambda a: a[:, None]                              # bias -> (Cout, 1), f32
    # ConvLSTM: gate order i, f, g, o; contraction dim = [x-patches | h_prev]
    wx = jnp.concatenate([conv_to_mat(P[n]) for n in ("Wxi", "Wxf", "Wxg", "Wxo")], axis=0)
    wh = jnp.concatenate([conv_to_mat(P[n]) for n in ("Whi", "Whf", "Whg", "Who")], axis=0)
    w_lstm = bf(jnp.concatenate([wx, wh], axis=1))          # (4Cf, Cin*K*K + Cf)
    b_lstm = col(jnp.concatenate([P["bxi"] + P["bhi"], P["bxf"] + P["bhf"],
                                  P["bxg"] + P["bhg"], P["bxo"] + P["bho"]]))
    # SAM fused projections
    w_hp = bf(jnp.concatenate([conv_to_mat(P["Wq"]), conv_to_mat(P["Whk"]),
                               conv_to_mat(P["Whv"])], axis=0))   # (2Ci+Cf, Cf)
    b_hp = col(jnp.concatenate([P["bq"], P["bhk"], P["bhv"]]))
    w_mp = bf(jnp.concatenate([conv_to_mat(P["Wmk"]), conv_to_mat(P["Wmv"])], axis=0))
    b_mp = col(jnp.concatenate([P["bmk"], P["bmv"]]))
    # Wz split into its Zh / Zm halves
    wz = conv_to_mat(P["Wz"])                               # (Cf, 2Cf)
    cf = wz.shape[0]
    wz_h, wz_m, bz = bf(wz[:, :cf]), bf(wz[:, cf:]), col(P["bz"])
    # SAM gates: order i, g, o
    w_gz = bf(jnp.concatenate([conv_to_mat(P[n]) for n in ("Wmzi", "Wmzg", "Wmzo")], axis=0))
    w_gh = bf(jnp.concatenate([conv_to_mat(P[n]) for n in ("Wmhi", "Wmhg", "Wmho")], axis=0))
    b_g = col(jnp.concatenate([P["bmzi"] + P["bmhi"], P["bmzg"] + P["bmhg"],
                               P["bmzo"] + P["bmho"]]))
    return dict(w_lstm=w_lstm, b_lstm=b_lstm, w_hp=w_hp, b_hp=b_hp,
                w_mp=w_mp, b_mp=b_mp, wz_h=wz_h, wz_m=wz_m, bz=bz,
                w_gz=w_gz, w_gh=w_gh, b_g=b_g)


def sa_convlstm_cell_pallas(x, ct_1, ht_1, mt_1, P, K=3, pad=1):
    """Full SAConvLSTMCell forward. NCHW in, NCHW out (matches PyTorch)."""
    B, _, H, W = x.shape
    Cf = ct_1.shape[1]
    N = H * W
    p = pack_params(P)
    # TODO(synk): for large H*W replace host-side im2col (K*K input inflation)
    # with K*K shifted matmul-accumulates inside the kernel.
    xp = im2col_cn(x, K, pad)                               # (B, Cin*K*K, N)
    xh = jnp.concatenate([xp, ht_1.reshape(B, Cf, N)], axis=1).astype(jnp.bfloat16)
    c = ct_1.reshape(B, Cf, N)
    m = mt_1.reshape(B, Cf, N)
    ct, ht2, mt = cell_step(xh, c, m, p)
    back = lambda t: t.reshape(B, Cf, H, W)
    return back(ct), back(ht2), back(mt)


# -----------------------------------------------------------------------------
# Pure-JAX reference mirroring the PyTorch module (NCHW, explicit convs)
# -----------------------------------------------------------------------------
def _conv(x, w, b, pad):
    out = lax.conv_general_dilated(
        x, w, window_strides=(1, 1), padding=[(pad, pad), (pad, pad)],
        dimension_numbers=("NCHW", "OIHW", "NCHW"))
    return out + b[None, :, None, None]


def reference_forward(x, ct_1, ht_1, mt_1, P):
    it = jax.nn.sigmoid(_conv(x, P["Wxi"], P["bxi"], 1) + _conv(ht_1, P["Whi"], P["bhi"], 0))
    ft = jax.nn.sigmoid(_conv(x, P["Wxf"], P["bxf"], 1) + _conv(ht_1, P["Whf"], P["bhf"], 0))
    gt = jnp.tanh(_conv(x, P["Wxg"], P["bxg"], 1) + _conv(ht_1, P["Whg"], P["bhg"], 0))
    Ct = ft * ct_1 + it * gt
    ot = jax.nn.sigmoid(_conv(x, P["Wxo"], P["bxo"], 1) + _conv(ht_1, P["Who"], P["bho"], 0))
    Ht = ot * jnp.tanh(Ct)

    B, Cf, H, W = Ht.shape
    N = H * W
    c1 = lambda t, wn: _conv(t, P[wn], P["b" + wn[1:]], 0)
    Q = c1(Ht, "Wq").reshape(B, -1, N)
    Kh = c1(Ht, "Whk").reshape(B, -1, N)
    Vh = c1(Ht, "Whv").reshape(B, -1, N)
    Km = c1(mt_1, "Wmk").reshape(B, -1, N)
    Vm = c1(mt_1, "Wmv").reshape(B, -1, N)
    QT = jnp.swapaxes(Q, -2, -1)
    Ah = jax.nn.softmax(jnp.matmul(QT, Kh), axis=-1)
    Am = jax.nn.softmax(jnp.matmul(QT, Km), axis=-1)
    Zh = jnp.matmul(Vh, jnp.swapaxes(Ah, -2, -1))
    Zm = jnp.matmul(Vm, jnp.swapaxes(Am, -2, -1))
    Z = c1(jnp.concatenate([Zh, Zm], axis=-2).reshape(B, 2 * Cf, H, W), "Wz")
    i2 = jax.nn.sigmoid(c1(Z, "Wmzi") + c1(Ht, "Wmhi"))
    g2 = jnp.tanh(c1(Z, "Wmzg") + c1(Ht, "Wmhg"))
    Mt = (1.0 - i2) * mt_1 + i2 * g2
    o2 = jax.nn.sigmoid(c1(Z, "Wmzo") + c1(Ht, "Wmho"))
    Ht2 = o2 * Mt
    return Ct, Ht2, Mt


# -----------------------------------------------------------------------------
if __name__ == "__main__":
    B, Cin, Cf, Ci, H, W, K, pad = 2, 4, 32, 16, 16, 16, 3, 1

    key = jax.random.PRNGKey(0)
    kx, kc, kh, km, kp = jax.random.split(key, 5)
    x = jax.random.normal(kx, (B, Cin, H, W), jnp.float32)
    ct_1 = jax.random.normal(kc, (B, Cf, H, W), jnp.float32)
    ht_1 = jax.random.normal(kh, (B, Cf, H, W), jnp.float32)
    mt_1 = jax.random.normal(km, (B, Cf, H, W), jnp.float32)

    params = init_params(kp, Cin, Cf, Ci, K)

    fwd = jax.jit(functools.partial(sa_convlstm_cell_pallas, K=K, pad=pad))
    Ct, Ht, Mt = fwd(x, ct_1, ht_1, mt_1, params)
    jax.block_until_ready((Ct, Ht, Mt))

    Ct_r, Ht_r, Mt_r = reference_forward(x, ct_1, ht_1, mt_1, params)
    # bf16 MXU operands (f32 accumulation) -> tolerance reflects bf16 rounding.
    tol = dict(atol=2e-2, rtol=2e-2)
    np.testing.assert_allclose(np.asarray(Ct), np.asarray(Ct_r), **tol)
    np.testing.assert_allclose(np.asarray(Ht), np.asarray(Ht_r), **tol)
    np.testing.assert_allclose(np.asarray(Mt), np.asarray(Mt_r), **tol)

    print("KERNEL_OK")
</pallas_src>

<mosaic_0001>
module attributes {stable_mosaic.version = 11 : i64} {
  func.func @sa_convlstm_kernel(%arg0: i32, %arg1: memref<1x68x256xbf16, #tpu.memory_space<vmem>>, %arg2: memref<1x32x256xf32, #tpu.memory_space<vmem>>, %arg3: memref<1x32x256xf32, #tpu.memory_space<vmem>>, %arg4: memref<128x68xbf16, #tpu.memory_space<vmem>>, %arg5: memref<128x1xf32, #tpu.memory_space<vmem>>, %arg6: memref<64x32xbf16, #tpu.memory_space<vmem>>, %arg7: memref<64x1xf32, #tpu.memory_space<vmem>>, %arg8: memref<48x32xbf16, #tpu.memory_space<vmem>>, %arg9: memref<48x1xf32, #tpu.memory_space<vmem>>, %arg10: memref<32x32xbf16, #tpu.memory_space<vmem>>, %arg11: memref<32x32xbf16, #tpu.memory_space<vmem>>, %arg12: memref<32x1xf32, #tpu.memory_space<vmem>>, %arg13: memref<96x32xbf16, #tpu.memory_space<vmem>>, %arg14: memref<96x32xbf16, #tpu.memory_space<vmem>>, %arg15: memref<96x1xf32, #tpu.memory_space<vmem>>, %arg16: memref<1x32x256xf32, #tpu.memory_space<vmem>>, %arg17: memref<1x32x256xf32, #tpu.memory_space<vmem>>, %arg18: memref<1x32x256xf32, #tpu.memory_space<vmem>>) attributes {dimension_semantics = [#tpu.dimension_semantics<parallel>], iteration_bounds = array<i64: 2>, scalar_prefetch = 0 : i64, scratch_operands = 0 : i64, tpu.core_type = #tpu.core_type<tc>, window_params = [{transform_indices = @transform_0, window_bounds = array<i64: 1, 68, 256>}, {transform_indices = @transform_1, window_bounds = array<i64: 1, 32, 256>}, {transform_indices = @transform_2, window_bounds = array<i64: 1, 32, 256>}, {pipeline_mode = #tpu.pipeline_mode<synchronous>, transform_indices = @transform_3, window_bounds = array<i64: 128, 68>}, {pipeline_mode = #tpu.pipeline_mode<synchronous>, transform_indices = @transform_4, window_bounds = array<i64: 128, 1>}, {pipeline_mode = #tpu.pipeline_mode<synchronous>, transform_indices = @transform_5, window_bounds = array<i64: 64, 32>}, {pipeline_mode = #tpu.pipeline_mode<synchronous>, transform_indices = @transform_6, window_bounds = array<i64: 64, 1>}, {pipeline_mode = #tpu.pipeline_mode<synchronous>, transform_indices = @transform_7, window_bounds = array<i64: 48, 32>}, {pipeline_mode = #tpu.pipeline_mode<synchronous>, transform_indices = @transform_8, window_bounds = array<i64: 48, 1>}, {pipeline_mode = #tpu.pipeline_mode<synchronous>, transform_indices = @transform_9, window_bounds = array<i64: 32, 32>}, {pipeline_mode = #tpu.pipeline_mode<synchronous>, transform_indices = @transform_10, window_bounds = array<i64: 32, 32>}, {pipeline_mode = #tpu.pipeline_mode<synchronous>, transform_indices = @transform_11, window_bounds = array<i64: 32, 1>}, {pipeline_mode = #tpu.pipeline_mode<synchronous>, transform_indices = @transform_12, window_bounds = array<i64: 96, 32>}, {pipeline_mode = #tpu.pipeline_mode<synchronous>, transform_indices = @transform_13, window_bounds = array<i64: 96, 32>}, {pipeline_mode = #tpu.pipeline_mode<synchronous>, transform_indices = @transform_14, window_bounds = array<i64: 96, 1>}, {transform_indices = @transform_15, window_bounds = array<i64: 1, 32, 256>}, {transform_indices = @transform_16, window_bounds = array<i64: 1, 32, 256>}, {transform_indices = @transform_17, window_bounds = array<i64: 1, 32, 256>}]} {
    %c0 = arith.constant 0 : index
    %c0_0 = arith.constant 0 : index
    %c0_1 = arith.constant 0 : index
    %0 = vector.load %arg1[%c0, %c0_0, %c0_1] : memref<1x68x256xbf16, #tpu.memory_space<vmem>>, vector<1x68x256xbf16>
    %1 = vector.shape_cast %0 : vector<1x68x256xbf16> to vector<68x256xbf16>
    %c0_2 = arith.constant 0 : index
    %c0_3 = arith.constant 0 : index
    %c0_4 = arith.constant 0 : index
    %2 = vector.load %arg2[%c0_2, %c0_3, %c0_4] : memref<1x32x256xf32, #tpu.memory_space<vmem>>, vector<1x32x256xf32>
    %3 = vector.shape_cast %2 : vector<1x32x256xf32> to vector<32x256xf32>
    %c0_5 = arith.constant 0 : index
    %c0_6 = arith.constant 0 : index
    %c0_7 = arith.constant 0 : index
    %4 = vector.load %arg3[%c0_5, %c0_6, %c0_7] : memref<1x32x256xf32, #tpu.memory_space<vmem>>, vector<1x32x256xf32>
    %5 = vector.shape_cast %4 : vector<1x32x256xf32> to vector<32x256xf32>
    %c0_8 = arith.constant 0 : index
    %c0_9 = arith.constant 0 : index
    %6 = vector.load %arg4[%c0_8, %c0_9] : memref<128x68xbf16, #tpu.memory_space<vmem>>, vector<128x68xbf16>
    %cst = arith.constant dense<0.000000e+00> : vector<128x256xf32>
    %7 = tpu.matmul %6, %1, %cst {dimension_numbers = #tpu.dot_dimension_numbers<[1], [0], [0], [1], [0, 0, 1, 1], [], []>} : vector<128x68xbf16>, vector<68x256xbf16>, vector<128x256xf32> -> vector<128x256xf32>
    %c0_10 = arith.constant 0 : index
    %c0_11 = arith.constant 0 : index
    %8 = vector.load %arg5[%c0_10, %c0_11] : memref<128x1xf32, #tpu.memory_space<vmem>>, vector<128x1xf32>
    %9 = vector.broadcast %8 : vector<128x1xf32> to vector<128x256xf32>
    %10 = arith.addf %7, %9 : vector<128x256xf32>
    %11 = vector.extract_strided_slice %10 {offsets = [0, 0], sizes = [32, 256], strides = [1, 1]} : vector<128x256xf32> to vector<32x256xf32>
    %12 = arith.negf %11 : vector<32x256xf32>
    %13 = math.exp %12 : vector<32x256xf32>
    %cst_12 = arith.constant 1.000000e+00 : f32
    %14 = vector.broadcast %cst_12 : f32 to vector<32x256xf32>
    %15 = arith.addf %14, %13 : vector<32x256xf32>
    %16 = arith.divf %14, %15 : vector<32x256xf32>
    %17 = vector.extract_strided_slice %10 {offsets = [32, 0], sizes = [32, 256], strides = [1, 1]} : vector<128x256xf32> to vector<32x256xf32>
    %18 = arith.negf %17 : vector<32x256xf32>
    %19 = math.exp %18 : vector<32x256xf32>
    %cst_13 = arith.constant 1.000000e+00 : f32
    %20 = vector.broadcast %cst_13 : f32 to vector<32x256xf32>
    %21 = arith.addf %20, %19 : vector<32x256xf32>
    %22 = arith.divf %20, %21 : vector<32x256xf32>
    %23 = vector.extract_strided_slice %10 {offsets = [64, 0], sizes = [32, 256], strides = [1, 1]} : vector<128x256xf32> to vector<32x256xf32>
    %24 = math.tanh %23 : vector<32x256xf32>
    %25 = vector.extract_strided_slice %10 {offsets = [96, 0], sizes = [32, 256], strides = [1, 1]} : vector<128x256xf32> to vector<32x256xf32>
    %26 = arith.negf %25 : vector<32x256xf32>
    %27 = math.exp %26 : vector<32x256xf32>
    %cst_14 = arith.constant 1.000000e+00 : f32
    %28 = vector.broadcast %cst_14 : f32 to vector<32x256xf32>
    %29 = arith.addf %28, %27 : vector<32x256xf32>
    %30 = arith.divf %28, %29 : vector<32x256xf32>
    %31 = arith.mulf %22, %3 : vector<32x256xf32>
    %32 = arith.mulf %16, %24 : vector<32x256xf32>
    %33 = arith.addf %31, %32 : vector<32x256xf32>
    %34 = math.tanh %33 : vector<32x256xf32>
    %35 = arith.mulf %30, %34 : vector<32x256xf32>
    %c0_15 = arith.constant 0 : index
    %c0_16 = arith.constant 0 : index
    %c0_17 = arith.constant 0 : index
    %36 = vector.load %arg16[%c0_15, %c0_16, %c0_17] : memref<1x32x256xf32, #tpu.memory_space<vmem>>, vector<1x32x256xf32>
    %37 = vector.shape_cast %36 : vector<1x32x256xf32> to vector<32x256xf32>
    %38 = vector.shape_cast %33 : vector<32x256xf32> to vector<1x32x256xf32>
    tpu.vector_store %arg16[%c0_15, %c0_16, %c0_17], %38 {strides = array<i32>} : memref<1x32x256xf32, #tpu.memory_space<vmem>>, vector<1x32x256xf32>,
    %39 = arith.truncf %35 : vector<32x256xf32> to vector<32x256xbf16>
    %c0_18 = arith.constant 0 : index
    %c0_19 = arith.constant 0 : index
    %40 = vector.load %arg6[%c0_18, %c0_19] : memref<64x32xbf16, #tpu.memory_space<vmem>>, vector<64x32xbf16>
    %cst_20 = arith.constant dense<0.000000e+00> : vector<64x256xf32>
    %41 = tpu.matmul %40, %39, %cst_20 {dimension_numbers = #tpu.dot_dimension_numbers<[1], [0], [0], [1], [0, 0, 1, 1], [], []>} : vector<64x32xbf16>, vector<32x256xbf16>, vector<64x256xf32> -> vector<64x256xf32>
    %c0_21 = arith.constant 0 : index
    %c0_22 = arith.constant 0 : index
    %42 = vector.load %arg7[%c0_21, %c0_22] : memref<64x1xf32, #tpu.memory_space<vmem>>, vector<64x1xf32>
    %43 = vector.broadcast %42 : vector<64x1xf32> to vector<64x256xf32>
    %44 = arith.addf %41, %43 : vector<64x256xf32>
    %c0_23 = arith.constant 0 : index
    %c0_24 = arith.constant 0 : index
    %45 = vector.load %arg8[%c0_23, %c0_24] : memref<48x32xbf16, #tpu.memory_space<vmem>>, vector<48x32xbf16>
    %46 = arith.truncf %5 : vector<32x256xf32> to vector<32x256xbf16>
    %cst_25 = arith.constant dense<0.000000e+00> : vector<48x256xf32>
    %47 = tpu.matmul %45, %46, %cst_25 {dimension_numbers = #tpu.dot_dimension_numbers<[1], [0], [0], [1], [0, 0, 1, 1], [], []>} : vector<48x32xbf16>, vector<32x256xbf16>, vector<48x256xf32> -> vector<48x256xf32>
    %c0_26 = arith.constant 0 : index
    %c0_27 = arith.constant 0 : index
    %48 = vector.load %arg9[%c0_26, %c0_27] : memref<48x1xf32, #tpu.memory_space<vmem>>, vector<48x1xf32>
    %49 = vector.broadcast %48 : vector<48x1xf32> to vector<48x256xf32>
    %50 = arith.addf %47, %49 : vector<48x256xf32>
    %51 = vector.extract_strided_slice %44 {offsets = [0, 0], sizes = [16, 256], strides = [1, 1]} : vector<64x256xf32> to vector<16x256xf32>
    %52 = vector.extract_strided_slice %44 {offsets = [16, 0], sizes = [16, 256], strides = [1, 1]} : vector<64x256xf32> to vector<16x256xf32>
    %53 = vector.extract_strided_slice %44 {offsets = [32, 0], sizes = [32, 256], strides = [1, 1]} : vector<64x256xf32> to vector<32x256xf32>
    %54 = vector.extract_strided_slice %50 {offsets = [0, 0], sizes = [16, 256], strides = [1, 1]} : vector<48x256xf32> to vector<16x256xf32>
    %55 = vector.extract_strided_slice %50 {offsets = [16, 0], sizes = [32, 256], strides = [1, 1]} : vector<48x256xf32> to vector<32x256xf32>
    %56 = arith.truncf %51 : vector<16x256xf32> to vector<16x256xbf16>
    %57 = arith.truncf %52 : vector<16x256xf32> to vector<16x256xbf16>
    %cst_28 = arith.constant dense<0.000000e+00> : vector<256x256xf32>
    %58 = tpu.matmul %56, %57, %cst_28 {dimension_numbers = #tpu.dot_dimension_numbers<[0], [0], [1], [1], [0, 1, 1, 1], [], []>} : vector<16x256xbf16>, vector<16x256xbf16>, vector<256x256xf32> -> vector<256x256xf32>
    %59 = arith.truncf %54 : vector<16x256xf32> to vector<16x256xbf16>
    %cst_29 = arith.constant dense<0.000000e+00> : vector<256x256xf32>
    %60 = tpu.matmul %56, %59, %cst_29 {dimension_numbers = #tpu.dot_dimension_numbers<[0], [0], [1], [1], [0, 1, 1, 1], [], []>} : vector<16x256xbf16>, vector<16x256xbf16>, vector<256x256xf32> -> vector<256x256xf32>
    %cst_30 = arith.constant dense<0xFF800000> : vector<256xf32>
    %61 = vector.multi_reduction <maximumf>, %58, %cst_30 [1] : vector<256x256xf32> to vector<256xf32>
    %62 = vector.shape_cast %61 : vector<256xf32> to vector<256x1xf32>
    %63 = vector.broadcast %62 : vector<256x1xf32> to vector<256x256xf32>
    %64 = arith.subf %58, %63 : vector<256x256xf32>
    %65 = math.exp %64 : vector<256x256xf32>
    %cst_31 = arith.constant dense<0.000000e+00> : vector<256xf32>
    %66 = vector.multi_reduction <add>, %65, %cst_31 [1] : vector<256x256xf32> to vector<256xf32>
    %67 = vector.shape_cast %66 : vector<256xf32> to vector<256x1xf32>
    %68 = tpu.reciprocal %67 {approx = true} : vector<256x1xf32> -> vector<256x1xf32>
    %69 = vector.broadcast %68 : vector<256x1xf32> to vector<256x256xf32>
    %70 = arith.mulf %65, %69 : vector<256x256xf32>
    %cst_32 = arith.constant dense<0xFF800000> : vector<256xf32>
    %71 = vector.multi_reduction <maximumf>, %60, %cst_32 [1] : vector<256x256xf32> to vector<256xf32>
    %72 = vector.shape_cast %71 : vector<256xf32> to vector<256x1xf32>
    %73 = vector.broadcast %72 : vector<256x1xf32> to vector<256x256xf32>
    %74 = arith.subf %60, %73 : vector<256x256xf32>
    %75 = math.exp %74 : vector<256x256xf32>
    %cst_33 = arith.constant dense<0.000000e+00> : vector<256xf32>
    %76 = vector.multi_reduction <add>, %75, %cst_33 [1] : vector<256x256xf32> to vector<256xf32>
    %77 = vector.shape_cast %76 : vector<256xf32> to vector<256x1xf32>
    %78 = tpu.reciprocal %77 {approx = true} : vector<256x1xf32> -> vector<256x1xf32>
    %79 = vector.broadcast %78 : vector<256x1xf32> to vector<256x256xf32>
    %80 = arith.mulf %75, %79 : vector<256x256xf32>
    %81 = arith.truncf %53 : vector<32x256xf32> to vector<32x256xbf16>
    %82 = arith.truncf %70 : vector<256x256xf32> to vector<256x256xbf16>
    %cst_34 = arith.constant dense<0.000000e+00> : vector<32x256xf32>
    %83 = tpu.matmul %81, %82, %cst_34 {dimension_numbers = #tpu.dot_dimension_numbers<[1], [1], [0], [0], [0, 0, 1, 0], [], []>} : vector<32x256xbf16>, vector<256x256xbf16>, vector<32x256xf32> -> vector<32x256xf32>
    %84 = arith.truncf %55 : vector<32x256xf32> to vector<32x256xbf16>
    %85 = arith.truncf %80 : vector<256x256xf32> to vector<256x256xbf16>
    %cst_35 = arith.constant dense<0.000000e+00> : vector<32x256xf32>
    %86 = tpu.matmul %84, %85, %cst_35 {dimension_numbers = #tpu.dot_dimension_numbers<[1], [1], [0], [0], [0, 0, 1, 0], [], []>} : vector<32x256xbf16>, vector<256x256xbf16>, vector<32x256xf32> -> vector<32x256xf32>
    %c0_36 = arith.constant 0 : index
    %c0_37 = arith.constant 0 : index
    %87 = vector.load %arg10[%c0_36, %c0_37] : memref<32x32xbf16, #tpu.memory_space<vmem>>, vector<32x32xbf16>
    %88 = arith.truncf %83 : vector<32x256xf32> to vector<32x256xbf16>
    %cst_38 = arith.constant dense<0.000000e+00> : vector<32x256xf32>
    %89 = tpu.matmul %87, %88, %cst_38 {dimension_numbers = #tpu.dot_dimension_numbers<[1], [0], [0], [1], [0, 0, 1, 1], [], []>} : vector<32x32xbf16>, vector<32x256xbf16>, vector<32x256xf32> -> vector<32x256xf32>
    %c0_39 = arith.constant 0 : index
    %c0_40 = arith.constant 0 : index
    %90 = vector.load %arg11[%c0_39, %c0_40] : memref<32x32xbf16, #tpu.memory_space<vmem>>, vector<32x32xbf16>
    %91 = arith.truncf %86 : vector<32x256xf32> to vector<32x256xbf16>
    %cst_41 = arith.constant dense<0.000000e+00> : vector<32x256xf32>
    %92 = tpu.matmul %90, %91, %cst_41 {dimension_numbers = #tpu.dot_dimension_numbers<[1], [0], [0], [1], [0, 0, 1, 1], [], []>} : vector<32x32xbf16>, vector<32x256xbf16>, vector<32x256xf32> -> vector<32x256xf32>
    %93 = arith.addf %89, %92 : vector<32x256xf32>
    %c0_42 = arith.constant 0 : index
    %c0_43 = arith.constant 0 : index
    %94 = vector.load %arg12[%c0_42, %c0_43] : memref<32x1xf32, #tpu.memory_space<vmem>>, vector<32x1xf32>
    %95 = vector.broadcast %94 : vector<32x1xf32> to vector<32x256xf32>
    %96 = arith.addf %93, %95 : vector<32x256xf32>
    %c0_44 = arith.constant 0 : index
    %c0_45 = arith.constant 0 : index
    %97 = vector.load %arg13[%c0_44, %c0_45] : memref<96x32xbf16, #tpu.memory_space<vmem>>, vector<96x32xbf16>
    %98 = arith.truncf %96 : vector<32x256xf32> to vector<32x256xbf16>
    %cst_46 = arith.constant dense<0.000000e+00> : vector<96x256xf32>
    %99 = tpu.matmul %97, %98, %cst_46 {dimension_numbers = #tpu.dot_dimension_numbers<[1], [0], [0], [1], [0, 0, 1, 1], [], []>} : vector<96x32xbf16>, vector<32x256xbf16>, vector<96x256xf32> -> vector<96x256xf32>
    %c0_47 = arith.constant 0 : index
    %c0_48 = arith.constant 0 : index
    %100 = vector.load %arg14[%c0_47, %c0_48] : memref<96x32xbf16, #tpu.memory_space<vmem>>, vector<96x32xbf16>
    %cst_49 = arith.constant dense<0.000000e+00> : vector<96x256xf32>
    %101 = tpu.matmul %100, %39, %cst_49 {dimension_numbers = #tpu.dot_dimension_numbers<[1], [0], [0], [1], [0, 0, 1, 1], [], []>} : vector<96x32xbf16>, vector<32x256xbf16>, vector<96x256xf32> -> vector<96x256xf32>
    %102 = arith.addf %99, %101 : vector<96x256xf32>
    %c0_50 = arith.constant 0 : index
    %c0_51 = arith.constant 0 : index
    %103 = vector.load %arg15[%c0_50, %c0_51] : memref<96x1xf32, #tpu.memory_space<vmem>>, vector<96x1xf32>
    %104 = vector.broadcast %103 : vector<96x1xf32> to vector<96x256xf32>
    %105 = arith.addf %102, %104 : vector<96x256xf32>
    %106 = vector.extract_strided_slice %105 {offsets = [0, 0], sizes = [32, 256], strides = [1, 1]} : vector<96x256xf32> to vector<32x256xf32>
    %107 = arith.negf %106 : vector<32x256xf32>
    %108 = math.exp %107 : vector<32x256xf32>
    %cst_52 = arith.constant 1.000000e+00 : f32
    %109 = vector.broadcast %cst_52 : f32 to vector<32x256xf32>
    %110 = arith.addf %109, %108 : vector<32x256xf32>
    %111 = arith.divf %109, %110 : vector<32x256xf32>
    %112 = vector.extract_strided_slice %105 {offsets = [32, 0], sizes = [32, 256], strides = [1, 1]} : vector<96x256xf32> to vector<32x256xf32>
    %113 = math.tanh %112 : vector<32x256xf32>
    %114 = vector.extract_strided_slice %105 {offsets = [64, 0], sizes = [32, 256], strides = [1, 1]} : vector<96x256xf32> to vector<32x256xf32>
    %115 = arith.negf %114 : vector<32x256xf32>
    %116 = math.exp %115 : vector<32x256xf32>
    %cst_53 = arith.constant 1.000000e+00 : f32
    %117 = vector.broadcast %cst_53 : f32 to vector<32x256xf32>
    %118 = arith.addf %117, %116 : vector<32x256xf32>
    %119 = arith.divf %117, %118 : vector<32x256xf32>
    %cst_54 = arith.constant 1.000000e+00 : f32
    %120 = vector.broadcast %cst_54 : f32 to vector<32x256xf32>
    %121 = arith.subf %120, %111 : vector<32x256xf32>
    %122 = arith.mulf %121, %5 : vector<32x256xf32>
    %123 = arith.mulf %111, %113 : vector<32x256xf32>
    %124 = arith.addf %122, %123 : vector<32x256xf32>
    %125 = arith.mulf %119, %124 : vector<32x256xf32>
    %c0_55 = arith.constant 0 : index
    %c0_56 = arith.constant 0 : index
    %c0_57 = arith.constant 0 : index
    %126 = vector.load %arg17[%c0_55, %c0_56, %c0_57] : memref<1x32x256xf32, #tpu.memory_space<vmem>>, vector<1x32x256xf32>
    %127 = vector.shape_cast %126 : vector<1x32x256xf32> to vector<32x256xf32>
    %128 = vector.shape_cast %125 : vector<32x256xf32> to vector<1x32x256xf32>
    tpu.vector_store %arg17[%c0_55, %c0_56, %c0_57], %128 {strides = array<i32>} : memref<1x32x256xf32, #tpu.memory_space<vmem>>, vector<1x32x256xf32>,
    %c0_58 = arith.constant 0 : index
    %c0_59 = arith.constant 0 : index
    %c0_60 = arith.constant 0 : index
    %129 = vector.load %arg18[%c0_58, %c0_59, %c0_60] : memref<1x32x256xf32, #tpu.memory_space<vmem>>, vector<1x32x256xf32>
    %130 = vector.shape_cast %129 : vector<1x32x256xf32> to vector<32x256xf32>
    %131 = vector.shape_cast %124 : vector<32x256xf32> to vector<1x32x256xf32>
    tpu.vector_store %arg18[%c0_58, %c0_59, %c0_60], %131 {strides = array<i32>} : memref<1x32x256xf32, #tpu.memory_space<vmem>>, vector<1x32x256xf32>,
    return
  }
  func.func @transform_0(%arg0: i32) -> (i32, i32, i32) {
    %c0_i32 = arith.constant 0 : i32
    %c0_i32_0 = arith.constant 0 : i32
    %c0_i32_1 = arith.constant 0 : i32
    return %arg0, %c0_i32, %c0_i32_0 : i32, i32, i32
  }
  func.func @transform_1(%arg0: i32) -> (i32, i32, i32) {
    %c0_i32 = arith.constant 0 : i32
    %c0_i32_0 = arith.constant 0 : i32
    %c0_i32_1 = arith.constant 0 : i32
    return %arg0, %c0_i32, %c0_i32_0 : i32, i32, i32
  }
  func.func @transform_2(%arg0: i32) -> (i32, i32, i32) {
    %c0_i32 = arith.constant 0 : i32
    %c0_i32_0 = arith.constant 0 : i32
    %c0_i32_1 = arith.constant 0 : i32
    return %arg0, %c0_i32, %c0_i32_0 : i32, i32, i32
  }
  func.func @transform_3(%arg0: i32) -> (i32, i32) {
    %c0_i32 = arith.constant 0 : i32
    %c0_i32_0 = arith.constant 0 : i32
    %c0_i32_1 = arith.constant 0 : i32
    return %c0_i32, %c0_i32_0 : i32, i32
  }
  func.func @transform_4(%arg0: i32) -> (i32, i32) {
    %c0_i32 = arith.constant 0 : i32
    %c0_i32_0 = arith.constant 0 : i32
    %c0_i32_1 = arith.constant 0 : i32
    return %c0_i32, %c0_i32_0 : i32, i32
  }
  func.func @transform_5(%arg0: i32) -> (i32, i32) {
    %c0_i32 = arith.constant 0 : i32
    %c0_i32_0 = arith.constant 0 : i32
    %c0_i32_1 = arith.constant 0 : i32
    return %c0_i32, %c0_i32_0 : i32, i32
  }
  func.func @transform_6(%arg0: i32) -> (i32, i32) {
    %c0_i32 = arith.constant 0 : i32
    %c0_i32_0 = arith.constant 0 : i32
    %c0_i32_1 = arith.constant 0 : i32
    return %c0_i32, %c0_i32_0 : i32, i32
  }
  func.func @transform_7(%arg0: i32) -> (i32, i32) {
    %c0_i32 = arith.constant 0 : i32
    %c0_i32_0 = arith.constant 0 : i32
    %c0_i32_1 = arith.constant 0 : i32
    return %c0_i32, %c0_i32_0 : i32, i32
  }
  func.func @transform_8(%arg0: i32) -> (i32, i32) {
    %c0_i32 = arith.constant 0 : i32
    %c0_i32_0 = arith.constant 0 : i32
    %c0_i32_1 = arith.constant 0 : i32
    return %c0_i32, %c0_i32_0 : i32, i32
  }
  func.func @transform_9(%arg0: i32) -> (i32, i32) {
    %c0_i32 = arith.constant 0 : i32
    %c0_i32_0 = arith.constant 0 : i32
    %c0_i32_1 = arith.constant 0 : i32
    return %c0_i32, %c0_i32_0 : i32, i32
  }
  func.func @transform_10(%arg0: i32) -> (i32, i32) {
    %c0_i32 = arith.constant 0 : i32
    %c0_i32_0 = arith.constant 0 : i32
    %c0_i32_1 = arith.constant 0 : i32
    return %c0_i32, %c0_i32_0 : i32, i32
  }
  func.func @transform_11(%arg0: i32) -> (i32, i32) {
    %c0_i32 = arith.constant 0 : i32
    %c0_i32_0 = arith.constant 0 : i32
    %c0_i32_1 = arith.constant 0 : i32
    return %c0_i32, %c0_i32_0 : i32, i32
  }
  func.func @transform_12(%arg0: i32) -> (i32, i32) {
    %c0_i32 = arith.constant 0 : i32
    %c0_i32_0 = arith.constant 0 : i32
    %c0_i32_1 = arith.constant 0 : i32
    return %c0_i32, %c0_i32_0 : i32, i32
  }
  func.func @transform_13(%arg0: i32) -> (i32, i32) {
    %c0_i32 = arith.constant 0 : i32
    %c0_i32_0 = arith.constant 0 : i32
    %c0_i32_1 = arith.constant 0 : i32
    return %c0_i32, %c0_i32_0 : i32, i32
  }
  func.func @transform_14(%arg0: i32) -> (i32, i32) {
    %c0_i32 = arith.constant 0 : i32
    %c0_i32_0 = arith.constant 0 : i32
    %c0_i32_1 = arith.constant 0 : i32
    return %c0_i32, %c0_i32_0 : i32, i32
  }
  func.func @transform_15(%arg0: i32) -> (i32, i32, i32) {
    %c0_i32 = arith.constant 0 : i32
    %c0_i32_0 = arith.constant 0 : i32
    %c0_i32_1 = arith.constant 0 : i32
    return %arg0, %c0_i32, %c0_i32_0 : i32, i32, i32
  }
  func.func @transform_16(%arg0: i32) -> (i32, i32, i32) {
    %c0_i32 = arith.constant 0 : i32
    %c0_i32_0 = arith.constant 0 : i32
    %c0_i32_1 = arith.constant 0 : i32
    return %arg0, %c0_i32, %c0_i32_0 : i32, i32, i32
  }
  func.func @transform_17(%arg0: i32) -> (i32, i32, i32) {
    %c0_i32 = arith.constant 0 : i32
    %c0_i32_0 = arith.constant 0 : i32
    %c0_i32_1 = arith.constant 0 : i32
    return %arg0, %c0_i32, %c0_i32_0 : i32, i32, i32
  }
}

</mosaic_0001>

<llo_original>
// kernel: sa_convlstm_cell_pallas.1
$region0: #{sa_convlstm_cell_pallas.1}
  #allocation0 [shape = 'u32[]', space=smem, size = 0x4, offset = 0x4, fixed_abs, tag = 'smem constant byte address 0x4 - core index']
  #allocation1 [shape = 'u32[72,128]{1,0:T(1,128)}', space=vmem, size = 0x9000, scoped, tag = 'internal scratch']
  %s0 = inlined_call_operand.vmem [shape: bf16[2,68,256], index: 0, kind: input, shape index: {}]
  %s1 = inlined_call_operand.vmem [shape: f32[2,32,256], index: 1, kind: input, shape index: {}]
  %s2 = inlined_call_operand.vmem [shape: f32[2,32,256], index: 2, kind: input, shape index: {}]
  %s3 = inlined_call_operand.vmem [shape: bf16[128,68], index: 3, kind: input, shape index: {}]
  %s4 = inlined_call_operand.vmem [shape: f32[128,1], index: 4, kind: input, shape index: {}]
  %s5 = inlined_call_operand.vmem [shape: bf16[64,32], index: 5, kind: input, shape index: {}]
  %s6 = inlined_call_operand.vmem [shape: f32[64,1], index: 6, kind: input, shape index: {}]
  %s7 = inlined_call_operand.vmem [shape: bf16[48,32], index: 7, kind: input, shape index: {}]
  %s8 = inlined_call_operand.vmem [shape: f32[48,1], index: 8, kind: input, shape index: {}]
  %s9 = inlined_call_operand.vmem [shape: bf16[32,32], index: 9, kind: input, shape index: {}]
  %s10 = inlined_call_operand.vmem [shape: bf16[32,32], index: 10, kind: input, shape index: {}]
  %s11 = inlined_call_operand.vmem [shape: f32[32,1], index: 11, kind: input, shape index: {}]
  %s12 = inlined_call_operand.vmem [shape: bf16[96,32], index: 12, kind: input, shape index: {}]
  %s13 = inlined_call_operand.vmem [shape: bf16[96,32], index: 13, kind: input, shape index: {}]
  %s14 = inlined_call_operand.vmem [shape: f32[96,1], index: 14, kind: input, shape index: {}]
  %s15 = inlined_call_operand.vmem [shape: f32[2,32,256], index: 15, kind: output, shape index: {0}]
  %s16 = inlined_call_operand.vmem [shape: f32[2,32,256], index: 16, kind: output, shape index: {1}]
  %s17 = inlined_call_operand.vmem [shape: f32[2,32,256], index: 17, kind: output, shape index: {2}]
  %18 = xla_tuple %s15, %s16, %s17
  %s19 = sld [smem:[#allocation0]]
  $region109: #{sa_convlstm_cell_pallas.1} parent=0
    _
  %s21 = ssub.s32 1, %s19
  %s22 = scalar_select 0, %s21, %s19
  loop: start=0, step=1, limit=4
  $region2: #{sa_convlstm_cell_pallas.1} parent=0 // loop_pre_header
    _
  $region3: #{sa_convlstm_cell_pallas.1} parent=0 // loop_header
    %s24 = sphi 0, %s28
    %p25 = scmp.ge.s32.totalorder %s24, 4
    %s34 = sphi 0, %s36
    %s37 = sphi 0, %s34
    %s38 = sphi 0, %s37
    %s54 = sphi 0, %s38
    %s60 = sphi 0, %s62
    %s63 = sphi 0, %s60
    %s64 = sphi 0, %s63
    %s80 = sphi 0, %s64
    %s86 = sphi 0, %s88
    %s89 = sphi 0, %s86
    %s90 = sphi 0, %s89
    %s106 = sphi 0, %s90
    %s110 = sphi 0, %s110
    %s112 = sphi 0, %s110
    %s113 = sphi 0, %s112
    %s127 = sphi 0, %s113
    %s131 = sphi 0, %s131
    %s133 = sphi 0, %s131
    %s134 = sphi 0, %s133
    %s148 = sphi 0, %s134
    %s152 = sphi 0, %s152
    %s154 = sphi 0, %s152
    %s155 = sphi 0, %s154
    %s169 = sphi 0, %s155
    %s173 = sphi 0, %s173
    %s175 = sphi 0, %s173
    %s176 = sphi 0, %s175
    %s190 = sphi 0, %s176
    %s194 = sphi 0, %s194
    %s196 = sphi 0, %s194
    %s197 = sphi 0, %s196
    %s211 = sphi 0, %s197
    %s215 = sphi 0, %s215
    %s217 = sphi 0, %s215
    %s218 = sphi 0, %s217
    %s232 = sphi 0, %s218
    %s236 = sphi 0, %s236
    %s238 = sphi 0, %s236
    %s239 = sphi 0, %s238
    %s253 = sphi 0, %s239
    %s257 = sphi 0, %s257
    %s259 = sphi 0, %s257
    %s260 = sphi 0, %s259
    %s274 = sphi 0, %s260
    %s278 = sphi 0, %s278
    %s280 = sphi 0, %s278
    %s281 = sphi 0, %s280
    %s295 = sphi 0, %s281
    %s299 = sphi 0, %s299
    %s301 = sphi 0, %s299
    %s302 = sphi 0, %s301
    %s316 = sphi 0, %s302
    %s320 = sphi 0, %s320
    %s322 = sphi 0, %s320
    %s323 = sphi 0, %s322
    %s337 = sphi 0, %s323
    %s341 = sphi 0, %s341
    %s343 = sphi 0, %s341
    %s344 = sphi 0, %s343
    %s358 = sphi 0, %s344
    %s364 = sphi 0, %s366
    %s367 = sphi 0, %s364
    %s368 = sphi 0, %s367
    %s384 = sphi 0, %s368
    %s390 = sphi 0, %s392
    %s393 = sphi 0, %s390
    %s394 = sphi 0, %s393
    %s410 = sphi 0, %s394
    %s416 = sphi 0, %s418
    %s419 = sphi 0, %s416
    %s420 = sphi 0, %s419
    %s436 = sphi 0, %s420
  $region4: #{sa_convlstm_cell_pallas.1} parent=0 // loop_header_branch
    %27 = sbr.rel (%p25) target = $region8
  $region5: #{sa_convlstm_cell_pallas.1} parent=0 // loop_body
    %s29 = ssub.s32 %s24, 1
    %s30 = ssub.s32 %s24, 2
    %s31 = sadd.s32 %s24, 1
    %s32 = ssub.s32 %s24, %s31
    %p33 = scmp.eq.s32.totalorder %s32, 0
    %s35 = sadd.s32 %s34, 1
    %s36 = scalar_select %p33, %s34, %s35
    %p39 = pneg %p33
    %p40 = scmp.eq.s32.totalorder %s24, 1
    %p41 = por %p39, %p40
    %p42 = scmp.ne.s32.totalorder %s34, %s37
    %p43 = scmp.eq.s32.totalorder %s24, 0
    %p44 = por %p42, %p43
    %p45 = scmp.ne.s32.totalorder %s34, %s37
    %p46 = scmp.eq.s32.totalorder %s29, 1
    %p47 = por %p45, %p46
    %p48 = scmp.ne.s32.totalorder %s37, %s38
    %p49 = scmp.eq.s32.totalorder %s29, 0
    %p50 = por %p48, %p49
    %p51 = scmp.ne.s32.totalorder %s37, %s38
    %p52 = scmp.eq.s32.totalorder %s30, 1
    %p53 = por %p51, %p52
    %p55 = scmp.ne.s32.totalorder %s38, %s54
    %p56 = scmp.eq.s32.totalorder %s30, 0
    %p57 = por %p55, %p56
    %s58 = ssub.s32 %s24, %s31
    %p59 = scmp.eq.s32.totalorder %s58, 0
    %s61 = sadd.s32 %s60, 1
    %s62 = scalar_select %p59, %s60, %s61
    %p65 = pneg %p59
    %p66 = scmp.eq.s32.totalorder %s24, 1
    %p67 = por %p65, %p66
    %p68 = scmp.ne.s32.totalorder %s60, %s63
    %p69 = scmp.eq.s32.totalorder %s24, 0
    %p70 = por %p68, %p69
    %p71 = scmp.ne.s32.totalorder %s60, %s63
    %p72 = scmp.eq.s32.totalorder %s29, 1
    %p73 = por %p71, %p72
    %p74 = scmp.ne.s32.totalorder %s63, %s64
    %p75 = scmp.eq.s32.totalorder %s29, 0
    %p76 = por %p74, %p75
    %p77 = scmp.ne.s32.totalorder %s63, %s64
    %p78 = scmp.eq.s32.totalorder %s30, 1
    %p79 = por %p77, %p78
    %p81 = scmp.ne.s32.totalorder %s64, %s80
    %p82 = scmp.eq.s32.totalorder %s30, 0
    %p83 = por %p81, %p82
    %s84 = ssub.s32 %s24, %s31
    %p85 = scmp.eq.s32.totalorder %s84, 0
    %s87 = sadd.s32 %s86, 1
    %s88 = scalar_select %p85, %s86, %s87
    %p91 = pneg %p85
    %p92 = scmp.eq.s32.totalorder %s24, 1
    %p93 = por %p91, %p92
    %p94 = scmp.ne.s32.totalorder %s86, %s89
    %p95 = scmp.eq.s32.totalorder %s24, 0
    %p96 = por %p94, %p95
    %p97 = scmp.ne.s32.totalorder %s86, %s89
    %p98 = scmp.eq.s32.totalorder %s29, 1
    %p99 = por %p97, %p98
    %p100 = scmp.ne.s32.totalorder %s89, %s90
    %p101 = scmp.eq.s32.totalorder %s29, 0
    %p102 = por %p100, %p101
    %p103 = scmp.ne.s32.totalorder %s89, %s90
    %p104 = scmp.eq.s32.totalorder %s30, 1
    %p105 = por %p103, %p104
    %p107 = scmp.ne.s32.totalorder %s90, %s106
    %p108 = scmp.eq.s32.totalorder %s30, 0
    %p109 = por %p107, %p108
    %s111 = sadd.s32 %s110, 1
    %p114 = scmp.eq.s32.totalorder %s24, 1
    %p115 = scmp.ne.s32.totalorder %s110, %s112
    %p116 = scmp.eq.s32.totalorder %s24, 0
    %p117 = por %p115, %p116
    %p118 = scmp.ne.s32.totalorder %s110, %s112
    %p119 = scmp.eq.s32.totalorder %s29, 1
    %p120 = por %p118, %p119
    %p121 = scmp.ne.s32.totalorder %s112, %s113
    %p122 = scmp.eq.s32.totalorder %s29, 0
    %p123 = por %p121, %p122
    %p124 = scmp.ne.s32.totalorder %s112, %s113
    %p125 = scmp.eq.s32.totalorder %s30, 1
    %p126 = por %p124, %p125
    %p128 = scmp.ne.s32.totalorder %s113, %s127
    %p129 = scmp.eq.s32.totalorder %s30, 0
    %p130 = por %p128, %p129
    %s132 = sadd.s32 %s131, 1
    %p135 = scmp.eq.s32.totalorder %s24, 1
    %p136 = scmp.ne.s32.totalorder %s131, %s133
    %p137 = scmp.eq.s32.totalorder %s24, 0
    %p138 = por %p136, %p137
    %p139 = scmp.ne.s32.totalorder %s131, %s133
    %p140 = scmp.eq.s32.totalorder %s29, 1
    %p141 = por %p139, %p140
    %p142 = scmp.ne.s32.totalorder %s133, %s134
    %p143 = scmp.eq.s32.totalorder %s29, 0
    %p144 = por %p142, %p143
    %p145 = scmp.ne.s32.totalorder %s133, %s134
    %p146 = scmp.eq.s32.totalorder %s30, 1
    %p147 = por %p145, %p146
    %p149 = scmp.ne.s32.totalorder %s134, %s148
    %p150 = scmp.eq.s32.totalorder %s30, 0
    %p151 = por %p149, %p150
    %s153 = sadd.s32 %s152, 1
    %p156 = scmp.eq.s32.totalorder %s24, 1
    %p157 = scmp.ne.s32.totalorder %s152, %s154
    %p158 = scmp.eq.s32.totalorder %s24, 0
    %p159 = por %p157, %p158
    %p160 = scmp.ne.s32.totalorder %s152, %s154
    %p161 = scmp.eq.s32.totalorder %s29, 1
    %p162 = por %p160, %p161
    %p163 = scmp.ne.s32.totalorder %s154, %s155
    %p164 = scmp.eq.s32.totalorder %s29, 0
    %p165 = por %p163, %p164
    %p166 = scmp.ne.s32.totalorder %s154, %s155
    %p167 = scmp.eq.s32.totalorder %s30, 1
    %p168 = por %p166, %p167
    %p170 = scmp.ne.s32.totalorder %s155, %s169
    %p171 = scmp.eq.s32.totalorder %s30, 0
    %p172 = por %p170, %p171
    %s174 = sadd.s32 %s173, 1
    %p177 = scmp.eq.s32.totalorder %s24, 1
    %p178 = scmp.ne.s32.totalorder %s173, %s175
    %p179 = scmp.eq.s32.totalorder %s24, 0
    %p180 = por %p178, %p179
    %p181 = scmp.ne.s32.totalorder %s173, %s175
    %p182 = scmp.eq.s32.totalorder %s29, 1
    %p183 = por %p181, %p182
    %p184 = scmp.ne.s32.totalorder %s175, %s176
    %p185 = scmp.eq.s32.totalorder %s29, 0
    %p186 = por %p184, %p185
    %p187 = scmp.ne.s32.totalorder %s175, %s176
    %p188 = scmp.eq.s32.totalorder %s30, 1
    %p189 = por %p187, %p188
    %p191 = scmp.ne.s32.totalorder %s176, %s190
    %p192 = scmp.eq.s32.totalorder %s30, 0
    %p193 = por %p191, %p192
    %s195 = sadd.s32 %s194, 1
    %p198 = scmp.eq.s32.totalorder %s24, 1
    %p199 = scmp.ne.s32.totalorder %s194, %s196
    %p200 = scmp.eq.s32.totalorder %s24, 0
    %p201 = por %p199, %p200
    %p202 = scmp.ne.s32.totalorder %s194, %s196
    %p203 = scmp.eq.s32.totalorder %s29, 1
    %p204 = por %p202, %p203
    %p205 = scmp.ne.s32.totalorder %s196, %s197
    %p206 = scmp.eq.s32.totalorder %s29, 0
    %p207 = por %p205, %p206
    %p208 = scmp.ne.s32.totalorder %s196, %s197
    %p209 = scmp.eq.s32.totalorder %s30, 1
    %p210 = por %p208, %p209
    %p212 = scmp.ne.s32.totalorder %s197, %s211
    %p213 = scmp.eq.s32.totalorder %s30, 0
    %p214 = por %p212, %p213
    %s216 = sadd.s32 %s215, 1
    %p219 = scmp.eq.s32.totalorder %s24, 1
    %p220 = scmp.ne.s32.totalorder %s215, %s217
    %p221 = scmp.eq.s32.totalorder %s24, 0
    %p222 = por %p220, %p221
    %p223 = scmp.ne.s32.totalorder %s215, %s217
    %p224 = scmp.eq.s32.totalorder %s29, 1
    %p225 = por %p223, %p224
    %p226 = scmp.ne.s32.totalorder %s217, %s218
    %p227 = scmp.eq.s32.totalorder %s29, 0
    %p228 = por %p226, %p227
    %p229 = scmp.ne.s32.totalorder %s217, %s218
    %p230 = scmp.eq.s32.totalorder %s30, 1
    %p231 = por %p229, %p230
    %p233 = scmp.ne.s32.totalorder %s218, %s232
    %p234 = scmp.eq.s32.totalorder %s30, 0
    %p235 = por %p233, %p234
    %s237 = sadd.s32 %s236, 1
    %p240 = scmp.eq.s32.totalorder %s24, 1
    %p241 = scmp.ne.s32.totalorder %s236, %s238
    %p242 = scmp.eq.s32.totalorder %s24, 0
    %p243 = por %p241, %p242
    %p244 = scmp.ne.s32.totalorder %s236, %s238
    %p245 = scmp.eq.s32.totalorder %s29, 1
    %p246 = por %p244, %p245
    %p247 = scmp.ne.s32.totalorder %s238, %s239
    %p248 = scmp.eq.s32.totalorder %s29, 0
    %p249 = por %p247, %p248
    %p250 = scmp.ne.s32.totalorder %s238, %s239
    %p251 = scmp.eq.s32.totalorder %s30, 1
    %p252 = por %p250, %p251
    %p254 = scmp.ne.s32.totalorder %s239, %s253
    %p255 = scmp.eq.s32.totalorder %s30, 0
    %p256 = por %p254, %p255
    %s258 = sadd.s32 %s257, 1
    %p261 = scmp.eq.s32.totalorder %s24, 1
    %p262 = scmp.ne.s32.totalorder %s257, %s259
    %p263 = scmp.eq.s32.totalorder %s24, 0
    %p264 = por %p262, %p263
    %p265 = scmp.ne.s32.totalorder %s257, %s259
    %p266 = scmp.eq.s32.totalorder %s29, 1
    %p267 = por %p265, %p266
    %p268 = scmp.ne.s32.totalorder %s259, %s260
    %p269 = scmp.eq.s32.totalorder %s29, 0
    %p270 = por %p268, %p269
    %p271 = scmp.ne.s32.totalorder %s259, %s260
    %p272 = scmp.eq.s32.totalorder %s30, 1
    %p273 = por %p271, %p272
    %p275 = scmp.ne.s32.totalorder %s260, %s274
    %p276 = scmp.eq.s32.totalorder %s30, 0
    %p277 = por %p275, %p276
    %s279 = sadd.s32 %s278, 1
    %p282 = scmp.eq.s32.totalorder %s24, 1
    %p283 = scmp.ne.s32.totalorder %s278, %s280
    %p284 = scmp.eq.s32.totalorder %s24, 0
    %p285 = por %p283, %p284
    %p286 = scmp.ne.s32.totalorder %s278, %s280
    %p287 = scmp.eq.s32.totalorder %s29, 1
    %p288 = por %p286, %p287
    %p289 = scmp.ne.s32.totalorder %s280, %s281
    %p290 = scmp.eq.s32.totalorder %s29, 0
    %p291 = por %p289, %p290
    %p292 = scmp.ne.s32.totalorder %s280, %s281
    %p293 = scmp.eq.s32.totalorder %s30, 1
    %p294 = por %p292, %p293
    %p296 = scmp.ne.s32.totalorder %s281, %s295
    %p297 = scmp.eq.s32.totalorder %s30, 0
    %p298 = por %p296, %p297
    %s300 = sadd.s32 %s299, 1
    %p303 = scmp.eq.s32.totalorder %s24, 1
    %p304 = scmp.ne.s32.totalorder %s299, %s301
    %p305 = scmp.eq.s32.totalorder %s24, 0
    %p306 = por %p304, %p305
    %p307 = scmp.ne.s32.totalorder %s299, %s301
    %p308 = scmp.eq.s32.totalorder %s29, 1
    %p309 = por %p307, %p308
    %p310 = scmp.ne.s32.totalorder %s301, %s302
    %p311 = scmp.eq.s32.totalorder %s29, 0
    %p312 = por %p310, %p311
    %p313 = scmp.ne.s32.totalorder %s301, %s302
    %p314 = scmp.eq.s32.totalorder %s30, 1
    %p315 = por %p313, %p314
    %p317 = scmp.ne.s32.totalorder %s302, %s316
    %p318 = scmp.eq.s32.totalorder %s30, 0
    %p319 = por %p317, %p318
    %s321 = sadd.s32 %s320, 1
    %p324 = scmp.eq.s32.totalorder %s24, 1
    %p325 = scmp.ne.s32.totalorder %s320, %s322
    %p326 = scmp.eq.s32.totalorder %s24, 0
    %p327 = por %p325, %p326
    %p328 = scmp.ne.s32.totalorder %s320, %s322
    %p329 = scmp.eq.s32.totalorder %s29, 1
    %p330 = por %p328, %p329
    %p331 = scmp.ne.s32.totalorder %s322, %s323
    %p332 = scmp.eq.s32.totalorder %s29, 0
    %p333 = por %p331, %p332
    %p334 = scmp.ne.s32.totalorder %s322, %s323
    %p335 = scmp.eq.s32.totalorder %s30, 1
    %p336 = por %p334, %p335
    %p338 = scmp.ne.s32.totalorder %s323, %s337
    %p339 = scmp.eq.s32.totalorder %s30, 0
    %p340 = por %p338, %p339
    %s342 = sadd.s32 %s341, 1
    %p345 = scmp.eq.s32.totalorder %s24, 1
    %p346 = scmp.ne.s32.totalorder %s341, %s343
    %p347 = scmp.eq.s32.totalorder %s24, 0
    %p348 = por %p346, %p347
    %p349 = scmp.ne.s32.totalorder %s341, %s343
    %p350 = scmp.eq.s32.totalorder %s29, 1
    %p351 = por %p349, %p350
    %p352 = scmp.ne.s32.totalorder %s343, %s344
    %p353 = scmp.eq.s32.totalorder %s29, 0
    %p354 = por %p352, %p353
    %p355 = scmp.ne.s32.totalorder %s343, %s344
    %p356 = scmp.eq.s32.totalorder %s30, 1
    %p357 = por %p355, %p356
    %p359 = scmp.ne.s32.totalorder %s344, %s358
    %p360 = scmp.eq.s32.totalorder %s30, 0
    %p361 = por %p359, %p360
    %s362 = ssub.s32 %s24, %s31
    %p363 = scmp.eq.s32.totalorder %s362, 0
    %s365 = sadd.s32 %s364, 1
    %s366 = scalar_select %p363, %s364, %s365
    %p369 = pneg %p363
    %p370 = scmp.eq.s32.totalorder %s24, 1
    %p371 = por %p369, %p370
    %p372 = scmp.ne.s32.totalorder %s364, %s367
    %p373 = scmp.eq.s32.totalorder %s24, 0
    %p374 = por %p372, %p373
    %p375 = scmp.ne.s32.totalorder %s364, %s367
    %p376 = scmp.eq.s32.totalorder %s29, 1
    %p377 = por %p375, %p376
    %p378 = scmp.ne.s32.totalorder %s367, %s368
    %p379 = scmp.eq.s32.totalorder %s29, 0
    %p380 = por %p378, %p379
    %p381 = scmp.ne.s32.totalorder %s367, %s368
    %p382 = scmp.eq.s32.totalorder %s30, 1
    %p383 = por %p381, %p382
    %p385 = scmp.ne.s32.totalorder %s368, %s384
    %p386 = scmp.eq.s32.totalorder %s30, 0
    %p387 = por %p385, %p386
    %s388 = ssub.s32 %s24, %s31
    %p389 = scmp.eq.s32.totalorder %s388, 0
    %s391 = sadd.s32 %s390, 1
    %s392 = scalar_select %p389, %s390, %s391
    %p395 = pneg %p389
    %p396 = scmp.eq.s32.totalorder %s24, 1
    %p397 = por %p395, %p396
    %p398 = scmp.ne.s32.totalorder %s390, %s393
    %p399 = scmp.eq.s32.totalorder %s24, 0
    %p400 = por %p398, %p399
    %p401 = scmp.ne.s32.totalorder %s390, %s393
    %p402 = scmp.eq.s32.totalorder %s29, 1
    %p403 = por %p401, %p402
    %p404 = scmp.ne.s32.totalorder %s393, %s394
    %p405 = scmp.eq.s32.totalorder %s29, 0
    %p406 = por %p404, %p405
    %p407 = scmp.ne.s32.totalorder %s393, %s394
    %p408 = scmp.eq.s32.totalorder %s30, 1
    %p409 = por %p407, %p408
    %p411 = scmp.ne.s32.totalorder %s394, %s410
    %p412 = scmp.eq.s32.totalorder %s30, 0
    %p413 = por %p411, %p412
    %s414 = ssub.s32 %s24, %s31
    %p415 = scmp.eq.s32.totalorder %s414, 0
    %s417 = sadd.s32 %s416, 1
    %s418 = scalar_select %p415, %s416, %s417
    %p421 = pneg %p415
    %p422 = scmp.eq.s32.totalorder %s24, 1
    %p423 = por %p421, %p422
    %p424 = scmp.ne.s32.totalorder %s416, %s419
    %p425 = scmp.eq.s32.totalorder %s24, 0
    %p426 = por %p424, %p425
    %p427 = scmp.ne.s32.totalorder %s416, %s419
    %p428 = scmp.eq.s32.totalorder %s29, 1
    %p429 = por %p427, %p428
    %p430 = scmp.ne.s32.totalorder %s419, %s420
    %p431 = scmp.eq.s32.totalorder %s29, 0
    %p432 = por %p430, %p431
    %p433 = scmp.ne.s32.totalorder %s419, %s420
    %p434 = scmp.eq.s32.totalorder %s30, 1
    %p435 = por %p433, %p434
    %p437 = scmp.ne.s32.totalorder %s420, %s436
    %p438 = scmp.eq.s32.totalorder %s30, 0
    %p439 = por %p437, %p438
    %p440 = scmp.le.s32.totalorder 1, %s24
    %p441 = scmp.lt.s32.totalorder %s24, 3
    %p442 = pnand %p440, %p441
    %p443 = pneg %p442
    // Predicated region
    $region9: #{sa_convlstm_cell_pallas.1} parent=5 // pred_check
      _
    $region10: #{sa_convlstm_cell_pallas.1} parent=5 // pred_check_branch
      %445 = sbr.rel (%p442) target = $region12
    $region11: #{sa_convlstm_cell_pallas.1} parent=5 // pred_region
      %s446 = ssub.s32 %s24, 1
      // Predicated region
      $region13: #{sa_convlstm_cell_pallas.1} parent=11 // pred_check
        %p447 = pneg %p123
      $region14: #{sa_convlstm_cell_pallas.1} parent=11 // pred_check_branch
        %449 = sbr.rel (%p447) target = $region16
      $region15: #{sa_convlstm_cell_pallas.1} parent=11 // pred_region
        _
      $region16: #{sa_convlstm_cell_pallas.1} parent=11 // pred_fallthru
        _
      // Predicated region
      $region17: #{sa_convlstm_cell_pallas.1} parent=11 // pred_check
        %p450 = pneg %p144
      $region18: #{sa_convlstm_cell_pallas.1} parent=11 // pred_check_branch
        %452 = sbr.rel (%p450) target = $region20
      $region19: #{sa_convlstm_cell_pallas.1} parent=11 // pred_region
        _
      $region20: #{sa_convlstm_cell_pallas.1} parent=11 // pred_fallthru
        _
      // Predicated region
      $region21: #{sa_convlstm_cell_pallas.1} parent=11 // pred_check
        %p453 = pneg %p165
      $region22: #{sa_convlstm_cell_pallas.1} parent=11 // pred_check_branch
        %455 = sbr.rel (%p453) target = $region24
      $region23: #{sa_convlstm_cell_pallas.1} parent=11 // pred_region
        _
      $region24: #{sa_convlstm_cell_pallas.1} parent=11 // pred_fallthru
        _
      // Predicated region
      $region25: #{sa_convlstm_cell_pallas.1} parent=11 // pred_check
        %p456 = pneg %p186
      $region26: #{sa_convlstm_cell_pallas.1} parent=11 // pred_check_branch
        %458 = sbr.rel (%p456) target = $region28
      $region27: #{sa_convlstm_cell_pallas.1} parent=11 // pred_region
        _
      $region28: #{sa_convlstm_cell_pallas.1} parent=11 // pred_fallthru
        _
      // Predicated region
      $region29: #{sa_convlstm_cell_pallas.1} parent=11 // pred_check
        %p459 = pneg %p207
      $region30: #{sa_convlstm_cell_pallas.1} parent=11 // pred_check_branch
        %461 = sbr.rel (%p459) target = $region32
      $region31: #{sa_convlstm_cell_pallas.1} parent=11 // pred_region
        _
      $region32: #{sa_convlstm_cell_pallas.1} parent=11 // pred_fallthru
        _
      // Predicated region
      $region33: #{sa_convlstm_cell_pallas.1} parent=11 // pred_check
        %p462 = pneg %p228
      $region34: #{sa_convlstm_cell_pallas.1} parent=11 // pred_check_branch
        %464 = sbr.rel (%p462) target = $region36
      $region35: #{sa_convlstm_cell_pallas.1} parent=11 // pred_region
        _
      $region36: #{sa_convlstm_cell_pallas.1} parent=11 // pred_fallthru
        _
      // Predicated region
      $region37: #{sa_convlstm_cell_pallas.1} parent=11 // pred_check
        %p465 = pneg %p249
      $region38: #{sa_convlstm_cell_pallas.1} parent=11 // pred_check_branch
        %467 = sbr.rel (%p465) target = $region40
      $region39: #{sa_convlstm_cell_pallas.1} parent=11 // pred_region
        _
      $region40: #{sa_convlstm_cell_pallas.1} parent=11 // pred_fallthru
        _
      // Predicated region
      $region41: #{sa_convlstm_cell_pallas.1} parent=11 // pred_check
        %p468 = pneg %p270
      $region42: #{sa_convlstm_cell_pallas.1} parent=11 // pred_check_branch
        %470 = sbr.rel (%p468) target = $region44
      $region43: #{sa_convlstm_cell_pallas.1} parent=11 // pred_region
        _
      $region44: #{sa_convlstm_cell_pallas.1} parent=11 // pred_fallthru
        _
      // Predicated region
      $region45: #{sa_convlstm_cell_pallas.1} parent=11 // pred_check
        %p471 = pneg %p291
      $region46: #{sa_convlstm_cell_pallas.1} parent=11 // pred_check_branch
        %473 = sbr.rel (%p471) target = $region48
      $region47: #{sa_convlstm_cell_pallas.1} parent=11 // pred_region
        _
      $region48: #{sa_convlstm_cell_pallas.1} parent=11 // pred_fallthru
        _
      // Predicated region
      $region49: #{sa_convlstm_cell_pallas.1} parent=11 // pred_check
        %p474 = pneg %p312
      $region50: #{sa_convlstm_cell_pallas.1} parent=11 // pred_check_branch
        %476 = sbr.rel (%p474) target = $region52
      $region51: #{sa_convlstm_cell_pallas.1} parent=11 // pred_region
        _
      $region52: #{sa_convlstm_cell_pallas.1} parent=11 // pred_fallthru
        _
      // Predicated region
      $region53: #{sa_convlstm_cell_pallas.1} parent=11 // pred_check
        %p477 = pneg %p333
      $region54: #{sa_convlstm_cell_pallas.1} parent=11 // pred_check_branch
        %479 = sbr.rel (%p477) target = $region56
      $region55: #{sa_convlstm_cell_pallas.1} parent=11 // pred_region
        _
      $region56: #{sa_convlstm_cell_pallas.1} parent=11 // pred_fallthru
        _
      // Predicated region
      $region57: #{sa_convlstm_cell_pallas.1} parent=11 // pred_check
        %p480 = pneg %p354
      $region58: #{sa_convlstm_cell_pallas.1} parent=11 // pred_check_branch
        %482 = sbr.rel (%p480) target = $region60
      $region59: #{sa_convlstm_cell_pallas.1} parent=11 // pred_region
        _
      $region60: #{sa_convlstm_cell_pallas.1} parent=11 // pred_fallthru
        _
    $region12: #{sa_convlstm_cell_pallas.1} parent=5 // pred_fallthru
      _
    %p483 = scmp.lt.s32.totalorder %s24, 2
    // Predicated region
    $region61: #{sa_convlstm_cell_pallas.1} parent=5 // pred_check
      %p484 = pneg %p483
    $region62: #{sa_convlstm_cell_pallas.1} parent=5 // pred_check_branch
      %486 = sbr.rel (%p484) target = $region64
    $region63: #{sa_convlstm_cell_pallas.1} parent=5 // pred_region
      // Predicated region
      $region65: #{sa_convlstm_cell_pallas.1} parent=63 // pred_check
        %p487 = pneg %p44
      $region66: #{sa_convlstm_cell_pallas.1} parent=63 // pred_check_branch
        %489 = sbr.rel (%p487) target = $region68
      $region67: #{sa_convlstm_cell_pallas.1} parent=63 // pred_region
        %p490 = scmp.lt.s32.totalorder %s24, 1
        %s491 = scalar_select %p490, %s24, 1
        %s492 = smul.addr %s491, 18
        %s493 = smul.addr %s492, 4
        %s494 = scalar_lea.vmem %s0, %s493
      $region68: #{sa_convlstm_cell_pallas.1} parent=63 // pred_fallthru
        _
      // Predicated region
      $region69: #{sa_convlstm_cell_pallas.1} parent=63 // pred_check
        %p495 = pneg %p70
      $region70: #{sa_convlstm_cell_pallas.1} parent=63 // pred_check_branch
        %497 = sbr.rel (%p495) target = $region72
      $region71: #{sa_convlstm_cell_pallas.1} parent=63 // pred_region
        %p498 = scmp.lt.s32.totalorder %s24, 1
        %s499 = scalar_select %p498, %s24, 1
        %s500 = smul.addr %s499, 8
        %s501 = smul.addr %s500, 8
        %s502 = scalar_lea.vmem %s1, %s501
      $region72: #{sa_convlstm_cell_pallas.1} parent=63 // pred_fallthru
        _
      // Predicated region
      $region73: #{sa_convlstm_cell_pallas.1} parent=63 // pred_check
        %p503 = pneg %p96
      $region74: #{sa_convlstm_cell_pallas.1} parent=63 // pred_check_branch
        %505 = sbr.rel (%p503) target = $region76
      $region75: #{sa_convlstm_cell_pallas.1} parent=63 // pred_region
        %p506 = scmp.lt.s32.totalorder %s24, 1
        %s507 = scalar_select %p506, %s24, 1
        %s508 = smul.addr %s507, 8
        %s509 = smul.addr %s508, 8
        %s510 = scalar_lea.vmem %s2, %s509
      $region76: #{sa_convlstm_cell_pallas.1} parent=63 // pred_fallthru
        _
    $region64: #{sa_convlstm_cell_pallas.1} parent=5 // pred_fallthru
      _
    %p511 = scmp.le.s32.totalorder 1, %s24
    %p512 = scmp.lt.s32.totalorder %s24, 3
    %p513 = pnand %p511, %p512
    %p514 = pneg %p513
    // Predicated region
    $region77: #{sa_convlstm_cell_pallas.1} parent=5 // pred_check
      _
    $region78: #{sa_convlstm_cell_pallas.1} parent=5 // pred_check_branch
      %516 = sbr.rel (%p513) target = $region80
    $region79: #{sa_convlstm_cell_pallas.1} parent=5 // pred_region
      %s517 = ssub.s32 %s24, 1
      %p518 = scmp.lt.s32.totalorder %s29, 1
      %s519 = scalar_select %p518, %s29, 1
      %s520 = smul.addr %s519, 18
      %s521 = smul.addr %s520, 4
      %s522 = scalar_lea.vmem %s0, %s521
      %p523 = pneg %p50
      %p524 = pneg %p47
      %p525 = scmp.lt.s32.totalorder %s29, 1
      %s526 = scalar_select %p525, %s29, 1
      %s527 = smul.addr %s526, 8
      %s528 = smul.addr %s527, 8
      %s529 = scalar_lea.vmem %s1, %s528
      %p530 = pneg %p76
      %p531 = pneg %p73
      %p532 = scmp.lt.s32.totalorder %s29, 1
      %s533 = scalar_select %p532, %s29, 1
      %s534 = smul.addr %s533, 8
      %s535 = smul.addr %s534, 8
      %s536 = scalar_lea.vmem %s2, %s535
      %p537 = pneg %p102
      %p538 = pneg %p99
      %p539 = pneg %p123
      %p540 = pneg %p120
      %p541 = pneg %p144
      %p542 = pneg %p141
      %p543 = pneg %p165
      %p544 = pneg %p162
      %p545 = pneg %p186
      %p546 = pneg %p183
      %p547 = pneg %p207
      %p548 = pneg %p204
      %p549 = pneg %p228
      %p550 = pneg %p225
      %p551 = pneg %p249
      %p552 = pneg %p246
      %p553 = pneg %p270
      %p554 = pneg %p267
      %p555 = pneg %p291
      %p556 = pneg %p288
      %p557 = pneg %p312
      %p558 = pneg %p309
      %p559 = pneg %p333
      %p560 = pneg %p330
      %p561 = pneg %p354
      %p562 = pneg %p351
      %p563 = pneg %p380
      %p564 = pneg %p377
      %p565 = scmp.lt.s32.totalorder %s29, 1
      %s566 = scalar_select %p565, %s29, 1
      %s567 = smul.addr %s566, 8
      %s568 = smul.addr %s567, 8
      %s569 = scalar_lea.vmem %s15, %s568
      %p570 = pneg %p406
      %p571 = pneg %p403
      %p572 = scmp.lt.s32.totalorder %s29, 1
      %s573 = scalar_select %p572, %s29, 1
      %s574 = smul.addr %s573, 8
      %s575 = smul.addr %s574, 8
      %s576 = scalar_lea.vmem %s16, %s575
      %p577 = pneg %p432
      %p578 = pneg %p429
      %p579 = scmp.lt.s32.totalorder %s29, 1
      %s580 = scalar_select %p579, %s29, 1
      %s581 = smul.addr %s580, 8
      %s582 = smul.addr %s581, 8
      %s583 = scalar_lea.vmem %s17, %s582
      %p584 = scmp.lt.s32.totalorder %s29, 1
      %s585 = scalar_select %p584, %s29, 1
      %s586 = smul.addr %s585, 18
      %s587 = smul.addr %s586, 4
      %s588 = scalar_lea.vmem %s0, %s587
      %p589 = scmp.lt.s32.totalorder %s29, 1
      %s590 = scalar_select %p589, %s29, 1
      %s591 = smul.addr %s590, 8
      %s592 = smul.addr %s591, 8
      %s593 = scalar_lea.vmem %s1, %s592
      %p594 = scmp.lt.s32.totalorder %s29, 1
      %s595 = scalar_select %p594, %s29, 1
      %s596 = smul.addr %s595, 8
      %s597 = smul.addr %s596, 8
      %s598 = scalar_lea.vmem %s2, %s597
      %p599 = scmp.lt.s32.totalorder %s29, 1
      %s600 = scalar_select %p599, %s29, 1
      %s601 = smul.addr %s600, 8
      %s602 = smul.addr %s601, 8
      %s603 = scalar_lea.vmem %s15, %s602
      %p604 = scmp.lt.s32.totalorder %s29, 1
      %s605 = scalar_select %p604, %s29, 1
      %s606 = smul.addr %s605, 8
      %s607 = smul.addr %s606, 8
      %s608 = scalar_lea.vmem %s16, %s607
      %p609 = scmp.lt.s32.totalorder %s29, 1
      %s610 = scalar_select %p609, %s29, 1
      %s611 = smul.addr %s610, 8
      %s612 = smul.addr %s611, 8
      %s613 = scalar_lea.vmem %s17, %s612
      %v615 = vld [vmem:[%s588] sm:$0xff]
      %v616 = vld [vmem:[%s588 + $0x8] sm:$0xff]
      %v617 = vld [vmem:[%s588 + $0x10] sm:$0xff]
      %v618 = vld [vmem:[%s588 + $0x18] sm:$0xff]
      %v619 = vld [vmem:[%s588 + $0x20] sm:$0xff]
      %v620 = vld [vmem:[%s588 + $0x28] sm:$0xff]
      %v621 = vld [vmem:[%s588 + $0x30] sm:$0xff]
      %v622 = vld [vmem:[%s588 + $0x38] sm:$0xff]
      %v623 = vld [vmem:[%s588 + $0x40] sm:$0x33]
      %v624 = vld [vmem:[%s593] sm:$0xff]
      %v625 = vld [vmem:[%s593 + $0x8] sm:$0xff]
      %v626 = vld [vmem:[%s593 + $0x10] sm:$0xff]
      %v627 = vld [vmem:[%s593 + $0x18] sm:$0xff]
      %v628 = vld [vmem:[%s593 + $0x20] sm:$0xff]
      %v629 = vld [vmem:[%s593 + $0x28] sm:$0xff]
      %v630 = vld [vmem:[%s593 + $0x30] sm:$0xff]
      %v631 = vld [vmem:[%s593 + $0x38] sm:$0xff]
      %v632 = vld [vmem:[%s598] sm:$0xff]
      %v633 = vld [vmem:[%s598 + $0x8] sm:$0xff]
      %v634 = vld [vmem:[%s598 + $0x10] sm:$0xff]
      %v635 = vld [vmem:[%s598 + $0x18] sm:$0xff]
      %v636 = vld [vmem:[%s598 + $0x20] sm:$0xff]
      %v637 = vld [vmem:[%s598 + $0x28] sm:$0xff]
      %v638 = vld [vmem:[%s598 + $0x30] sm:$0xff]
      %v639 = vld [vmem:[%s598 + $0x38] sm:$0xff]
      %v640 = vld [vmem:[%s3] sm:$0xf]
      %v641 = vld [vmem:[%s3 + $0x4] sm:$0xf]
      %v642 = vld [vmem:[%s3 + $0x8] sm:$0xf]
      %v643 = vld [vmem:[%s3 + $0xc] sm:$0xf]
      %v644 = vld [vmem:[%s3 + $0x10] sm:$0xf]
      %v645 = vld [vmem:[%s3 + $0x14] sm:$0xf]
      %v646 = vld [vmem:[%s3 + $0x18] sm:$0xf]
      %v647 = vld [vmem:[%s3 + $0x1c] sm:$0xf]
      %v648 = vld [vmem:[%s3 + $0x20] sm:$0xf]
      %v649 = vld [vmem:[%s3 + $0x24] sm:$0xf]
      %v650 = vld [vmem:[%s3 + $0x28] sm:$0xf]
      %v651 = vld [vmem:[%s3 + $0x2c] sm:$0xf]
      %v652 = vld [vmem:[%s3 + $0x30] sm:$0xf]
      %v653 = vld [vmem:[%s3 + $0x34] sm:$0xf]
      %v654 = vld [vmem:[%s3 + $0x38] sm:$0xf]
      %v655 = vld [vmem:[%s3 + $0x3c] sm:$0xf]
      %v656 = vld [vmem:[%s4] sm:$0xff]
      %v657 = vld [vmem:[%s4 + $0x8] sm:$0xff]
      %v658 = vld [vmem:[%s4 + $0x10] sm:$0xff]
      %v659 = vld [vmem:[%s4 + $0x18] sm:$0xff]
      %v660 = vld [vmem:[%s4 + $0x20] sm:$0xff]
      %v661 = vld [vmem:[%s4 + $0x28] sm:$0xff]
      %v662 = vld [vmem:[%s4 + $0x30] sm:$0xff]
      %v663 = vld [vmem:[%s4 + $0x38] sm:$0xff]
      %v664 = vld [vmem:[%s4 + $0x40] sm:$0xff]
      %v665 = vld [vmem:[%s4 + $0x48] sm:$0xff]
      %v666 = vld [vmem:[%s4 + $0x50] sm:$0xff]
      %v667 = vld [vmem:[%s4 + $0x58] sm:$0xff]
      %v668 = vld [vmem:[%s4 + $0x60] sm:$0xff]
      %v669 = vld [vmem:[%s4 + $0x68] sm:$0xff]
      %v670 = vld [vmem:[%s4 + $0x70] sm:$0xff]
      %v671 = vld [vmem:[%s4 + $0x78] sm:$0xff]
      %673 = vset.pattern.permute.xlu0 0
      %674 = vperm.xlu0 %673, %v656
      %v675 = vpop.permute.xlu0 %674
      %678 = vset.pattern.permute.xlu0 0
      %679 = vperm.xlu0 %678, %v657
      %v680 = vpop.permute.xlu0 %679
      %683 = vset.pattern.permute.xlu0 0
      %684 = vperm.xlu0 %683, %v658
      %v685 = vpop.permute.xlu0 %684
      %688 = vset.pattern.permute.xlu0 0
      %689 = vperm.xlu0 %688, %v659
      %v690 = vpop.permute.xlu0 %689
      %693 = vset.pattern.permute.xlu0 0
      %694 = vperm.xlu0 %693, %v660
      %v695 = vpop.permute.xlu0 %694
      %698 = vset.pattern.permute.xlu0 0
      %699 = vperm.xlu0 %698, %v661
      %v700 = vpop.permute.xlu0 %699
      %703 = vset.pattern.permute.xlu0 0
      %704 = vperm.xlu0 %703, %v662
      %v705 = vpop.permute.xlu0 %704
      %708 = vset.pattern.permute.xlu0 0
      %709 = vperm.xlu0 %708, %v663
      %v710 = vpop.permute.xlu0 %709
      %713 = vset.pattern.permute.xlu0 0
      %714 = vperm.xlu0 %713, %v664
      %v715 = vpop.permute.xlu0 %714
      %718 = vset.pattern.permute.xlu0 0
      %719 = vperm.xlu0 %718, %v665
      %v720 = vpop.permute.xlu0 %719
      %723 = vset.pattern.permute.xlu0 0
      %724 = vperm.xlu0 %723, %v666
      %v725 = vpop.permute.xlu0 %724
      %728 = vset.pattern.permute.xlu0 0
      %729 = vperm.xlu0 %728, %v667
      %v730 = vpop.permute.xlu0 %729
      %733 = vset.pattern.permute.xlu0 0
      %734 = vperm.xlu0 %733, %v668
      %v735 = vpop.permute.xlu0 %734
      %738 = vset.pattern.permute.xlu0 0
      %739 = vperm.xlu0 %738, %v669
      %v740 = vpop.permute.xlu0 %739
      %743 = vset.pattern.permute.xlu0 0
      %744 = vperm.xlu0 %743, %v670
      %v745 = vpop.permute.xlu0 %744
      %748 = vset.pattern.permute.xlu0 0
      %749 = vperm.xlu0 %748, %v671
      %v750 = vpop.permute.xlu0 %749
      %v768 = vunpack.c.l.b16 %v640
      %v769 = vunpack.c.l.b16 %v641
      %v770 = vunpack.c.l.b16 %v642
      %v771 = vunpack.c.l.b16 %v643
      %v772 = vunpack.c.l.b16 %v644
      %v773 = vunpack.c.l.b16 %v645
      %v774 = vunpack.c.l.b16 %v646
      %v775 = vunpack.c.l.b16 %v647
      %v776 = vunpack.c.l.b16 %v648
      %v777 = vunpack.c.l.b16 %v649
      %v778 = vunpack.c.l.b16 %v650
      %v779 = vunpack.c.l.b16 %v651
      %v780 = vunpack.c.l.b16 %v652
      %v781 = vunpack.c.l.b16 %v653
      %v782 = vunpack.c.l.b16 %v654
      %v783 = vunpack.c.l.b16 %v655
      %v784 = vpack.c.b16 %v769, %v768
      %v785 = vpack.c.b16 %v771, %v770
      %v786 = vpack.c.b16 %v773, %v772
      %v787 = vpack.c.b16 %v775, %v774
      %v788 = vpack.c.b16 %v777, %v776
      %v789 = vpack.c.b16 %v779, %v778
      %v790 = vpack.c.b16 %v781, %v780
      %v791 = vpack.c.b16 %v783, %v782
      %v801 = vunpack.c.l.b16 %v615
      %v802 = vunpack.c.h.b16 %v615
      %v803 = vunpack.c.l.b16 %v616
      %v804 = vunpack.c.h.b16 %v616
      %v805 = vunpack.c.l.b16 %v617
      %v806 = vunpack.c.h.b16 %v617
      %v807 = vunpack.c.l.b16 %v618
      %v808 = vunpack.c.h.b16 %v618
      %v809 = vunpack.c.l.b16 %v619
      %v810 = vunpack.c.h.b16 %v619
      %v811 = vunpack.c.l.b16 %v620
      %v812 = vunpack.c.h.b16 %v620
      %v813 = vunpack.c.l.b16 %v621
      %v814 = vunpack.c.h.b16 %v621
      %v815 = vunpack.c.l.b16 %v622
      %v816 = vunpack.c.h.b16 %v622
      %v817 = vunpack.c.l.b16 %v623
      %v818 = vunpack.c.h.b16 %v623
      %v819 = vpack.c.b16 %v803, %v801
      %v820 = vpack.c.b16 %v804, %v802
      %v821 = vpack.c.b16 %v807, %v805
      %v822 = vpack.c.b16 %v808, %v806
      %v823 = vpack.c.b16 %v811, %v809
      %v824 = vpack.c.b16 %v812, %v810
      %v825 = vpack.c.b16 %v815, %v813
      %v826 = vpack.c.b16 %v816, %v814
      %v827 = vpack.c.b16 %v817, %v817
      %v828 = vpack.c.b16 %v818, %v818
      %vm837 = vcmask 556032
      %v839 = vsel %vm837, %v784, 0
      %v842 = vsel %vm837, %v785, 0
      %v845 = vsel %vm837, %v786, 0
      %v848 = vsel %vm837, %v787, 0
      %v851 = vsel %vm837, %v788, 0
      %v854 = vsel %vm837, %v789, 0
      %v857 = vsel %vm837, %v790, 0
      %v860 = vsel %vm837, %v791, 0
      %vm862 = vcmask 1041408
      %v864 = vsel %vm862, %v827, 0
      %v867 = vsel %vm862, %v828, 0
      %869 = vmatpush.bf16.msra.mxu0 0
      %870 = vmatpush.bf16.msra.mxu0 0
      %871 = vmatpush.bf16.msra.mxu0 0
      %872 = vmatpush.bf16.msra.mxu0 %v864
      %873 = vmatpush.bf16.msra.mxu0 %v825
      %874 = vmatpush.bf16.msra.mxu0 %v823
      %875 = vmatpush.bf16.msra.mxu0 %v821
      %876 = vmatpush.bf16.msra.mxu0 %v819
      %877 = vmatmul.bf16.gmra.mxu0 %v839
      %v878 = vpop.f32.mrf.mxu0
      %v879 = vadd.f32 %v675, %v878
      %v880 = vpop.f32.mrf.mxu0
      %v881 = vadd.f32 %v680, %v880
      %882 = vmatmul.bf16.gmra.mxu0 %v842
      %v883 = vpop.f32.mrf.mxu0
      %v884 = vadd.f32 %v685, %v883
      %v885 = vpop.f32.mrf.mxu0
      %v886 = vadd.f32 %v690, %v885
      %887 = vmatmul.bf16.gmra.mxu0 %v845
      %v888 = vpop.f32.mrf.mxu0
      %v889 = vadd.f32 %v695, %v888
      %v890 = vpop.f32.mrf.mxu0
      %v891 = vadd.f32 %v700, %v890
      %892 = vmatmul.bf16.gmra.mxu0 %v848
      %v893 = vpop.f32.mrf.mxu0
      %v894 = vadd.f32 %v705, %v893
      %v895 = vpop.f32.mrf.mxu0
      %v896 = vadd.f32 %v710, %v895
      %897 = vmatmul.bf16.gmra.mxu0 %v851
      %v898 = vpop.f32.mrf.mxu0
      %v899 = vadd.f32 %v715, %v898
      %v900 = vpop.f32.mrf.mxu0
      %v901 = vadd.f32 %v720, %v900
      %902 = vmatmul.bf16.gmra.mxu0 %v854
      %v903 = vpop.f32.mrf.mxu0
      %v904 = vadd.f32 %v725, %v903
      %v905 = vpop.f32.mrf.mxu0
      %v906 = vadd.f32 %v730, %v905
      %907 = vmatmul.bf16.gmra.mxu0 %v857
      %v908 = vpop.f32.mrf.mxu0
      %v909 = vadd.f32 %v735, %v908
      %v910 = vpop.f32.mrf.mxu0
      %v911 = vadd.f32 %v740, %v910
      %912 = vmatmul.bf16.gmra.mxu0 %v860
      %v913 = vpop.f32.mrf.mxu0
      %v914 = vadd.f32 %v745, %v913
      %v915 = vpop.f32.mrf.mxu0
      %v916 = vadd.f32 %v750, %v915
      %917 = vdwg.mxu0
      %918 = vmatpush.bf16.msra.mxu0 0
      %919 = vmatpush.bf16.msra.mxu0 0
      %920 = vmatpush.bf16.msra.mxu0 0
      %921 = vmatpush.bf16.msra.mxu0 %v867
      %922 = vmatpush.bf16.msra.mxu0 %v826
      %923 = vmatpush.bf16.msra.mxu0 %v824
      %924 = vmatpush.bf16.msra.mxu0 %v822
      %925 = vmatpush.bf16.msra.mxu0 %v820
      %926 = vmatmul.bf16.gmra.mxu0 %v839
      %v927 = vpop.f32.mrf.mxu0
      %v928 = vadd.f32 %v675, %v927
      %v929 = vpop.f32.mrf.mxu0
      %v930 = vadd.f32 %v680, %v929
      %931 = vmatmul.bf16.gmra.mxu0 %v842
      %v932 = vpop.f32.mrf.mxu0
      %v933 = vadd.f32 %v685, %v932
      %v934 = vpop.f32.mrf.mxu0
      %v935 = vadd.f32 %v690, %v934
      %936 = vmatmul.bf16.gmra.mxu0 %v845
      %v937 = vpop.f32.mrf.mxu0
      %v938 = vadd.f32 %v695, %v937
      %v939 = vpop.f32.mrf.mxu0
      %v940 = vadd.f32 %v700, %v939
      %941 = vmatmul.bf16.gmra.mxu0 %v848
      %v942 = vpop.f32.mrf.mxu0
      %v943 = vadd.f32 %v705, %v942
      %v944 = vpop.f32.mrf.mxu0
      %v945 = vadd.f32 %v710, %v944
      %946 = vmatmul.bf16.gmra.mxu0 %v851
      %v947 = vpop.f32.mrf.mxu0
      %v948 = vadd.f32 %v715, %v947
      %v949 = vpop.f32.mrf.mxu0
      %v950 = vadd.f32 %v720, %v949
      %951 = vmatmul.bf16.gmra.mxu0 %v854
      %v952 = vpop.f32.mrf.mxu0
      %v953 = vadd.f32 %v725, %v952
      %v954 = vpop.f32.mrf.mxu0
      %v955 = vadd.f32 %v730, %v954
      %956 = vmatmul.bf16.gmra.mxu0 %v857
      %v957 = vpop.f32.mrf.mxu0
      %v958 = vadd.f32 %v735, %v957
      %v959 = vpop.f32.mrf.mxu0
      %v960 = vadd.f32 %v740, %v959
      %961 = vmatmul.bf16.gmra.mxu0 %v860
      %v962 = vpop.f32.mrf.mxu0
      %v963 = vadd.f32 %v745, %v962
      %v964 = vpop.f32.mrf.mxu0
      %v965 = vadd.f32 %v750, %v964
      %966 = vdwg.mxu0
      %v967 = vxor.u32 %v879, 2147483648
      %v968 = vxor.u32 %v928, 2147483648
      %v969 = vxor.u32 %v881, 2147483648
      %v970 = vxor.u32 %v930, 2147483648
      %v971 = vxor.u32 %v884, 2147483648
      %v972 = vxor.u32 %v933, 2147483648
      %v973 = vxor.u32 %v886, 2147483648
      %v974 = vxor.u32 %v935, 2147483648
      %v975 = vmul.f32 %v967, 1.442695
      %v976 = vpow.pop %v975
      %v977 = vmul.f32 %v968, 1.442695
      %v978 = vpow.pop %v977
      %v979 = vmul.f32 %v969, 1.442695
      %v980 = vpow.pop %v979
      %v981 = vmul.f32 %v970, 1.442695
      %v982 = vpow.pop %v981
      %v983 = vmul.f32 %v971, 1.442695
      %v984 = vpow.pop %v983
      %v985 = vmul.f32 %v972, 1.442695
      %v986 = vpow.pop %v985
      %v987 = vmul.f32 %v973, 1.442695
      %v988 = vpow.pop %v987
      %v989 = vmul.f32 %v974, 1.442695
      %v990 = vpow.pop %v989
      %v991 = vadd.f32 %v976, 1.0
      %v992 = vadd.f32 %v978, 1.0
      %v993 = vadd.f32 %v980, 1.0
      %v994 = vadd.f32 %v982, 1.0
      %v995 = vadd.f32 %v984, 1.0
      %v996 = vadd.f32 %v986, 1.0
      %v997 = vadd.f32 %v988, 1.0
      %v998 = vadd.f32 %v990, 1.0
      %v999 = vrcp.pop %v991
      %v1000 = vmul.f32 %v991, %v999
      %v1001 = vsub.f32 1.0, %v1000
      %v1002 = vmul.f32 %v999, %v1001
      %v1003 = vadd.f32 %v999, %v1002
      %vm1004 = vweird.f32 %v991
      %vm1005 = vweird.f32 %v999
      %vm1006 = vmor %vm1004, %vm1005
      %v1007 = vsel %vm1006, %v999, %v1003
      %v1008 = vand.u32 2147483647, %v991
      %vm1009 = vcmp.eq.f32.partialorder %v1008, 8.507059e+37
      %v1010 = vand.u32 %v991, 2147483648
      %v1011 = vor.u32 1.1754944e-38, %v1010
      %v1012 = vsel %vm1009, %v1011, %v1007
      %v1013 = vmul.f32 1.0, %v1012
      %v1014 = vrcp.pop %v992
      %v1015 = vmul.f32 %v992, %v1014
      %v1016 = vsub.f32 1.0, %v1015
      %v1017 = vmul.f32 %v1014, %v1016
      %v1018 = vadd.f32 %v1014, %v1017
      %vm1019 = vweird.f32 %v992
      %vm1020 = vweird.f32 %v1014
      %vm1021 = vmor %vm1019, %vm1020
      %v1022 = vsel %vm1021, %v1014, %v1018
      %v1023 = vand.u32 2147483647, %v992
      %vm1024 = vcmp.eq.f32.partialorder %v1023, 8.507059e+37
      %v1025 = vand.u32 %v992, 2147483648
      %v1026 = vor.u32 1.1754944e-38, %v1025
      %v1027 = vsel %vm1024, %v1026, %v1022
      %v1028 = vmul.f32 1.0, %v1027
      %v1029 = vrcp.pop %v993
      %v1030 = vmul.f32 %v993, %v1029
      %v1031 = vsub.f32 1.0, %v1030
      %v1032 = vmul.f32 %v1029, %v1031
      %v1033 = vadd.f32 %v1029, %v1032
      %vm1034 = vweird.f32 %v993
      %vm1035 = vweird.f32 %v1029
      %vm1036 = vmor %vm1034, %vm1035
      %v1037 = vsel %vm1036, %v1029, %v1033
      %v1038 = vand.u32 2147483647, %v993
      %vm1039 = vcmp.eq.f32.partialorder %v1038, 8.507059e+37
      %v1040 = vand.u32 %v993, 2147483648
      %v1041 = vor.u32 1.1754944e-38, %v1040
      %v1042 = vsel %vm1039, %v1041, %v1037
      %v1043 = vmul.f32 1.0, %v1042
      %v1044 = vrcp.pop %v994
      %v1045 = vmul.f32 %v994, %v1044
      %v1046 = vsub.f32 1.0, %v1045
      %v1047 = vmul.f32 %v1044, %v1046
      %v1048 = vadd.f32 %v1044, %v1047
      %vm1049 = vweird.f32 %v994
      %vm1050 = vweird.f32 %v1044
      %vm1051 = vmor %vm1049, %vm1050
      %v1052 = vsel %vm1051, %v1044, %v1048
      %v1053 = vand.u32 2147483647, %v994
      %vm1054 = vcmp.eq.f32.partialorder %v1053, 8.507059e+37
      %v1055 = vand.u32 %v994, 2147483648
      %v1056 = vor.u32 1.1754944e-38, %v1055
      %v1057 = vsel %vm1054, %v1056, %v1052
      %v1058 = vmul.f32 1.0, %v1057
      %v1059 = vrcp.pop %v995
      %v1060 = vmul.f32 %v995, %v1059
      %v1061 = vsub.f32 1.0, %v1060
      %v1062 = vmul.f32 %v1059, %v1061
      %v1063 = vadd.f32 %v1059, %v1062
      %vm1064 = vweird.f32 %v995
      %vm1065 = vweird.f32 %v1059
      %vm1066 = vmor %vm1064, %vm1065
      %v1067 = vsel %vm1066, %v1059, %v1063
      %v1068 = vand.u32 2147483647, %v995
      %vm1069 = vcmp.eq.f32.partialorder %v1068, 8.507059e+37
      %v1070 = vand.u32 %v995, 2147483648
      %v1071 = vor.u32 1.1754944e-38, %v1070
      %v1072 = vsel %vm1069, %v1071, %v1067
      %v1073 = vmul.f32 1.0, %v1072
      %v1074 = vrcp.pop %v996
      %v1075 = vmul.f32 %v996, %v1074
      %v1076 = vsub.f32 1.0, %v1075
      %v1077 = vmul.f32 %v1074, %v1076
      %v1078 = vadd.f32 %v1074, %v1077
      %vm1079 = vweird.f32 %v996
      %vm1080 = vweird.f32 %v1074
      %vm1081 = vmor %vm1079, %vm1080
      %v1082 = vsel %vm1081, %v1074, %v1078
      %v1083 = vand.u32 2147483647, %v996
      %vm1084 = vcmp.eq.f32.partialorder %v1083, 8.507059e+37
      %v1085 = vand.u32 %v996, 2147483648
      %v1086 = vor.u32 1.1754944e-38, %v1085
      %v1087 = vsel %vm1084, %v1086, %v1082
      %v1088 = vmul.f32 1.0, %v1087
      %v1089 = vrcp.pop %v997
      %v1090 = vmul.f32 %v997, %v1089
      %v1091 = vsub.f32 1.0, %v1090
      %v1092 = vmul.f32 %v1089, %v1091
      %v1093 = vadd.f32 %v1089, %v1092
      %vm1094 = vweird.f32 %v997
      %vm1095 = vweird.f32 %v1089
      %vm1096 = vmor %vm1094, %vm1095
      %v1097 = vsel %vm1096, %v1089, %v1093
      %v1098 = vand.u32 2147483647, %v997
      %vm1099 = vcmp.eq.f32.partialorder %v1098, 8.507059e+37
      %v1100 = vand.u32 %v997, 2147483648
      %v1101 = vor.u32 1.1754944e-38, %v1100
      %v1102 = vsel %vm1099, %v1101, %v1097
      %v1103 = vmul.f32 1.0, %v1102
      %v1104 = vrcp.pop %v998
      %v1105 = vmul.f32 %v998, %v1104
      %v1106 = vsub.f32 1.0, %v1105
      %v1107 = vmul.f32 %v1104, %v1106
      %v1108 = vadd.f32 %v1104, %v1107
      %vm1109 = vweird.f32 %v998
      %vm1110 = vweird.f32 %v1104
      %vm1111 = vmor %vm1109, %vm1110
      %v1112 = vsel %vm1111, %v1104, %v1108
      %v1113 = vand.u32 2147483647, %v998
      %vm1114 = vcmp.eq.f32.partialorder %v1113, 8.507059e+37
      %v1115 = vand.u32 %v998, 2147483648
      %v1116 = vor.u32 1.1754944e-38, %v1115
      %v1117 = vsel %vm1114, %v1116, %v1112
      %v1118 = vmul.f32 1.0, %v1117
      %v1119 = vxor.u32 %v889, 2147483648
      %v1120 = vxor.u32 %v938, 2147483648
      %v1121 = vxor.u32 %v891, 2147483648
      %v1122 = vxor.u32 %v940, 2147483648
      %v1123 = vxor.u32 %v894, 2147483648
      %v1124 = vxor.u32 %v943, 2147483648
      %v1125 = vxor.u32 %v896, 2147483648
      %v1126 = vxor.u32 %v945, 2147483648
      %v1127 = vmul.f32 %v1119, 1.442695
      %v1128 = vpow.pop %v1127
      %v1129 = vmul.f32 %v1120, 1.442695
      %v1130 = vpow.pop %v1129
      %v1131 = vmul.f32 %v1121, 1.442695
      %v1132 = vpow.pop %v1131
      %v1133 = vmul.f32 %v1122, 1.442695
      %v1134 = vpow.pop %v1133
      %v1135 = vmul.f32 %v1123, 1.442695
      %v1136 = vpow.pop %v1135
      %v1137 = vmul.f32 %v1124, 1.442695
      %v1138 = vpow.pop %v1137
      %v1139 = vmul.f32 %v1125, 1.442695
      %v1140 = vpow.pop %v1139
      %v1141 = vmul.f32 %v1126, 1.442695
      %v1142 = vpow.pop %v1141
      %v1143 = vadd.f32 %v1128, 1.0
      %v1144 = vadd.f32 %v1130, 1.0
      %v1145 = vadd.f32 %v1132, 1.0
      %v1146 = vadd.f32 %v1134, 1.0
      %v1147 = vadd.f32 %v1136, 1.0
      %v1148 = vadd.f32 %v1138, 1.0
      %v1149 = vadd.f32 %v1140, 1.0
      %v1150 = vadd.f32 %v1142, 1.0
      %v1151 = vrcp.pop %v1143
      %v1152 = vmul.f32 %v1143, %v1151
      %v1153 = vsub.f32 1.0, %v1152
      %v1154 = vmul.f32 %v1151, %v1153
      %v1155 = vadd.f32 %v1151, %v1154
      %vm1156 = vweird.f32 %v1143
      %vm1157 = vweird.f32 %v1151
      %vm1158 = vmor %vm1156, %vm1157
      %v1159 = vsel %vm1158, %v1151, %v1155
      %v1160 = vand.u32 2147483647, %v1143
      %vm1161 = vcmp.eq.f32.partialorder %v1160, 8.507059e+37
      %v1162 = vand.u32 %v1143, 2147483648
      %v1163 = vor.u32 1.1754944e-38, %v1162
      %v1164 = vsel %vm1161, %v1163, %v1159
      %v1165 = vmul.f32 1.0, %v1164
      %v1166 = vrcp.pop %v1144
      %v1167 = vmul.f32 %v1144, %v1166
      %v1168 = vsub.f32 1.0, %v1167
      %v1169 = vmul.f32 %v1166, %v1168
      %v1170 = vadd.f32 %v1166, %v1169
      %vm1171 = vweird.f32 %v1144
      %vm1172 = vweird.f32 %v1166
      %vm1173 = vmor %vm1171, %vm1172
      %v1174 = vsel %vm1173, %v1166, %v1170
      %v1175 = vand.u32 2147483647, %v1144
      %vm1176 = vcmp.eq.f32.partialorder %v1175, 8.507059e+37
      %v1177 = vand.u32 %v1144, 2147483648
      %v1178 = vor.u32 1.1754944e-38, %v1177
      %v1179 = vsel %vm1176, %v1178, %v1174
      %v1180 = vmul.f32 1.0, %v1179
      %v1181 = vrcp.pop %v1145
      %v1182 = vmul.f32 %v1145, %v1181
      %v1183 = vsub.f32 1.0, %v1182
      %v1184 = vmul.f32 %v1181, %v1183
      %v1185 = vadd.f32 %v1181, %v1184
      %vm1186 = vweird.f32 %v1145
      %vm1187 = vweird.f32 %v1181
      %vm1188 = vmor %vm1186, %vm1187
      %v1189 = vsel %vm1188, %v1181, %v1185
      %v1190 = vand.u32 2147483647, %v1145
      %vm1191 = vcmp.eq.f32.partialorder %v1190, 8.507059e+37
      %v1192 = vand.u32 %v1145, 2147483648
      %v1193 = vor.u32 1.1754944e-38, %v1192
      %v1194 = vsel %vm1191, %v1193, %v1189
      %v1195 = vmul.f32 1.0, %v1194
      %v1196 = vrcp.pop %v1146
      %v1197 = vmul.f32 %v1146, %v1196
      %v1198 = vsub.f32 1.0, %v1197
      %v1199 = vmul.f32 %v1196, %v1198
      %v1200 = vadd.f32 %v1196, %v1199
      %vm1201 = vweird.f32 %v1146
      %vm1202 = vweird.f32 %v1196
      %vm1203 = vmor %vm1201, %vm1202
      %v1204 = vsel %vm1203, %v1196, %v1200
      %v1205 = vand.u32 2147483647, %v1146
      %vm1206 = vcmp.eq.f32.partialorder %v1205, 8.507059e+37
      %v1207 = vand.u32 %v1146, 2147483648
      %v1208 = vor.u32 1.1754944e-38, %v1207
      %v1209 = vsel %vm1206, %v1208, %v1204
      %v1210 = vmul.f32 1.0, %v1209
      %v1211 = vrcp.pop %v1147
      %v1212 = vmul.f32 %v1147, %v1211
      %v1213 = vsub.f32 1.0, %v1212
      %v1214 = vmul.f32 %v1211, %v1213
      %v1215 = vadd.f32 %v1211, %v1214
      %vm1216 = vweird.f32 %v1147
      %vm1217 = vweird.f32 %v1211
      %vm1218 = vmor %vm1216, %vm1217
      %v1219 = vsel %vm1218, %v1211, %v1215
      %v1220 = vand.u32 2147483647, %v1147
      %vm1221 = vcmp.eq.f32.partialorder %v1220, 8.507059e+37
      %v1222 = vand.u32 %v1147, 2147483648
      %v1223 = vor.u32 1.1754944e-38, %v1222
      %v1224 = vsel %vm1221, %v1223, %v1219
      %v1225 = vmul.f32 1.0, %v1224
      %v1226 = vrcp.pop %v1148
      %v1227 = vmul.f32 %v1148, %v1226
      %v1228 = vsub.f32 1.0, %v1227
      %v1229 = vmul.f32 %v1226, %v1228
      %v1230 = vadd.f32 %v1226, %v1229
      %vm1231 = vweird.f32 %v1148
      %vm1232 = vweird.f32 %v1226
      %vm1233 = vmor %vm1231, %vm1232
      %v1234 = vsel %vm1233, %v1226, %v1230
      %v1235 = vand.u32 2147483647, %v1148
      %vm1236 = vcmp.eq.f32.partialorder %v1235, 8.507059e+37
      %v1237 = vand.u32 %v1148, 2147483648
      %v1238 = vor.u32 1.1754944e-38, %v1237
      %v1239 = vsel %vm1236, %v1238, %v1234
      %v1240 = vmul.f32 1.0, %v1239
      %v1241 = vrcp.pop %v1149
      %v1242 = vmul.f32 %v1149, %v1241
      %v1243 = vsub.f32 1.0, %v1242
      %v1244 = vmul.f32 %v1241, %v1243
      %v1245 = vadd.f32 %v1241, %v1244
      %vm1246 = vweird.f32 %v1149
      %vm1247 = vweird.f32 %v1241
      %vm1248 = vmor %vm1246, %vm1247
      %v1249 = vsel %vm1248, %v1241, %v1245
      %v1250 = vand.u32 2147483647, %v1149
      %vm1251 = vcmp.eq.f32.partialorder %v1250, 8.507059e+37
      %v1252 = vand.u32 %v1149, 2147483648
      %v1253 = vor.u32 1.1754944e-38, %v1252
      %v1254 = vsel %vm1251, %v1253, %v1249
      %v1255 = vmul.f32 1.0, %v1254
      %v1256 = vrcp.pop %v1150
      %v1257 = vmul.f32 %v1150, %v1256
      %v1258 = vsub.f32 1.0, %v1257
      %v1259 = vmul.f32 %v1256, %v1258
      %v1260 = vadd.f32 %v1256, %v1259
      %vm1261 = vweird.f32 %v1150
      %vm1262 = vweird.f32 %v1256
      %vm1263 = vmor %vm1261, %vm1262
      %v1264 = vsel %vm1263, %v1256, %v1260
      %v1265 = vand.u32 2147483647, %v1150
      %vm1266 = vcmp.eq.f32.partialorder %v1265, 8.507059e+37
      %v1267 = vand.u32 %v1150, 2147483648
      %v1268 = vor.u32 1.1754944e-38, %v1267
      %v1269 = vsel %vm1266, %v1268, %v1264
      %v1270 = vmul.f32 1.0, %v1269
      %v1271 = vtanh.pop %v899
      %v1272 = vtanh.pop %v948
      %v1273 = vtanh.pop %v901
      %v1274 = vtanh.pop %v950
      %v1275 = vtanh.pop %v904
      %v1276 = vtanh.pop %v953
      %v1277 = vtanh.pop %v906
      %v1278 = vtanh.pop %v955
      %v1279 = vxor.u32 %v909, 2147483648
      %v1280 = vxor.u32 %v958, 2147483648
      %v1281 = vxor.u32 %v911, 2147483648
      %v1282 = vxor.u32 %v960, 2147483648
      %v1283 = vxor.u32 %v914, 2147483648
      %v1284 = vxor.u32 %v963, 2147483648
      %v1285 = vxor.u32 %v916, 2147483648
      %v1286 = vxor.u32 %v965, 2147483648
      %v1287 = vmul.f32 %v1279, 1.442695
      %v1288 = vpow.pop %v1287
      %v1289 = vmul.f32 %v1280, 1.442695
      %v1290 = vpow.pop %v1289
      %v1291 = vmul.f32 %v1281, 1.442695
      %v1292 = vpow.pop %v1291
      %v1293 = vmul.f32 %v1282, 1.442695
      %v1294 = vpow.pop %v1293
      %v1295 = vmul.f32 %v1283, 1.442695
      %v1296 = vpow.pop %v1295
      %v1297 = vmul.f32 %v1284, 1.442695
      %v1298 = vpow.pop %v1297
      %v1299 = vmul.f32 %v1285, 1.442695
      %v1300 = vpow.pop %v1299
      %v1301 = vmul.f32 %v1286, 1.442695
      %v1302 = vpow.pop %v1301
      %v1303 = vadd.f32 %v1288, 1.0
      %v1304 = vadd.f32 %v1290, 1.0
      %v1305 = vadd.f32 %v1292, 1.0
      %v1306 = vadd.f32 %v1294, 1.0
      %v1307 = vadd.f32 %v1296, 1.0
      %v1308 = vadd.f32 %v1298, 1.0
      %v1309 = vadd.f32 %v1300, 1.0
      %v1310 = vadd.f32 %v1302, 1.0
      %v1311 = vrcp.pop %v1303
      %v1312 = vmul.f32 %v1303, %v1311
      %v1313 = vsub.f32 1.0, %v1312
      %v1314 = vmul.f32 %v1311, %v1313
      %v1315 = vadd.f32 %v1311, %v1314
      %vm1316 = vweird.f32 %v1303
      %vm1317 = vweird.f32 %v1311
      %vm1318 = vmor %vm1316, %vm1317
      %v1319 = vsel %vm1318, %v1311, %v1315
      %v1320 = vand.u32 2147483647, %v1303
      %vm1321 = vcmp.eq.f32.partialorder %v1320, 8.507059e+37
      %v1322 = vand.u32 %v1303, 2147483648
      %v1323 = vor.u32 1.1754944e-38, %v1322
      %v1324 = vsel %vm1321, %v1323, %v1319
      %v1325 = vmul.f32 1.0, %v1324
      %v1326 = vrcp.pop %v1304
      %v1327 = vmul.f32 %v1304, %v1326
      %v1328 = vsub.f32 1.0, %v1327
      %v1329 = vmul.f32 %v1326, %v1328
      %v1330 = vadd.f32 %v1326, %v1329
      %vm1331 = vweird.f32 %v1304
      %vm1332 = vweird.f32 %v1326
      %vm1333 = vmor %vm1331, %vm1332
      %v1334 = vsel %vm1333, %v1326, %v1330
      %v1335 = vand.u32 2147483647, %v1304
      %vm1336 = vcmp.eq.f32.partialorder %v1335, 8.507059e+37
      %v1337 = vand.u32 %v1304, 2147483648
      %v1338 = vor.u32 1.1754944e-38, %v1337
      %v1339 = vsel %vm1336, %v1338, %v1334
      %v1340 = vmul.f32 1.0, %v1339
      %v1341 = vrcp.pop %v1305
      %v1342 = vmul.f32 %v1305, %v1341
      %v1343 = vsub.f32 1.0, %v1342
      %v1344 = vmul.f32 %v1341, %v1343
      %v1345 = vadd.f32 %v1341, %v1344
      %vm1346 = vweird.f32 %v1305
      %vm1347 = vweird.f32 %v1341
      %vm1348 = vmor %vm1346, %vm1347
      %v1349 = vsel %vm1348, %v1341, %v1345
      %v1350 = vand.u32 2147483647, %v1305
      %vm1351 = vcmp.eq.f32.partialorder %v1350, 8.507059e+37
      %v1352 = vand.u32 %v1305, 2147483648
      %v1353 = vor.u32 1.1754944e-38, %v1352
      %v1354 = vsel %vm1351, %v1353, %v1349
      %v1355 = vmul.f32 1.0, %v1354
      %v1356 = vrcp.pop %v1306
      %v1357 = vmul.f32 %v1306, %v1356
      %v1358 = vsub.f32 1.0, %v1357
      %v1359 = vmul.f32 %v1356, %v1358
      %v1360 = vadd.f32 %v1356, %v1359
      %vm1361 = vweird.f32 %v1306
      %vm1362 = vweird.f32 %v1356
      %vm1363 = vmor %vm1361, %vm1362
      %v1364 = vsel %vm1363, %v1356, %v1360
      %v1365 = vand.u32 2147483647, %v1306
      %vm1366 = vcmp.eq.f32.partialorder %v1365, 8.507059e+37
      %v1367 = vand.u32 %v1306, 2147483648
      %v1368 = vor.u32 1.1754944e-38, %v1367
      %v1369 = vsel %vm1366, %v1368, %v1364
      %v1370 = vmul.f32 1.0, %v1369
      %v1371 = vrcp.pop %v1307
      %v1372 = vmul.f32 %v1307, %v1371
      %v1373 = vsub.f32 1.0, %v1372
      %v1374 = vmul.f32 %v1371, %v1373
      %v1375 = vadd.f32 %v1371, %v1374
      %vm1376 = vweird.f32 %v1307
      %vm1377 = vweird.f32 %v1371
      %vm1378 = vmor %vm1376, %vm1377
      %v1379 = vsel %vm1378, %v1371, %v1375
      %v1380 = vand.u32 2147483647, %v1307
      %vm1381 = vcmp.eq.f32.partialorder %v1380, 8.507059e+37
      %v1382 = vand.u32 %v1307, 2147483648
      %v1383 = vor.u32 1.1754944e-38, %v1382
      %v1384 = vsel %vm1381, %v1383, %v1379
      %v1385 = vmul.f32 1.0, %v1384
      %v1386 = vrcp.pop %v1308
      %v1387 = vmul.f32 %v1308, %v1386
      %v1388 = vsub.f32 1.0, %v1387
      %v1389 = vmul.f32 %v1386, %v1388
      %v1390 = vadd.f32 %v1386, %v1389
      %vm1391 = vweird.f32 %v1308
      %vm1392 = vweird.f32 %v1386
      %vm1393 = vmor %vm1391, %vm1392
      %v1394 = vsel %vm1393, %v1386, %v1390
      %v1395 = vand.u32 2147483647, %v1308
      %vm1396 = vcmp.eq.f32.partialorder %v1395, 8.507059e+37
      %v1397 = vand.u32 %v1308, 2147483648
      %v1398 = vor.u32 1.1754944e-38, %v1397
      %v1399 = vsel %vm1396, %v1398, %v1394
      %v1400 = vmul.f32 1.0, %v1399
      %v1401 = vrcp.pop %v1309
      %v1402 = vmul.f32 %v1309, %v1401
      %v1403 = vsub.f32 1.0, %v1402
      %v1404 = vmul.f32 %v1401, %v1403
      %v1405 = vadd.f32 %v1401, %v1404
      %vm1406 = vweird.f32 %v1309
      %vm1407 = vweird.f32 %v1401
      %vm1408 = vmor %vm1406, %vm1407
      %v1409 = vsel %vm1408, %v1401, %v1405
      %v1410 = vand.u32 2147483647, %v1309
      %vm1411 = vcmp.eq.f32.partialorder %v1410, 8.507059e+37
      %v1412 = vand.u32 %v1309, 2147483648
      %v1413 = vor.u32 1.1754944e-38, %v1412
      %v1414 = vsel %vm1411, %v1413, %v1409
      %v1415 = vmul.f32 1.0, %v1414
      %v1416 = vrcp.pop %v1310
      %v1417 = vmul.f32 %v1310, %v1416
      %v1418 = vsub.f32 1.0, %v1417
      %v1419 = vmul.f32 %v1416, %v1418
      %v1420 = vadd.f32 %v1416, %v1419
      %vm1421 = vweird.f32 %v1310
      %vm1422 = vweird.f32 %v1416
      %vm1423 = vmor %vm1421, %vm1422
      %v1424 = vsel %vm1423, %v1416, %v1420
      %v1425 = vand.u32 2147483647, %v1310
      %vm1426 = vcmp.eq.f32.partialorder %v1425, 8.507059e+37
      %v1427 = vand.u32 %v1310, 2147483648
      %v1428 = vor.u32 1.1754944e-38, %v1427
      %v1429 = vsel %vm1426, %v1428, %v1424
      %v1430 = vmul.f32 1.0, %v1429
      %v1431 = vmul.f32 %v1165, %v624
      %v1432 = vmul.f32 %v1180, %v625
      %v1433 = vmul.f32 %v1195, %v626
      %v1434 = vmul.f32 %v1210, %v627
      %v1435 = vmul.f32 %v1225, %v628
      %v1436 = vmul.f32 %v1240, %v629
      %v1437 = vmul.f32 %v1255, %v630
      %v1438 = vmul.f32 %v1270, %v631
      %v1439 = vmul.f32 %v1013, %v1271
      %v1440 = vmul.f32 %v1028, %v1272
      %v1441 = vmul.f32 %v1043, %v1273
      %v1442 = vmul.f32 %v1058, %v1274
      %v1443 = vmul.f32 %v1073, %v1275
      %v1444 = vmul.f32 %v1088, %v1276
      %v1445 = vmul.f32 %v1103, %v1277
      %v1446 = vmul.f32 %v1118, %v1278
      %v1447 = vadd.f32 %v1431, %v1439
      %v1448 = vadd.f32 %v1432, %v1440
      %v1449 = vadd.f32 %v1433, %v1441
      %v1450 = vadd.f32 %v1434, %v1442
      %v1451 = vadd.f32 %v1435, %v1443
      %v1452 = vadd.f32 %v1436, %v1444
      %v1453 = vadd.f32 %v1437, %v1445
      %v1454 = vadd.f32 %v1438, %v1446
      %v1455 = vtanh.pop %v1447
      %v1456 = vtanh.pop %v1448
      %v1457 = vtanh.pop %v1449
      %v1458 = vtanh.pop %v1450
      %v1459 = vtanh.pop %v1451
      %v1460 = vtanh.pop %v1452
      %v1461 = vtanh.pop %v1453
      %v1462 = vtanh.pop %v1454
      %v1463 = vmul.f32 %v1325, %v1455
      %v1464 = vmul.f32 %v1340, %v1456
      %v1465 = vmul.f32 %v1355, %v1457
      %v1466 = vmul.f32 %v1370, %v1458
      %v1467 = vmul.f32 %v1385, %v1459
      %v1468 = vmul.f32 %v1400, %v1460
      %v1469 = vmul.f32 %v1415, %v1461
      %v1470 = vmul.f32 %v1430, %v1462
      %1471 = vst [vmem:[%s603] sm:$0xff] %v1447
      %1472 = vst [vmem:[%s603 + $0x8] sm:$0xff] %v1448
      %1473 = vst [vmem:[%s603 + $0x10] sm:$0xff] %v1449
      %1474 = vst [vmem:[%s603 + $0x18] sm:$0xff] %v1450
      %1475 = vst [vmem:[%s603 + $0x20] sm:$0xff] %v1451
      %1476 = vst [vmem:[%s603 + $0x28] sm:$0xff] %v1452
      %1477 = vst [vmem:[%s603 + $0x30] sm:$0xff] %v1453
      %1478 = vst [vmem:[%s603 + $0x38] sm:$0xff] %v1454
      %v1479 = vpack.c.bf16 %v1465, %v1463
      %v1480 = vpack.c.bf16 %v1466, %v1464
      %v1481 = vpack.c.bf16 %v1469, %v1467
      %v1482 = vpack.c.bf16 %v1470, %v1468
      %v1483 = vld [vmem:[%s5] sm:$0xf]
      %v1484 = vld [vmem:[%s5 + $0x4] sm:$0xf]
      %v1485 = vld [vmem:[%s5 + $0x8] sm:$0xf]
      %v1486 = vld [vmem:[%s5 + $0xc] sm:$0xf]
      %v1487 = vld [vmem:[%s5 + $0x10] sm:$0xf]
      %v1488 = vld [vmem:[%s5 + $0x14] sm:$0xf]
      %v1489 = vld [vmem:[%s5 + $0x18] sm:$0xf]
      %v1490 = vld [vmem:[%s5 + $0x1c] sm:$0xf]
      %v1491 = vld [vmem:[%s6] sm:$0xff]
      %v1492 = vld [vmem:[%s6 + $0x8] sm:$0xff]
      %v1493 = vld [vmem:[%s6 + $0x10] sm:$0xff]
      %v1494 = vld [vmem:[%s6 + $0x18] sm:$0xff]
      %v1495 = vld [vmem:[%s6 + $0x20] sm:$0xff]
      %v1496 = vld [vmem:[%s6 + $0x28] sm:$0xff]
      %v1497 = vld [vmem:[%s6 + $0x30] sm:$0xff]
      %v1498 = vld [vmem:[%s6 + $0x38] sm:$0xff]
      %1500 = vset.pattern.permute.xlu0 0
      %1501 = vperm.xlu0 %1500, %v1491
      %v1502 = vpop.permute.xlu0 %1501
      %1505 = vset.pattern.permute.xlu0 0
      %1506 = vperm.xlu0 %1505, %v1492
      %v1507 = vpop.permute.xlu0 %1506
      %1510 = vset.pattern.permute.xlu0 0
      %1511 = vperm.xlu0 %1510, %v1493
      %v1512 = vpop.permute.xlu0 %1511
      %1515 = vset.pattern.permute.xlu0 0
      %1516 = vperm.xlu0 %1515, %v1494
      %v1517 = vpop.permute.xlu0 %1516
      %1520 = vset.pattern.permute.xlu0 0
      %1521 = vperm.xlu0 %1520, %v1495
      %v1522 = vpop.permute.xlu0 %1521
      %1525 = vset.pattern.permute.xlu0 0
      %1526 = vperm.xlu0 %1525, %v1496
      %v1527 = vpop.permute.xlu0 %1526
      %1530 = vset.pattern.permute.xlu0 0
      %1531 = vperm.xlu0 %1530, %v1497
      %v1532 = vpop.permute.xlu0 %1531
      %1535 = vset.pattern.permute.xlu0 0
      %1536 = vperm.xlu0 %1535, %v1498
      %v1537 = vpop.permute.xlu0 %1536
      %v1547 = vunpack.c.l.b16 %v1483
      %v1548 = vunpack.c.l.b16 %v1484
      %v1549 = vunpack.c.l.b16 %v1485
      %v1550 = vunpack.c.l.b16 %v1486
      %v1551 = vunpack.c.l.b16 %v1487
      %v1552 = vunpack.c.l.b16 %v1488
      %v1553 = vunpack.c.l.b16 %v1489
      %v1554 = vunpack.c.l.b16 %v1490
      %v1555 = vpack.c.b16 %v1548, %v1547
      %v1556 = vpack.c.b16 %v1550, %v1549
      %v1557 = vpack.c.b16 %v1552, %v1551
      %v1558 = vpack.c.b16 %v1554, %v1553
      %vm1559 = vcmask 261120
      %v1561 = vsel %vm1559, %v1555, 0
      %v1564 = vsel %vm1559, %v1556, 0
      %v1567 = vsel %vm1559, %v1557, 0
      %v1570 = vsel %vm1559, %v1558, 0
      %1572 = vmatpush.bf16.msra.mxu0 0
      %1573 = vmatpush.bf16.msra.mxu0 0
      %1574 = vmatpush.bf16.msra.mxu0 0
      %1575 = vmatpush.bf16.msra.mxu0 0
      %1576 = vmatpush.bf16.msra.mxu0 0
      %1577 = vmatpush.bf16.msra.mxu0 0
      %1578 = vmatpush.bf16.msra.mxu0 %v1481
      %1579 = vmatpush.bf16.msra.mxu0 %v1479
      %1580 = vmatmul.bf16.gmra.mxu0 %v1561
      %v1581 = vpop.f32.mrf.mxu0
      %v1582 = vadd.f32 %v1502, %v1581
      %v1583 = vpop.f32.mrf.mxu0
      %v1584 = vadd.f32 %v1507, %v1583
      %1585 = vmatmul.bf16.gmra.mxu0 %v1564
      %v1586 = vpop.f32.mrf.mxu0
      %v1587 = vadd.f32 %v1512, %v1586
      %v1588 = vpop.f32.mrf.mxu0
      %v1589 = vadd.f32 %v1517, %v1588
      %1590 = vmatmul.bf16.gmra.mxu0 %v1567
      %v1591 = vpop.f32.mrf.mxu0
      %v1592 = vadd.f32 %v1522, %v1591
      %v1593 = vpop.f32.mrf.mxu0
      %v1594 = vadd.f32 %v1527, %v1593
      %1595 = vmatmul.bf16.gmra.mxu0 %v1570
      %v1596 = vpop.f32.mrf.mxu0
      %v1597 = vadd.f32 %v1532, %v1596
      %v1598 = vpop.f32.mrf.mxu0
      %v1599 = vadd.f32 %v1537, %v1598
      %1600 = vdwg.mxu0
      %1601 = vmatpush.bf16.msra.mxu0 0
      %1602 = vmatpush.bf16.msra.mxu0 0
      %1603 = vmatpush.bf16.msra.mxu0 0
      %1604 = vmatpush.bf16.msra.mxu0 0
      %1605 = vmatpush.bf16.msra.mxu0 0
      %1606 = vmatpush.bf16.msra.mxu0 0
      %1607 = vmatpush.bf16.msra.mxu0 %v1482
      %1608 = vmatpush.bf16.msra.mxu0 %v1480
      %1609 = vmatmul.bf16.gmra.mxu0 %v1561
      %v1610 = vpop.f32.mrf.mxu0
      %v1611 = vadd.f32 %v1502, %v1610
      %v1612 = vpop.f32.mrf.mxu0
      %v1613 = vadd.f32 %v1507, %v1612
      %1614 = vmatmul.bf16.gmra.mxu0 %v1564
      %v1615 = vpop.f32.mrf.mxu0
      %v1616 = vadd.f32 %v1512, %v1615
      %v1617 = vpop.f32.mrf.mxu0
      %v1618 = vadd.f32 %v1517, %v1617
      %1619 = vmatmul.bf16.gmra.mxu0 %v1567
      %v1620 = vpop.f32.mrf.mxu0
      %v1621 = vadd.f32 %v1522, %v1620
      %v1622 = vpop.f32.mrf.mxu0
      %v1623 = vadd.f32 %v1527, %v1622
      %1624 = vmatmul.bf16.gmra.mxu0 %v1570
      %v1625 = vpop.f32.mrf.mxu0
      %v1626 = vadd.f32 %v1532, %v1625
      %v1627 = vpop.f32.mrf.mxu0
      %v1628 = vadd.f32 %v1537, %v1627
      %1629 = vdwg.mxu0
      %v1630 = vld [vmem:[%s7] sm:$0xf]
      %v1631 = vld [vmem:[%s7 + $0x4] sm:$0xf]
      %v1632 = vld [vmem:[%s7 + $0x8] sm:$0xf]
      %v1633 = vld [vmem:[%s7 + $0xc] sm:$0xf]
      %v1634 = vld [vmem:[%s7 + $0x10] sm:$0xf]
      %v1635 = vld [vmem:[%s7 + $0x14] sm:$0xf]
      %v1636 = vpack.c.bf16 %v634, %v632
      %v1637 = vpack.c.bf16 %v635, %v633
      %v1638 = vpack.c.bf16 %v638, %v636
      %v1639 = vpack.c.bf16 %v639, %v637
      %v1640 = vld [vmem:[%s8] sm:$0xff]
      %v1641 = vld [vmem:[%s8 + $0x8] sm:$0xff]
      %v1642 = vld [vmem:[%s8 + $0x10] sm:$0xff]
      %v1643 = vld [vmem:[%s8 + $0x18] sm:$0xff]
      %v1644 = vld [vmem:[%s8 + $0x20] sm:$0xff]
      %v1645 = vld [vmem:[%s8 + $0x28] sm:$0xff]
      %1647 = vset.pattern.permute.xlu0 0
      %1648 = vperm.xlu0 %1647, %v1640
      %v1649 = vpop.permute.xlu0 %1648
      %1652 = vset.pattern.permute.xlu0 0
      %1653 = vperm.xlu0 %1652, %v1641
      %v1654 = vpop.permute.xlu0 %1653
      %1657 = vset.pattern.permute.xlu0 0
      %1658 = vperm.xlu0 %1657, %v1642
      %v1659 = vpop.permute.xlu0 %1658
      %1662 = vset.pattern.permute.xlu0 0
      %1663 = vperm.xlu0 %1662, %v1643
      %v1664 = vpop.permute.xlu0 %1663
      %1667 = vset.pattern.permute.xlu0 0
      %1668 = vperm.xlu0 %1667, %v1644
      %v1669 = vpop.permute.xlu0 %1668
      %1672 = vset.pattern.permute.xlu0 0
      %1673 = vperm.xlu0 %1672, %v1645
      %v1674 = vpop.permute.xlu0 %1673
      %v1682 = vunpack.c.l.b16 %v1630
      %v1683 = vunpack.c.l.b16 %v1631
      %v1684 = vunpack.c.l.b16 %v1632
      %v1685 = vunpack.c.l.b16 %v1633
      %v1686 = vunpack.c.l.b16 %v1634
      %v1687 = vunpack.c.l.b16 %v1635
      %v1688 = vpack.c.b16 %v1683, %v1682
      %v1689 = vpack.c.b16 %v1685, %v1684
      %v1690 = vpack.c.b16 %v1687, %v1686
      %v1692 = vsel %vm1559, %v1688, 0
      %v1695 = vsel %vm1559, %v1689, 0
      %v1698 = vsel %vm1559, %v1690, 0
      %1700 = vmatpush.bf16.msra.mxu0 0
      %1701 = vmatpush.bf16.msra.mxu0 0
      %1702 = vmatpush.bf16.msra.mxu0 0
      %1703 = vmatpush.bf16.msra.mxu0 0
      %1704 = vmatpush.bf16.msra.mxu0 0
      %1705 = vmatpush.bf16.msra.mxu0 0
      %1706 = vmatpush.bf16.msra.mxu0 %v1638
      %1707 = vmatpush.bf16.msra.mxu0 %v1636
      %1708 = vmatmul.bf16.gmra.mxu0 %v1692
      %v1709 = vpop.f32.mrf.mxu0
      %v1710 = vadd.f32 %v1649, %v1709
      %v1711 = vpop.f32.mrf.mxu0
      %v1712 = vadd.f32 %v1654, %v1711
      %1713 = vmatmul.bf16.gmra.mxu0 %v1695
      %v1714 = vpop.f32.mrf.mxu0
      %v1715 = vadd.f32 %v1659, %v1714
      %v1716 = vpop.f32.mrf.mxu0
      %v1717 = vadd.f32 %v1664, %v1716
      %1718 = vmatmul.bf16.gmra.mxu0 %v1698
      %v1719 = vpop.f32.mrf.mxu0
      %v1720 = vadd.f32 %v1669, %v1719
      %v1721 = vpop.f32.mrf.mxu0
      %v1722 = vadd.f32 %v1674, %v1721
      %1723 = vdwg.mxu0
      %1724 = vmatpush.bf16.msra.mxu0 0
      %1725 = vmatpush.bf16.msra.mxu0 0
      %1726 = vmatpush.bf16.msra.mxu0 0
      %1727 = vmatpush.bf16.msra.mxu0 0
      %1728 = vmatpush.bf16.msra.mxu0 0
      %1729 = vmatpush.bf16.msra.mxu0 0
      %1730 = vmatpush.bf16.msra.mxu0 %v1639
      %1731 = vmatpush.bf16.msra.mxu0 %v1637
      %1732 = vmatmul.bf16.gmra.mxu0 %v1692
      %v1733 = vpop.f32.mrf.mxu0
      %v1734 = vadd.f32 %v1649, %v1733
      %v1735 = vpop.f32.mrf.mxu0
      %v1736 = vadd.f32 %v1654, %v1735
      %1737 = vmatmul.bf16.gmra.mxu0 %v1695
      %v1738 = vpop.f32.mrf.mxu0
      %v1739 = vadd.f32 %v1659, %v1738
      %v1740 = vpop.f32.mrf.mxu0
      %v1741 = vadd.f32 %v1664, %v1740
      %1742 = vmatmul.bf16.gmra.mxu0 %v1698
      %v1743 = vpop.f32.mrf.mxu0
      %v1744 = vadd.f32 %v1669, %v1743
      %v1745 = vpop.f32.mrf.mxu0
      %v1746 = vadd.f32 %v1674, %v1745
      %1747 = vdwg.mxu0
      %v1748 = vpack.c.bf16 %v1584, %v1582
      %v1749 = vpack.c.bf16 %v1613, %v1611
      %v1750 = vpack.c.bf16 %v1589, %v1587
      %v1751 = vpack.c.bf16 %v1618, %v1616
      %1752 = vxpose.binary.xlu0.c.b16.start [1/16] %v1749, %v1748, 128
      %1753 = vxpose.binary.xlu0.c.b16.cont [2/16] 0, 0, 128
      %1754 = vxpose.binary.xlu0.c.b16.cont [3/16] 0, 0, 128
      %1755 = vxpose.binary.xlu0.c.b16.cont [4/16] 0, 0, 128
      %1756 = vxpose.binary.xlu0.c.b16.cont [5/16] 0, 0, 128
      %1757 = vxpose.binary.xlu0.c.b16.cont [6/16] 0, 0, 128
      %1758 = vxpose.binary.xlu0.c.b16.cont [7/16] 0, 0, 128
      %1759 = vxpose.binary.xlu0.c.b16.end [8/16] 0, 0, 128
      %v1760 = vpop.trf.xlu0
      %v1761 = vpop.trf.xlu0
      %v1762 = vpop.trf.xlu0
      %v1763 = vpop.trf.xlu0
      %v1764 = vpop.trf.xlu0
      %v1765 = vpop.trf.xlu0
      %v1766 = vpop.trf.xlu0
      %v1767 = vpop.trf.xlu0
      %v1768 = vpop.trf.xlu0
      %v1769 = vpop.trf.xlu0
      %v1770 = vpop.trf.xlu0
      %v1771 = vpop.trf.xlu0
      %v1772 = vpop.trf.xlu0
      %v1773 = vpop.trf.xlu0
      %v1774 = vpop.trf.xlu0
      %v1775 = vpop.trf.xlu0
      %vm1776 = vcmask 130048
      %v1778 = vsel %vm1776, %v1760, 0
      %v1781 = vsel %vm1776, %v1762, 0
      %v1784 = vsel %vm1776, %v1764, 0
      %v1787 = vsel %vm1776, %v1766, 0
      %v1790 = vsel %vm1776, %v1768, 0
      %v1793 = vsel %vm1776, %v1770, 0
      %v1796 = vsel %vm1776, %v1772, 0
      %v1799 = vsel %vm1776, %v1774, 0
      %v1802 = vsel %vm1776, %v1761, 0
      %v1805 = vsel %vm1776, %v1763, 0
      %v1808 = vsel %vm1776, %v1765, 0
      %v1811 = vsel %vm1776, %v1767, 0
      %v1814 = vsel %vm1776, %v1769, 0
      %v1817 = vsel %vm1776, %v1771, 0
      %v1820 = vsel %vm1776, %v1773, 0
      %v1823 = vsel %vm1776, %v1775, 0
      %1825 = vmatpush.bf16.msra.mxu0 0
      %1826 = vmatpush.bf16.msra.mxu0 0
      %1827 = vmatpush.bf16.msra.mxu0 0
      %1828 = vmatpush.bf16.msra.mxu0 0
      %1829 = vmatpush.bf16.msra.mxu0 0
      %1830 = vmatpush.bf16.msra.mxu0 0
      %1831 = vmatpush.bf16.msra.mxu0 0
      %1832 = vmatpush.bf16.msra.mxu0 %v1750
      %1833 = vmatmul.bf16.gmra.mxu0 %v1778
      %v1834 = vpop.f32.mrf.mxu0
      %v1835 = vadd.f32 0.0, %v1834
      %v1836 = vpop.f32.mrf.mxu0
      %v1837 = vadd.f32 0.0, %v1836
      %1838 = vmatmul.bf16.gmra.mxu0 %v1781
      %v1839 = vpop.f32.mrf.mxu0
      %v1840 = vadd.f32 0.0, %v1839
      %v1841 = vpop.f32.mrf.mxu0
      %v1842 = vadd.f32 0.0, %v1841
      %1843 = vmatmul.bf16.gmra.mxu0 %v1784
      %v1844 = vpop.f32.mrf.mxu0
      %v1845 = vadd.f32 0.0, %v1844
      %v1846 = vpop.f32.mrf.mxu0
      %v1847 = vadd.f32 0.0, %v1846
      %1848 = vmatmul.bf16.gmra.mxu0 %v1787
      %v1849 = vpop.f32.mrf.mxu0
      %v1850 = vadd.f32 0.0, %v1849
      %v1851 = vpop.f32.mrf.mxu0
      %v1852 = vadd.f32 0.0, %v1851
      %1853 = vmatmul.bf16.gmra.mxu0 %v1790
      %v1854 = vpop.f32.mrf.mxu0
      %v1855 = vadd.f32 0.0, %v1854
      %v1856 = vpop.f32.mrf.mxu0
      %v1857 = vadd.f32 0.0, %v1856
      %1858 = vmatmul.bf16.gmra.mxu0 %v1793
      %v1859 = vpop.f32.mrf.mxu0
      %v1860 = vadd.f32 0.0, %v1859
      %v1861 = vpop.f32.mrf.mxu0
      %v1862 = vadd.f32 0.0, %v1861
      %1863 = vmatmul.bf16.gmra.mxu0 %v1796
      %v1864 = vpop.f32.mrf.mxu0
      %v1865 = vadd.f32 0.0, %v1864
      %v1866 = vpop.f32.mrf.mxu0
      %v1867 = vadd.f32 0.0, %v1866
      %1868 = vmatmul.bf16.gmra.mxu0 %v1799
      %v1869 = vpop.f32.mrf.mxu0
      %v1870 = vadd.f32 0.0, %v1869
      %v1871 = vpop.f32.mrf.mxu0
      %v1872 = vadd.f32 0.0, %v1871
      %1873 = vmatmul.bf16.gmra.mxu0 %v1802
      %v1874 = vpop.f32.mrf.mxu0
      %v1875 = vadd.f32 0.0, %v1874
      %v1876 = vpop.f32.mrf.mxu0
      %v1877 = vadd.f32 0.0, %v1876
      %1878 = vmatmul.bf16.gmra.mxu0 %v1805
      %v1879 = vpop.f32.mrf.mxu0
      %v1880 = vadd.f32 0.0, %v1879
      %v1881 = vpop.f32.mrf.mxu0
      %v1882 = vadd.f32 0.0, %v1881
      %1883 = vmatmul.bf16.gmra.mxu0 %v1808
      %v1884 = vpop.f32.mrf.mxu0
      %v1885 = vadd.f32 0.0, %v1884
      %v1886 = vpop.f32.mrf.mxu0
      %v1887 = vadd.f32 0.0, %v1886
      %1888 = vmatmul.bf16.gmra.mxu0 %v1811
      %v1889 = vpop.f32.mrf.mxu0
      %v1890 = vadd.f32 0.0, %v1889
      %v1891 = vpop.f32.mrf.mxu0
      %v1892 = vadd.f32 0.0, %v1891
      %1893 = vmatmul.bf16.gmra.mxu0 %v1814
      %v1894 = vpop.f32.mrf.mxu0
      %v1895 = vadd.f32 0.0, %v1894
      %v1896 = vpop.f32.mrf.mxu0
      %v1897 = vadd.f32 0.0, %v1896
      %1898 = vmatmul.bf16.gmra.mxu0 %v1817
      %v1899 = vpop.f32.mrf.mxu0
      %v1900 = vadd.f32 0.0, %v1899
      %v1901 = vpop.f32.mrf.mxu0
      %v1902 = vadd.f32 0.0, %v1901
      %1903 = vmatmul.bf16.gmra.mxu0 %v1820
      %v1904 = vpop.f32.mrf.mxu0
      %v1905 = vadd.f32 0.0, %v1904
      %v1906 = vpop.f32.mrf.mxu0
      %v1907 = vadd.f32 0.0, %v1906
      %1908 = vmatmul.bf16.gmra.mxu0 %v1823
      %v1909 = vpop.f32.mrf.mxu0
      %v1910 = vadd.f32 0.0, %v1909
      %v1911 = vpop.f32.mrf.mxu0
      %v1912 = vadd.f32 0.0, %v1911
      %1913 = vdwg.mxu0
      %1914 = vmatpush.bf16.msra.mxu0 0
      %1915 = vmatpush.bf16.msra.mxu0 0
      %1916 = vmatpush.bf16.msra.mxu0 0
      %1917 = vmatpush.bf16.msra.mxu0 0
      %1918 = vmatpush.bf16.msra.mxu0 0
      %1919 = vmatpush.bf16.msra.mxu0 0
      %1920 = vmatpush.bf16.msra.mxu0 0
      %1921 = vmatpush.bf16.msra.mxu0 %v1751
      %1922 = vmatmul.bf16.gmra.mxu0 %v1778
      %v1923 = vpop.f32.mrf.mxu0
      %v1924 = vadd.f32 0.0, %v1923
      %v1925 = vpop.f32.mrf.mxu0
      %v1926 = vadd.f32 0.0, %v1925
      %1927 = vmatmul.bf16.gmra.mxu0 %v1781
      %v1928 = vpop.f32.mrf.mxu0
      %v1929 = vadd.f32 0.0, %v1928
      %v1930 = vpop.f32.mrf.mxu0
      %v1931 = vadd.f32 0.0, %v1930
      %1932 = vmatmul.bf16.gmra.mxu0 %v1784
      %v1933 = vpop.f32.mrf.mxu0
      %v1934 = vadd.f32 0.0, %v1933
      %v1935 = vpop.f32.mrf.mxu0
      %v1936 = vadd.f32 0.0, %v1935
      %1937 = vmatmul.bf16.gmra.mxu0 %v1787
      %v1938 = vpop.f32.mrf.mxu0
      %v1939 = vadd.f32 0.0, %v1938
      %v1940 = vpop.f32.mrf.mxu0
      %v1941 = vadd.f32 0.0, %v1940
      %1942 = vmatmul.bf16.gmra.mxu0 %v1790
      %v1943 = vpop.f32.mrf.mxu0
      %v1944 = vadd.f32 0.0, %v1943
      %v1945 = vpop.f32.mrf.mxu0
      %v1946 = vadd.f32 0.0, %v1945
      %1947 = vmatmul.bf16.gmra.mxu0 %v1793
      %v1948 = vpop.f32.mrf.mxu0
      %v1949 = vadd.f32 0.0, %v1948
      %v1950 = vpop.f32.mrf.mxu0
      %v1951 = vadd.f32 0.0, %v1950
      %1952 = vmatmul.bf16.gmra.mxu0 %v1796
      %v1953 = vpop.f32.mrf.mxu0
      %v1954 = vadd.f32 0.0, %v1953
      %v1955 = vpop.f32.mrf.mxu0
      %v1956 = vadd.f32 0.0, %v1955
      %1957 = vmatmul.bf16.gmra.mxu0 %v1799
      %v1958 = vpop.f32.mrf.mxu0
      %v1959 = vadd.f32 0.0, %v1958
      %v1960 = vpop.f32.mrf.mxu0
      %v1961 = vadd.f32 0.0, %v1960
      %1962 = vmatmul.bf16.gmra.mxu0 %v1802
      %v1963 = vpop.f32.mrf.mxu0
      %v1964 = vadd.f32 0.0, %v1963
      %v1965 = vpop.f32.mrf.mxu0
      %v1966 = vadd.f32 0.0, %v1965
      %1967 = vmatmul.bf16.gmra.mxu0 %v1805
      %v1968 = vpop.f32.mrf.mxu0
      %v1969 = vadd.f32 0.0, %v1968
      %v1970 = vpop.f32.mrf.mxu0
      %v1971 = vadd.f32 0.0, %v1970
      %1972 = vmatmul.bf16.gmra.mxu0 %v1808
      %v1973 = vpop.f32.mrf.mxu0
      %v1974 = vadd.f32 0.0, %v1973
      %v1975 = vpop.f32.mrf.mxu0
      %v1976 = vadd.f32 0.0, %v1975
      %1977 = vmatmul.bf16.gmra.mxu0 %v1811
      %v1978 = vpop.f32.mrf.mxu0
      %v1979 = vadd.f32 0.0, %v1978
      %v1980 = vpop.f32.mrf.mxu0
      %v1981 = vadd.f32 0.0, %v1980
      %1982 = vmatmul.bf16.gmra.mxu0 %v1814
      %v1983 = vpop.f32.mrf.mxu0
      %v1984 = vadd.f32 0.0, %v1983
      %v1985 = vpop.f32.mrf.mxu0
      %v1986 = vadd.f32 0.0, %v1985
      %1987 = vmatmul.bf16.gmra.mxu0 %v1817
      %v1988 = vpop.f32.mrf.mxu0
      %v1989 = vadd.f32 0.0, %v1988
      %v1990 = vpop.f32.mrf.mxu0
      %v1991 = vadd.f32 0.0, %v1990
      %1992 = vmatmul.bf16.gmra.mxu0 %v1820
      %v1993 = vpop.f32.mrf.mxu0
      %v1994 = vadd.f32 0.0, %v1993
      %v1995 = vpop.f32.mrf.mxu0
      %v1996 = vadd.f32 0.0, %v1995
      %1997 = vmatmul.bf16.gmra.mxu0 %v1823
      %v1998 = vpop.f32.mrf.mxu0
      %v1999 = vadd.f32 0.0, %v1998
      %v2000 = vpop.f32.mrf.mxu0
      %v2001 = vadd.f32 0.0, %v2000
      %2002 = vdwg.mxu0
      %v2003 = vpack.c.bf16 %v1712, %v1710
      %v2004 = vpack.c.bf16 %v1736, %v1734
      %2005 = vmatpush.bf16.msra.mxu0 0
      %2006 = vmatpush.bf16.msra.mxu0 0
      %2007 = vmatpush.bf16.msra.mxu0 0
      %2008 = vmatpush.bf16.msra.mxu0 0
      %2009 = vmatpush.bf16.msra.mxu0 0
      %2010 = vmatpush.bf16.msra.mxu0 0
      %2011 = vmatpush.bf16.msra.mxu0 0
      %2012 = vmatpush.bf16.msra.mxu0 %v2003
      %2013 = vmatmul.bf16.gmra.mxu0 %v1778
      %v2014 = vpop.f32.mrf.mxu0
      %v2015 = vadd.f32 0.0, %v2014
      %v2016 = vpop.f32.mrf.mxu0
      %v2017 = vadd.f32 0.0, %v2016
      %2018 = vmatmul.bf16.gmra.mxu0 %v1781
      %v2019 = vpop.f32.mrf.mxu0
      %v2020 = vadd.f32 0.0, %v2019
      %v2021 = vpop.f32.mrf.mxu0
      %v2022 = vadd.f32 0.0, %v2021
      %2023 = vmatmul.bf16.gmra.mxu0 %v1784
      %v2024 = vpop.f32.mrf.mxu0
      %v2025 = vadd.f32 0.0, %v2024
      %v2026 = vpop.f32.mrf.mxu0
      %v2027 = vadd.f32 0.0, %v2026
      %2028 = vmatmul.bf16.gmra.mxu0 %v1787
      %v2029 = vpop.f32.mrf.mxu0
      %v2030 = vadd.f32 0.0, %v2029
      %v2031 = vpop.f32.mrf.mxu0
      %v2032 = vadd.f32 0.0, %v2031
      %2033 = vmatmul.bf16.gmra.mxu0 %v1790
      %v2034 = vpop.f32.mrf.mxu0
      %v2035 = vadd.f32 0.0, %v2034
      %v2036 = vpop.f32.mrf.mxu0
      %v2037 = vadd.f32 0.0, %v2036
      %2038 = vmatmul.bf16.gmra.mxu0 %v1793
      %v2039 = vpop.f32.mrf.mxu0
      %v2040 = vadd.f32 0.0, %v2039
      %v2041 = vpop.f32.mrf.mxu0
      %v2042 = vadd.f32 0.0, %v2041
      %2043 = vmatmul.bf16.gmra.mxu0 %v1796
      %v2044 = vpop.f32.mrf.mxu0
      %v2045 = vadd.f32 0.0, %v2044
      %v2046 = vpop.f32.mrf.mxu0
      %v2047 = vadd.f32 0.0, %v2046
      %2048 = vmatmul.bf16.gmra.mxu0 %v1799
      %v2049 = vpop.f32.mrf.mxu0
      %v2050 = vadd.f32 0.0, %v2049
      %v2051 = vpop.f32.mrf.mxu0
      %v2052 = vadd.f32 0.0, %v2051
      %2053 = vmatmul.bf16.gmra.mxu0 %v1802
      %v2054 = vpop.f32.mrf.mxu0
      %v2055 = vadd.f32 0.0, %v2054
      %v2056 = vpop.f32.mrf.mxu0
      %v2057 = vadd.f32 0.0, %v2056
      %2058 = vmatmul.bf16.gmra.mxu0 %v1805
      %v2059 = vpop.f32.mrf.mxu0
      %v2060 = vadd.f32 0.0, %v2059
      %v2061 = vpop.f32.mrf.mxu0
      %v2062 = vadd.f32 0.0, %v2061
      %2063 = vmatmul.bf16.gmra.mxu0 %v1808
      %v2064 = vpop.f32.mrf.mxu0
      %v2065 = vadd.f32 0.0, %v2064
      %v2066 = vpop.f32.mrf.mxu0
      %v2067 = vadd.f32 0.0, %v2066
      %2068 = vmatmul.bf16.gmra.mxu0 %v1811
      %v2069 = vpop.f32.mrf.mxu0
      %v2070 = vadd.f32 0.0, %v2069
      %v2071 = vpop.f32.mrf.mxu0
      %v2072 = vadd.f32 0.0, %v2071
      %2073 = vmatmul.bf16.gmra.mxu0 %v1814
      %v2074 = vpop.f32.mrf.mxu0
      %v2075 = vadd.f32 0.0, %v2074
      %v2076 = vpop.f32.mrf.mxu0
      %v2077 = vadd.f32 0.0, %v2076
      %2078 = vmatmul.bf16.gmra.mxu0 %v1817
      %v2079 = vpop.f32.mrf.mxu0
      %v2080 = vadd.f32 0.0, %v2079
      %v2081 = vpop.f32.mrf.mxu0
      %v2082 = vadd.f32 0.0, %v2081
      %2083 = vmatmul.bf16.gmra.mxu0 %v1820
      %v2084 = vpop.f32.mrf.mxu0
      %v2085 = vadd.f32 0.0, %v2084
      %v2086 = vpop.f32.mrf.mxu0
      %v2087 = vadd.f32 0.0, %v2086
      %2088 = vmatmul.bf16.gmra.mxu0 %v1823
      %v2089 = vpop.f32.mrf.mxu0
      %v2090 = vadd.f32 0.0, %v2089
      %v2091 = vpop.f32.mrf.mxu0
      %v2092 = vadd.f32 0.0, %v2091
      %2093 = vdwg.mxu0
      %2094 = vmatpush.bf16.msra.mxu0 0
      %2095 = vmatpush.bf16.msra.mxu0 0
      %2096 = vmatpush.bf16.msra.mxu0 0
      %2097 = vmatpush.bf16.msra.mxu0 0
      %2098 = vmatpush.bf16.msra.mxu0 0
      %2099 = vmatpush.bf16.msra.mxu0 0
      %2100 = vmatpush.bf16.msra.mxu0 0
      %2101 = vmatpush.bf16.msra.mxu0 %v2004
      %2102 = vmatmul.bf16.gmra.mxu0 %v1778
      %v2103 = vpop.f32.mrf.mxu0
      %v2104 = vadd.f32 0.0, %v2103
      %v2105 = vpop.f32.mrf.mxu0
      %v2106 = vadd.f32 0.0, %v2105
      %2107 = vmatmul.bf16.gmra.mxu0 %v1781
      %v2108 = vpop.f32.mrf.mxu0
      %v2109 = vadd.f32 0.0, %v2108
      %v2110 = vpop.f32.mrf.mxu0
      %v2111 = vadd.f32 0.0, %v2110
      %2112 = vmatmul.bf16.gmra.mxu0 %v1784
      %v2113 = vpop.f32.mrf.mxu0
      %v2114 = vadd.f32 0.0, %v2113
      %v2115 = vpop.f32.mrf.mxu0
      %v2116 = vadd.f32 0.0, %v2115
      %2117 = vmatmul.bf16.gmra.mxu0 %v1787
      %v2118 = vpop.f32.mrf.mxu0
      %v2119 = vadd.f32 0.0, %v2118
      %v2120 = vpop.f32.mrf.mxu0
      %v2121 = vadd.f32 0.0, %v2120
      %2122 = vmatmul.bf16.gmra.mxu0 %v1790
      %v2123 = vpop.f32.mrf.mxu0
      %v2124 = vadd.f32 0.0, %v2123
      %v2125 = vpop.f32.mrf.mxu0
      %v2126 = vadd.f32 0.0, %v2125
      %2127 = vmatmul.bf16.gmra.mxu0 %v1793
      %v2128 = vpop.f32.mrf.mxu0
      %v2129 = vadd.f32 0.0, %v2128
      %v2130 = vpop.f32.mrf.mxu0
      %v2131 = vadd.f32 0.0, %v2130
      %2132 = vmatmul.bf16.gmra.mxu0 %v1796
      %v2133 = vpop.f32.mrf.mxu0
      %v2134 = vadd.f32 0.0, %v2133
      %v2135 = vpop.f32.mrf.mxu0
      %v2136 = vadd.f32 0.0, %v2135
      %2137 = vmatmul.bf16.gmra.mxu0 %v1799
      %v2138 = vpop.f32.mrf.mxu0
      %v2139 = vadd.f32 0.0, %v2138
      %v2140 = vpop.f32.mrf.mxu0
      %v2141 = vadd.f32 0.0, %v2140
      %2142 = vmatmul.bf16.gmra.mxu0 %v1802
      %v2143 = vpop.f32.mrf.mxu0
      %v2144 = vadd.f32 0.0, %v2143
      %v2145 = vpop.f32.mrf.mxu0
      %v2146 = vadd.f32 0.0, %v2145
      %2147 = vmatmul.bf16.gmra.mxu0 %v1805
      %v2148 = vpop.f32.mrf.mxu0
      %v2149 = vadd.f32 0.0, %v2148
      %v2150 = vpop.f32.mrf.mxu0
      %v2151 = vadd.f32 0.0, %v2150
      %2152 = vmatmul.bf16.gmra.mxu0 %v1808
      %v2153 = vpop.f32.mrf.mxu0
      %v2154 = vadd.f32 0.0, %v2153
      %v2155 = vpop.f32.mrf.mxu0
      %v2156 = vadd.f32 0.0, %v2155
      %2157 = vmatmul.bf16.gmra.mxu0 %v1811
      %v2158 = vpop.f32.mrf.mxu0
      %v2159 = vadd.f32 0.0, %v2158
      %v2160 = vpop.f32.mrf.mxu0
      %v2161 = vadd.f32 0.0, %v2160
      %2162 = vmatmul.bf16.gmra.mxu0 %v1814
      %v2163 = vpop.f32.mrf.mxu0
      %v2164 = vadd.f32 0.0, %v2163
      %v2165 = vpop.f32.mrf.mxu0
      %v2166 = vadd.f32 0.0, %v2165
      %2167 = vmatmul.bf16.gmra.mxu0 %v1817
      %v2168 = vpop.f32.mrf.mxu0
      %v2169 = vadd.f32 0.0, %v2168
      %v2170 = vpop.f32.mrf.mxu0
      %v2171 = vadd.f32 0.0, %v2170
      %2172 = vmatmul.bf16.gmra.mxu0 %v1820
      %v2173 = vpop.f32.mrf.mxu0
      %v2174 = vadd.f32 0.0, %v2173
      %v2175 = vpop.f32.mrf.mxu0
      %v2176 = vadd.f32 0.0, %v2175
      %2177 = vmatmul.bf16.gmra.mxu0 %v1823
      %v2178 = vpop.f32.mrf.mxu0
      %v2179 = vadd.f32 0.0, %v2178
      %v2180 = vpop.f32.mrf.mxu0
      %v2181 = vadd.f32 0.0, %v2180
      %2182 = vdwg.mxu0
      %v2183 = vmax.f32 %v1835, %v1924
      %2184 = vmax.xlane.f32.xlu0 %v2183
      %v2185 = vpop.xlane.xlu0 %2184
      %v2186 = vmax.f32 %v1837, %v1926
      %2187 = vmax.xlane.f32.xlu0 %v2186
      %v2188 = vpop.xlane.xlu0 %2187
      %v2189 = vmax.f32 %v1840, %v1929
      %2190 = vmax.xlane.f32.xlu0 %v2189
      %v2191 = vpop.xlane.xlu0 %2190
      %v2192 = vmax.f32 %v1842, %v1931
      %2193 = vmax.xlane.f32.xlu0 %v2192
      %v2194 = vpop.xlane.xlu0 %2193
      %v2195 = vmax.f32 %v1845, %v1934
      %2196 = vmax.xlane.f32.xlu0 %v2195
      %v2197 = vpop.xlane.xlu0 %2196
      %v2198 = vmax.f32 %v1847, %v1936
      %2199 = vmax.xlane.f32.xlu0 %v2198
      %v2200 = vpop.xlane.xlu0 %2199
      %v2201 = vmax.f32 %v1850, %v1939
      %2202 = vmax.xlane.f32.xlu0 %v2201
      %v2203 = vpop.xlane.xlu0 %2202
      %v2204 = vmax.f32 %v1852, %v1941
      %2205 = vmax.xlane.f32.xlu0 %v2204
      %v2206 = vpop.xlane.xlu0 %2205
      %v2207 = vmax.f32 %v1855, %v1944
      %2208 = vmax.xlane.f32.xlu0 %v2207
      %v2209 = vpop.xlane.xlu0 %2208
      %v2210 = vmax.f32 %v1857, %v1946
      %2211 = vmax.xlane.f32.xlu0 %v2210
      %v2212 = vpop.xlane.xlu0 %2211
      %v2213 = vmax.f32 %v1860, %v1949
      %2214 = vmax.xlane.f32.xlu0 %v2213
      %v2215 = vpop.xlane.xlu0 %2214
      %v2216 = vmax.f32 %v1862, %v1951
      %2217 = vmax.xlane.f32.xlu0 %v2216
      %v2218 = vpop.xlane.xlu0 %2217
      %v2219 = vmax.f32 %v1865, %v1954
      %2220 = vmax.xlane.f32.xlu0 %v2219
      %v2221 = vpop.xlane.xlu0 %2220
      %v2222 = vmax.f32 %v1867, %v1956
      %2223 = vmax.xlane.f32.xlu0 %v2222
      %v2224 = vpop.xlane.xlu0 %2223
      %v2225 = vmax.f32 %v1870, %v1959
      %2226 = vmax.xlane.f32.xlu0 %v2225
      %v2227 = vpop.xlane.xlu0 %2226
      %v2228 = vmax.f32 %v1872, %v1961
      %2229 = vmax.xlane.f32.xlu0 %v2228
      %v2230 = vpop.xlane.xlu0 %2229
      %v2231 = vmax.f32 %v1875, %v1964
      %2232 = vmax.xlane.f32.xlu0 %v2231
      %v2233 = vpop.xlane.xlu0 %2232
      %v2234 = vmax.f32 %v1877, %v1966
      %2235 = vmax.xlane.f32.xlu0 %v2234
      %v2236 = vpop.xlane.xlu0 %2235
      %v2237 = vmax.f32 %v1880, %v1969
      %2238 = vmax.xlane.f32.xlu0 %v2237
      %v2239 = vpop.xlane.xlu0 %2238
      %v2240 = vmax.f32 %v1882, %v1971
      %2241 = vmax.xlane.f32.xlu0 %v2240
      %v2242 = vpop.xlane.xlu0 %2241
      %v2243 = vmax.f32 %v1885, %v1974
      %2244 = vmax.xlane.f32.xlu0 %v2243
      %v2245 = vpop.xlane.xlu0 %2244
      %v2246 = vmax.f32 %v1887, %v1976
      %2247 = vmax.xlane.f32.xlu0 %v2246
      %v2248 = vpop.xlane.xlu0 %2247
      %v2249 = vmax.f32 %v1890, %v1979
      %2250 = vmax.xlane.f32.xlu0 %v2249
      %v2251 = vpop.xlane.xlu0 %2250
      %v2252 = vmax.f32 %v1892, %v1981
      %2253 = vmax.xlane.f32.xlu0 %v2252
      %v2254 = vpop.xlane.xlu0 %2253
      %v2255 = vmax.f32 %v1895, %v1984
      %2256 = vmax.xlane.f32.xlu0 %v2255
      %v2257 = vpop.xlane.xlu0 %2256
      %v2258 = vmax.f32 %v1897, %v1986
      %2259 = vmax.xlane.f32.xlu0 %v2258
      %v2260 = vpop.xlane.xlu0 %2259
      %v2261 = vmax.f32 %v1900, %v1989
      %2262 = vmax.xlane.f32.xlu0 %v2261
      %v2263 = vpop.xlane.xlu0 %2262
      %v2264 = vmax.f32 %v1902, %v1991
      %2265 = vmax.xlane.f32.xlu0 %v2264
      %v2266 = vpop.xlane.xlu0 %2265
      %v2267 = vmax.f32 %v1905, %v1994
      %2268 = vmax.xlane.f32.xlu0 %v2267
      %v2269 = vpop.xlane.xlu0 %2268
      %v2270 = vmax.f32 %v1907, %v1996
      %2271 = vmax.xlane.f32.xlu0 %v2270
      %v2272 = vpop.xlane.xlu0 %2271
      %v2273 = vmax.f32 %v1910, %v1999
      %2274 = vmax.xlane.f32.xlu0 %v2273
      %v2275 = vpop.xlane.xlu0 %2274
      %v2276 = vmax.f32 %v1912, %v2001
      %2277 = vmax.xlane.f32.xlu0 %v2276
      %v2278 = vpop.xlane.xlu0 %2277
      %v2279 = vsub.f32 %v1835, %v2185
      %v2280 = vsub.f32 %v1924, %v2185
      %v2281 = vsub.f32 %v1837, %v2188
      %v2282 = vsub.f32 %v1926, %v2188
      %v2283 = vsub.f32 %v1840, %v2191
      %v2284 = vsub.f32 %v1929, %v2191
      %v2285 = vsub.f32 %v1842, %v2194
      %v2286 = vsub.f32 %v1931, %v2194
      %v2287 = vsub.f32 %v1845, %v2197
      %v2288 = vsub.f32 %v1934, %v2197
      %v2289 = vsub.f32 %v1847, %v2200
      %v2290 = vsub.f32 %v1936, %v2200
      %v2291 = vsub.f32 %v1850, %v2203
      %v2292 = vsub.f32 %v1939, %v2203
      %v2293 = vsub.f32 %v1852, %v2206
      %v2294 = vsub.f32 %v1941, %v2206
      %v2295 = vsub.f32 %v1855, %v2209
      %v2296 = vsub.f32 %v1944, %v2209
      %v2297 = vsub.f32 %v1857, %v2212
      %v2298 = vsub.f32 %v1946, %v2212
      %v2299 = vsub.f32 %v1860, %v2215
      %v2300 = vsub.f32 %v1949, %v2215
      %v2301 = vsub.f32 %v1862, %v2218
      %v2302 = vsub.f32 %v1951, %v2218
      %v2303 = vsub.f32 %v1865, %v2221
      %v2304 = vsub.f32 %v1954, %v2221
      %v2305 = vsub.f32 %v1867, %v2224
      %v2306 = vsub.f32 %v1956, %v2224
      %v2307 = vsub.f32 %v1870, %v2227
      %v2308 = vsub.f32 %v1959, %v2227
      %v2309 = vsub.f32 %v1872, %v2230
      %v2310 = vsub.f32 %v1961, %v2230
      %v2311 = vsub.f32 %v1875, %v2233
      %v2312 = vsub.f32 %v1964, %v2233
      %v2313 = vsub.f32 %v1877, %v2236
      %v2314 = vsub.f32 %v1966, %v2236
      %v2315 = vsub.f32 %v1880, %v2239
      %v2316 = vsub.f32 %v1969, %v2239
      %v2317 = vsub.f32 %v1882, %v2242
      %v2318 = vsub.f32 %v1971, %v2242
      %v2319 = vsub.f32 %v1885, %v2245
      %v2320 = vsub.f32 %v1974, %v2245
      %v2321 = vsub.f32 %v1887, %v2248
      %v2322 = vsub.f32 %v1976, %v2248
      %v2323 = vsub.f32 %v1890, %v2251
      %v2324 = vsub.f32 %v1979, %v2251
      %v2325 = vsub.f32 %v1892, %v2254
      %v2326 = vsub.f32 %v1981, %v2254
      %v2327 = vsub.f32 %v1895, %v2257
      %v2328 = vsub.f32 %v1984, %v2257
      %v2329 = vsub.f32 %v1897, %v2260
      %v2330 = vsub.f32 %v1986, %v2260
      %v2331 = vsub.f32 %v1900, %v2263
      %v2332 = vsub.f32 %v1989, %v2263
      %v2333 = vsub.f32 %v1902, %v2266
      %v2334 = vsub.f32 %v1991, %v2266
      %v2335 = vsub.f32 %v1905, %v2269
      %v2336 = vsub.f32 %v1994, %v2269
      %v2337 = vsub.f32 %v1907, %v2272
      %v2338 = vsub.f32 %v1996, %v2272
      %v2339 = vsub.f32 %v1910, %v2275
      %v2340 = vsub.f32 %v1999, %v2275
      %v2341 = vsub.f32 %v1912, %v2278
      %v2342 = vsub.f32 %v2001, %v2278
      %v2343 = vmul.f32 %v2279, 1.442695
      %v2344 = vpow.pop %v2343
      %v2345 = vmul.f32 %v2280, 1.442695
      %v2346 = vpow.pop %v2345
      %v2347 = vmul.f32 %v2281, 1.442695
      %v2348 = vpow.pop %v2347
      %v2349 = vmul.f32 %v2282, 1.442695
      %v2350 = vpow.pop %v2349
      %v2351 = vmul.f32 %v2283, 1.442695
      %v2352 = vpow.pop %v2351
      %v2353 = vmul.f32 %v2284, 1.442695
      %v2354 = vpow.pop %v2353
      %v2355 = vmul.f32 %v2285, 1.442695
      %v2356 = vpow.pop %v2355
      %v2357 = vmul.f32 %v2286, 1.442695
      %v2358 = vpow.pop %v2357
      %v2359 = vmul.f32 %v2287, 1.442695
      %v2360 = vpow.pop %v2359
      %v2361 = vmul.f32 %v2288, 1.442695
      %v2362 = vpow.pop %v2361
      %v2363 = vmul.f32 %v2289, 1.442695
      %v2364 = vpow.pop %v2363
      %v2365 = vmul.f32 %v2290, 1.442695
      %v2366 = vpow.pop %v2365
      %v2367 = vmul.f32 %v2291, 1.442695
      %v2368 = vpow.pop %v2367
      %v2369 = vmul.f32 %v2292, 1.442695
      %v2370 = vpow.pop %v2369
      %v2371 = vmul.f32 %v2293, 1.442695
      %v2372 = vpow.pop %v2371
      %v2373 = vmul.f32 %v2294, 1.442695
      %v2374 = vpow.pop %v2373
      %v2375 = vmul.f32 %v2295, 1.442695
      %v2376 = vpow.pop %v2375
      %v2377 = vmul.f32 %v2296, 1.442695
      %v2378 = vpow.pop %v2377
      %v2379 = vmul.f32 %v2297, 1.442695
      %v2380 = vpow.pop %v2379
      %v2381 = vmul.f32 %v2298, 1.442695
      %v2382 = vpow.pop %v2381
      %v2383 = vmul.f32 %v2299, 1.442695
      %v2384 = vpow.pop %v2383
      %v2385 = vmul.f32 %v2300, 1.442695
      %v2386 = vpow.pop %v2385
      %v2387 = vmul.f32 %v2301, 1.442695
      %v2388 = vpow.pop %v2387
      %v2389 = vmul.f32 %v2302, 1.442695
      %v2390 = vpow.pop %v2389
      %v2391 = vmul.f32 %v2303, 1.442695
      %v2392 = vpow.pop %v2391
      %v2393 = vmul.f32 %v2304, 1.442695
      %v2394 = vpow.pop %v2393
      %v2395 = vmul.f32 %v2305, 1.442695
      %v2396 = vpow.pop %v2395
      %v2397 = vmul.f32 %v2306, 1.442695
      %v2398 = vpow.pop %v2397
      %v2399 = vmul.f32 %v2307, 1.442695
      %v2400 = vpow.pop %v2399
      %v2401 = vmul.f32 %v2308, 1.442695
      %v2402 = vpow.pop %v2401
      %v2403 = vmul.f32 %v2309, 1.442695
      %v2404 = vpow.pop %v2403
      %v2405 = vmul.f32 %v2310, 1.442695
      %v2406 = vpow.pop %v2405
      %v2407 = vmul.f32 %v2311, 1.442695
      %v2408 = vpow.pop %v2407
      %v2409 = vmul.f32 %v2312, 1.442695
      %v2410 = vpow.pop %v2409
      %v2411 = vmul.f32 %v2313, 1.442695
      %v2412 = vpow.pop %v2411
      %v2413 = vmul.f32 %v2314, 1.442695
      %v2414 = vpow.pop %v2413
      %v2415 = vmul.f32 %v2315, 1.442695
      %v2416 = vpow.pop %v2415
      %v2417 = vmul.f32 %v2316, 1.442695
      %v2418 = vpow.pop %v2417
      %v2419 = vmul.f32 %v2317, 1.442695
      %v2420 = vpow.pop %v2419
      %v2421 = vmul.f32 %v2318, 1.442695
      %v2422 = vpow.pop %v2421
      %v2423 = vmul.f32 %v2319, 1.442695
      %v2424 = vpow.pop %v2423
      %v2425 = vmul.f32 %v2320, 1.442695
      %v2426 = vpow.pop %v2425
      %v2427 = vmul.f32 %v2321, 1.442695
      %v2428 = vpow.pop %v2427
      %v2429 = vmul.f32 %v2322, 1.442695
      %v2430 = vpow.pop %v2429
      %v2431 = vmul.f32 %v2323, 1.442695
      %v2432 = vpow.pop %v2431
      %v2433 = vmul.f32 %v2324, 1.442695
      %v2434 = vpow.pop %v2433
      %v2435 = vmul.f32 %v2325, 1.442695
      %v2436 = vpow.pop %v2435
      %v2437 = vmul.f32 %v2326, 1.442695
      %v2438 = vpow.pop %v2437
      %v2439 = vmul.f32 %v2327, 1.442695
      %v2440 = vpow.pop %v2439
      %v2441 = vmul.f32 %v2328, 1.442695
      %v2442 = vpow.pop %v2441
      %v2443 = vmul.f32 %v2329, 1.442695
      %v2444 = vpow.pop %v2443
      %v2445 = vmul.f32 %v2330, 1.442695
      %v2446 = vpow.pop %v2445
      %v2447 = vmul.f32 %v2331, 1.442695
      %v2448 = vpow.pop %v2447
      %v2449 = vmul.f32 %v2332, 1.442695
      %v2450 = vpow.pop %v2449
      %v2451 = vmul.f32 %v2333, 1.442695
      %v2452 = vpow.pop %v2451
      %v2453 = vmul.f32 %v2334, 1.442695
      %v2454 = vpow.pop %v2453
      %v2455 = vmul.f32 %v2335, 1.442695
      %v2456 = vpow.pop %v2455
      %v2457 = vmul.f32 %v2336, 1.442695
      %v2458 = vpow.pop %v2457
      %v2459 = vmul.f32 %v2337, 1.442695
      %v2460 = vpow.pop %v2459
      %v2461 = vmul.f32 %v2338, 1.442695
      %v2462 = vpow.pop %v2461
      %v2463 = vmul.f32 %v2339, 1.442695
      %v2464 = vpow.pop %v2463
      %v2465 = vmul.f32 %v2340, 1.442695
      %v2466 = vpow.pop %v2465
      %v2467 = vmul.f32 %v2341, 1.442695
      %v2468 = vpow.pop %v2467
      %v2469 = vmul.f32 %v2342, 1.442695
      %v2470 = vpow.pop %v2469
      %v2471 = vadd.f32 %v2344, %v2346
      %2472 = vadd.xlane.f32.xlu0 %v2471
      %v2473 = vpop.xlane.xlu0 %2472
      %v2474 = vadd.f32 %v2348, %v2350
      %2475 = vadd.xlane.f32.xlu0 %v2474
      %v2476 = vpop.xlane.xlu0 %2475
      %v2477 = vadd.f32 %v2352, %v2354
      %2478 = vadd.xlane.f32.xlu0 %v2477
      %v2479 = vpop.xlane.xlu0 %2478
      %v2480 = vadd.f32 %v2356, %v2358
      %2481 = vadd.xlane.f32.xlu0 %v2480
      %v2482 = vpop.xlane.xlu0 %2481
      %v2483 = vadd.f32 %v2360, %v2362
      %2484 = vadd.xlane.f32.xlu0 %v2483
      %v2485 = vpop.xlane.xlu0 %2484
      %v2486 = vadd.f32 %v2364, %v2366
      %2487 = vadd.xlane.f32.xlu0 %v2486
      %v2488 = vpop.xlane.xlu0 %2487
      %v2489 = vadd.f32 %v2368, %v2370
      %2490 = vadd.xlane.f32.xlu0 %v2489
      %v2491 = vpop.xlane.xlu0 %2490
      %v2492 = vadd.f32 %v2372, %v2374
      %2493 = vadd.xlane.f32.xlu0 %v2492
      %v2494 = vpop.xlane.xlu0 %2493
      %v2495 = vadd.f32 %v2376, %v2378
      %2496 = vadd.xlane.f32.xlu0 %v2495
      %v2497 = vpop.xlane.xlu0 %2496
      %v2498 = vadd.f32 %v2380, %v2382
      %2499 = vadd.xlane.f32.xlu0 %v2498
      %v2500 = vpop.xlane.xlu0 %2499
      %v2501 = vadd.f32 %v2384, %v2386
      %2502 = vadd.xlane.f32.xlu0 %v2501
      %v2503 = vpop.xlane.xlu0 %2502
      %v2504 = vadd.f32 %v2388, %v2390
      %2505 = vadd.xlane.f32.xlu0 %v2504
      %v2506 = vpop.xlane.xlu0 %2505
      %v2507 = vadd.f32 %v2392, %v2394
      %2508 = vadd.xlane.f32.xlu0 %v2507
      %v2509 = vpop.xlane.xlu0 %2508
      %v2510 = vadd.f32 %v2396, %v2398
      %2511 = vadd.xlane.f32.xlu0 %v2510
      %v2512 = vpop.xlane.xlu0 %2511
      %v2513 = vadd.f32 %v2400, %v2402
      %2514 = vadd.xlane.f32.xlu0 %v2513
      %v2515 = vpop.xlane.xlu0 %2514
      %v2516 = vadd.f32 %v2404, %v2406
      %2517 = vadd.xlane.f32.xlu0 %v2516
      %v2518 = vpop.xlane.xlu0 %2517
      %v2519 = vadd.f32 %v2408, %v2410
      %2520 = vadd.xlane.f32.xlu0 %v2519
      %v2521 = vpop.xlane.xlu0 %2520
      %v2522 = vadd.f32 %v2412, %v2414
      %2523 = vadd.xlane.f32.xlu0 %v2522
      %v2524 = vpop.xlane.xlu0 %2523
      %v2525 = vadd.f32 %v2416, %v2418
      %2526 = vadd.xlane.f32.xlu0 %v2525
      %v2527 = vpop.xlane.xlu0 %2526
      %v2528 = vadd.f32 %v2420, %v2422
      %2529 = vadd.xlane.f32.xlu0 %v2528
      %v2530 = vpop.xlane.xlu0 %2529
      %v2531 = vadd.f32 %v2424, %v2426
      %2532 = vadd.xlane.f32.xlu0 %v2531
      %v2533 = vpop.xlane.xlu0 %2532
      %v2534 = vadd.f32 %v2428, %v2430
      %2535 = vadd.xlane.f32.xlu0 %v2534
      %v2536 = vpop.xlane.xlu0 %2535
      %v2537 = vadd.f32 %v2432, %v2434
      %2538 = vadd.xlane.f32.xlu0 %v2537
      %v2539 = vpop.xlane.xlu0 %2538
      %v2540 = vadd.f32 %v2436, %v2438
      %2541 = vadd.xlane.f32.xlu0 %v2540
      %v2542 = vpop.xlane.xlu0 %2541
      %v2543 = vadd.f32 %v2440, %v2442
      %2544 = vadd.xlane.f32.xlu0 %v2543
      %v2545 = vpop.xlane.xlu0 %2544
      %v2546 = vadd.f32 %v2444, %v2446
      %2547 = vadd.xlane.f32.xlu0 %v2546
      %v2548 = vpop.xlane.xlu0 %2547
      %v2549 = vadd.f32 %v2448, %v2450
      %2550 = vadd.xlane.f32.xlu0 %v2549
      %v2551 = vpop.xlane.xlu0 %2550
      %v2552 = vadd.f32 %v2452, %v2454
      %2553 = vadd.xlane.f32.xlu0 %v2552
      %v2554 = vpop.xlane.xlu0 %2553
      %v2555 = vadd.f32 %v2456, %v2458
      %2556 = vadd.xlane.f32.xlu0 %v2555
      %v2557 = vpop.xlane.xlu0 %2556
      %v2558 = vadd.f32 %v2460, %v2462
      %2559 = vadd.xlane.f32.xlu0 %v2558
      %v2560 = vpop.xlane.xlu0 %2559
      %v2561 = vadd.f32 %v2464, %v2466
      %2562 = vadd.xlane.f32.xlu0 %v2561
      %v2563 = vpop.xlane.xlu0 %2562
      %v2564 = vadd.f32 %v2468, %v2470
      %2565 = vadd.xlane.f32.xlu0 %v2564
      %v2566 = vpop.xlane.xlu0 %2565
      %v2567 = vrcp.pop %v2473
      %v2568 = vrcp.pop %v2476
      %v2569 = vrcp.pop %v2479
      %v2570 = vrcp.pop %v2482
      %v2571 = vrcp.pop %v2485
      %v2572 = vrcp.pop %v2488
      %v2573 = vrcp.pop %v2491
      %v2574 = vrcp.pop %v2494
      %v2575 = vrcp.pop %v2497
      %v2576 = vrcp.pop %v2500
      %v2577 = vrcp.pop %v2503
      %v2578 = vrcp.pop %v2506
      %v2579 = vrcp.pop %v2509
      %v2580 = vrcp.pop %v2512
      %v2581 = vrcp.pop %v2515
      %v2582 = vrcp.pop %v2518
      %v2583 = vrcp.pop %v2521
      %v2584 = vrcp.pop %v2524
      %v2585 = vrcp.pop %v2527
      %v2586 = vrcp.pop %v2530
      %v2587 = vrcp.pop %v2533
      %v2588 = vrcp.pop %v2536
      %v2589 = vrcp.pop %v2539
      %v2590 = vrcp.pop %v2542
      %v2591 = vrcp.pop %v2545
      %v2592 = vrcp.pop %v2548
      %v2593 = vrcp.pop %v2551
      %v2594 = vrcp.pop %v2554
      %v2595 = vrcp.pop %v2557
      %v2596 = vrcp.pop %v2560
      %v2597 = vrcp.pop %v2563
      %v2598 = vrcp.pop %v2566
      %v2599 = vmul.f32 %v2344, %v2567
      %v2600 = vmul.f32 %v2346, %v2567
      %v2601 = vmul.f32 %v2348, %v2568
      %v2602 = vmul.f32 %v2350, %v2568
      %v2603 = vmul.f32 %v2352, %v2569
      %v2604 = vmul.f32 %v2354, %v2569
      %v2605 = vmul.f32 %v2356, %v2570
      %v2606 = vmul.f32 %v2358, %v2570
      %v2607 = vmul.f32 %v2360, %v2571
      %v2608 = vmul.f32 %v2362, %v2571
      %v2609 = vmul.f32 %v2364, %v2572
      %v2610 = vmul.f32 %v2366, %v2572
      %v2611 = vmul.f32 %v2368, %v2573
      %v2612 = vmul.f32 %v2370, %v2573
      %v2613 = vmul.f32 %v2372, %v2574
      %v2614 = vmul.f32 %v2374, %v2574
      %v2615 = vmul.f32 %v2376, %v2575
      %v2616 = vmul.f32 %v2378, %v2575
      %v2617 = vmul.f32 %v2380, %v2576
      %v2618 = vmul.f32 %v2382, %v2576
      %v2619 = vmul.f32 %v2384, %v2577
      %v2620 = vmul.f32 %v2386, %v2577
      %v2621 = vmul.f32 %v2388, %v2578
      %v2622 = vmul.f32 %v2390, %v2578
      %v2623 = vmul.f32 %v2392, %v2579
      %v2624 = vmul.f32 %v2394, %v2579
      %v2625 = vmul.f32 %v2396, %v2580
      %v2626 = vmul.f32 %v2398, %v2580
      %v2627 = vmul.f32 %v2400, %v2581
      %v2628 = vmul.f32 %v2402, %v2581
      %v2629 = vmul.f32 %v2404, %v2582
      %v2630 = vmul.f32 %v2406, %v2582
      %v2631 = vmul.f32 %v2408, %v2583
      %v2632 = vmul.f32 %v2410, %v2583
      %v2633 = vmul.f32 %v2412, %v2584
      %v2634 = vmul.f32 %v2414, %v2584
      %v2635 = vmul.f32 %v2416, %v2585
      %v2636 = vmul.f32 %v2418, %v2585
      %v2637 = vmul.f32 %v2420, %v2586
      %v2638 = vmul.f32 %v2422, %v2586
      %v2639 = vmul.f32 %v2424, %v2587
      %v2640 = vmul.f32 %v2426, %v2587
      %v2641 = vmul.f32 %v2428, %v2588
      %v2642 = vmul.f32 %v2430, %v2588
      %v2643 = vmul.f32 %v2432, %v2589
      %v2644 = vmul.f32 %v2434, %v2589
      %v2645 = vmul.f32 %v2436, %v2590
      %v2646 = vmul.f32 %v2438, %v2590
      %v2647 = vmul.f32 %v2440, %v2591
      %v2648 = vmul.f32 %v2442, %v2591
      %v2649 = vmul.f32 %v2444, %v2592
      %v2650 = vmul.f32 %v2446, %v2592
      %v2651 = vmul.f32 %v2448, %v2593
      %v2652 = vmul.f32 %v2450, %v2593
      %v2653 = vmul.f32 %v2452, %v2594
      %v2654 = vmul.f32 %v2454, %v2594
      %v2655 = vmul.f32 %v2456, %v2595
      %v2656 = vmul.f32 %v2458, %v2595
      %v2657 = vmul.f32 %v2460, %v2596
      %v2658 = vmul.f32 %v2462, %v2596
      %v2659 = vmul.f32 %v2464, %v2597
      %v2660 = vmul.f32 %v2466, %v2597
      %v2661 = vmul.f32 %v2468, %v2598
      %v2662 = vmul.f32 %v2470, %v2598
      %v2663 = vmax.f32 %v2015, %v2104
      %2664 = vmax.xlane.f32.xlu0 %v2663
      %v2665 = vpop.xlane.xlu0 %2664
      %v2666 = vmax.f32 %v2017, %v2106
      %2667 = vmax.xlane.f32.xlu0 %v2666
      %v2668 = vpop.xlane.xlu0 %2667
      %v2669 = vmax.f32 %v2020, %v2109
      %2670 = vmax.xlane.f32.xlu0 %v2669
      %v2671 = vpop.xlane.xlu0 %2670
      %v2672 = vmax.f32 %v2022, %v2111
      %2673 = vmax.xlane.f32.xlu0 %v2672
      %v2674 = vpop.xlane.xlu0 %2673
      %v2675 = vmax.f32 %v2025, %v2114
      %2676 = vmax.xlane.f32.xlu0 %v2675
      %v2677 = vpop.xlane.xlu0 %2676
      %v2678 = vmax.f32 %v2027, %v2116
      %2679 = vmax.xlane.f32.xlu0 %v2678
      %v2680 = vpop.xlane.xlu0 %2679
      %v2681 = vmax.f32 %v2030, %v2119
      %2682 = vmax.xlane.f32.xlu0 %v2681
      %v2683 = vpop.xlane.xlu0 %2682
      %v2684 = vmax.f32 %v2032, %v2121
      %2685 = vmax.xlane.f32.xlu0 %v2684
      %v2686 = vpop.xlane.xlu0 %2685
      %v2687 = vmax.f32 %v2035, %v2124
      %2688 = vmax.xlane.f32.xlu0 %v2687
      %v2689 = vpop.xlane.xlu0 %2688
      %v2690 = vmax.f32 %v2037, %v2126
      %2691 = vmax.xlane.f32.xlu0 %v2690
      %v2692 = vpop.xlane.xlu0 %2691
      %v2693 = vmax.f32 %v2040, %v2129
      %2694 = vmax.xlane.f32.xlu0 %v2693
      %v2695 = vpop.xlane.xlu0 %2694
      %v2696 = vmax.f32 %v2042, %v2131
      %2697 = vmax.xlane.f32.xlu0 %v2696
      %v2698 = vpop.xlane.xlu0 %2697
      %v2699 = vmax.f32 %v2045, %v2134
      %2700 = vmax.xlane.f32.xlu0 %v2699
      %v2701 = vpop.xlane.xlu0 %2700
      %v2702 = vmax.f32 %v2047, %v2136
      %2703 = vmax.xlane.f32.xlu0 %v2702
      %v2704 = vpop.xlane.xlu0 %2703
      %v2705 = vmax.f32 %v2050, %v2139
      %2706 = vmax.xlane.f32.xlu0 %v2705
      %v2707 = vpop.xlane.xlu0 %2706
      %v2708 = vmax.f32 %v2052, %v2141
      %2709 = vmax.xlane.f32.xlu0 %v2708
      %v2710 = vpop.xlane.xlu0 %2709
      %v2711 = vmax.f32 %v2055, %v2144
      %2712 = vmax.xlane.f32.xlu0 %v2711
      %v2713 = vpop.xlane.xlu0 %2712
      %v2714 = vmax.f32 %v2057, %v2146
      %2715 = vmax.xlane.f32.xlu0 %v2714
      %v2716 = vpop.xlane.xlu0 %2715
      %v2717 = vmax.f32 %v2060, %v2149
      %2718 = vmax.xlane.f32.xlu0 %v2717
      %v2719 = vpop.xlane.xlu0 %2718
      %v2720 = vmax.f32 %v2062, %v2151
      %2721 = vmax.xlane.f32.xlu0 %v2720
      %v2722 = vpop.xlane.xlu0 %2721
      %v2723 = vmax.f32 %v2065, %v2154
      %2724 = vmax.xlane.f32.xlu0 %v2723
      %v2725 = vpop.xlane.xlu0 %2724
      %v2726 = vmax.f32 %v2067, %v2156
      %2727 = vmax.xlane.f32.xlu0 %v2726
      %v2728 = vpop.xlane.xlu0 %2727
      %v2729 = vmax.f32 %v2070, %v2159
      %2730 = vmax.xlane.f32.xlu0 %v2729
      %v2731 = vpop.xlane.xlu0 %2730
      %v2732 = vmax.f32 %v2072, %v2161
      %2733 = vmax.xlane.f32.xlu0 %v2732
      %v2734 = vpop.xlane.xlu0 %2733
      %v2735 = vmax.f32 %v2075, %v2164
      %2736 = vmax.xlane.f32.xlu0 %v2735
      %v2737 = vpop.xlane.xlu0 %2736
      %v2738 = vmax.f32 %v2077, %v2166
      %2739 = vmax.xlane.f32.xlu0 %v2738
      %v2740 = vpop.xlane.xlu0 %2739
      %v2741 = vmax.f32 %v2080, %v2169
      %2742 = vmax.xlane.f32.xlu0 %v2741
      %v2743 = vpop.xlane.xlu0 %2742
      %v2744 = vmax.f32 %v2082, %v2171
      %2745 = vmax.xlane.f32.xlu0 %v2744
      %v2746 = vpop.xlane.xlu0 %2745
      %v2747 = vmax.f32 %v2085, %v2174
      %2748 = vmax.xlane.f32.xlu0 %v2747
      %v2749 = vpop.xlane.xlu0 %2748
      %v2750 = vmax.f32 %v2087, %v2176
      %2751 = vmax.xlane.f32.xlu0 %v2750
      %v2752 = vpop.xlane.xlu0 %2751
      %v2753 = vmax.f32 %v2090, %v2179
      %2754 = vmax.xlane.f32.xlu0 %v2753
      %v2755 = vpop.xlane.xlu0 %2754
      %v2756 = vmax.f32 %v2092, %v2181
      %2757 = vmax.xlane.f32.xlu0 %v2756
      %v2758 = vpop.xlane.xlu0 %2757
      %v2759 = vsub.f32 %v2015, %v2665
      %v2760 = vsub.f32 %v2104, %v2665
      %v2761 = vsub.f32 %v2017, %v2668
      %v2762 = vsub.f32 %v2106, %v2668
      %v2763 = vsub.f32 %v2020, %v2671
      %v2764 = vsub.f32 %v2109, %v2671
      %v2765 = vsub.f32 %v2022, %v2674
      %v2766 = vsub.f32 %v2111, %v2674
      %v2767 = vsub.f32 %v2025, %v2677
      %v2768 = vsub.f32 %v2114, %v2677
      %v2769 = vsub.f32 %v2027, %v2680
      %v2770 = vsub.f32 %v2116, %v2680
      %v2771 = vsub.f32 %v2030, %v2683
      %v2772 = vsub.f32 %v2119, %v2683
      %v2773 = vsub.f32 %v2032, %v2686
      %v2774 = vsub.f32 %v2121, %v2686
      %v2775 = vsub.f32 %v2035, %v2689
      %v2776 = vsub.f32 %v2124, %v2689
      %v2777 = vsub.f32 %v2037, %v2692
      %v2778 = vsub.f32 %v2126, %v2692
      %v2779 = vsub.f32 %v2040, %v2695
      %v2780 = vsub.f32 %v2129, %v2695
      %v2781 = vsub.f32 %v2042, %v2698
      %v2782 = vsub.f32 %v2131, %v2698
      %v2783 = vsub.f32 %v2045, %v2701
      %v2784 = vsub.f32 %v2134, %v2701
      %v2785 = vsub.f32 %v2047, %v2704
      %v2786 = vsub.f32 %v2136, %v2704
      %v2787 = vsub.f32 %v2050, %v2707
      %v2788 = vsub.f32 %v2139, %v2707
      %v2789 = vsub.f32 %v2052, %v2710
      %v2790 = vsub.f32 %v2141, %v2710
      %v2791 = vsub.f32 %v2055, %v2713
      %v2792 = vsub.f32 %v2144, %v2713
      %v2793 = vsub.f32 %v2057, %v2716
      %v2794 = vsub.f32 %v2146, %v2716
      %v2795 = vsub.f32 %v2060, %v2719
      %v2796 = vsub.f32 %v2149, %v2719
      %v2797 = vsub.f32 %v2062, %v2722
      %v2798 = vsub.f32 %v2151, %v2722
      %v2799 = vsub.f32 %v2065, %v2725
      %v2800 = vsub.f32 %v2154, %v2725
      %v2801 = vsub.f32 %v2067, %v2728
      %v2802 = vsub.f32 %v2156, %v2728
      %v2803 = vsub.f32 %v2070, %v2731
      %v2804 = vsub.f32 %v2159, %v2731
      %v2805 = vsub.f32 %v2072, %v2734
      %v2806 = vsub.f32 %v2161, %v2734
      %v2807 = vsub.f32 %v2075, %v2737
      %v2808 = vsub.f32 %v2164, %v2737
      %v2809 = vsub.f32 %v2077, %v2740
      %v2810 = vsub.f32 %v2166, %v2740
      %v2811 = vsub.f32 %v2080, %v2743
      %v2812 = vsub.f32 %v2169, %v2743
      %v2813 = vsub.f32 %v2082, %v2746
      %v2814 = vsub.f32 %v2171, %v2746
      %v2815 = vsub.f32 %v2085, %v2749
      %v2816 = vsub.f32 %v2174, %v2749
      %v2817 = vsub.f32 %v2087, %v2752
      %v2818 = vsub.f32 %v2176, %v2752
      %v2819 = vsub.f32 %v2090, %v2755
      %v2820 = vsub.f32 %v2179, %v2755
      %v2821 = vsub.f32 %v2092, %v2758
      %v2822 = vsub.f32 %v2181, %v2758
      %v2823 = vmul.f32 %v2759, 1.442695
      %v2824 = vpow.pop %v2823
      %v2825 = vmul.f32 %v2760, 1.442695
      %v2826 = vpow.pop %v2825
      %v2827 = vmul.f32 %v2761, 1.442695
      %v2828 = vpow.pop %v2827
      %v2829 = vmul.f32 %v2762, 1.442695
      %v2830 = vpow.pop %v2829
      %v2831 = vmul.f32 %v2763, 1.442695
      %v2832 = vpow.pop %v2831
      %v2833 = vmul.f32 %v2764, 1.442695
      %v2834 = vpow.pop %v2833
      %v2835 = vmul.f32 %v2765, 1.442695
      %v2836 = vpow.pop %v2835
      %v2837 = vmul.f32 %v2766, 1.442695
      %v2838 = vpow.pop %v2837
      %v2839 = vmul.f32 %v2767, 1.442695
      %v2840 = vpow.pop %v2839
      %v2841 = vmul.f32 %v2768, 1.442695
      %v2842 = vpow.pop %v2841
      %v2843 = vmul.f32 %v2769, 1.442695
      %v2844 = vpow.pop %v2843
      %v2845 = vmul.f32 %v2770, 1.442695
      %v2846 = vpow.pop %v2845
      %v2847 = vmul.f32 %v2771, 1.442695
      %v2848 = vpow.pop %v2847
      %v2849 = vmul.f32 %v2772, 1.442695
      %v2850 = vpow.pop %v2849
      %v2851 = vmul.f32 %v2773, 1.442695
      %v2852 = vpow.pop %v2851
      %v2853 = vmul.f32 %v2774, 1.442695
      %v2854 = vpow.pop %v2853
      %v2855 = vmul.f32 %v2775, 1.442695
      %v2856 = vpow.pop %v2855
      %v2857 = vmul.f32 %v2776, 1.442695
      %v2858 = vpow.pop %v2857
      %v2859 = vmul.f32 %v2777, 1.442695
      %v2860 = vpow.pop %v2859
      %v2861 = vmul.f32 %v2778, 1.442695
      %v2862 = vpow.pop %v2861
      %v2863 = vmul.f32 %v2779, 1.442695
      %v2864 = vpow.pop %v2863
      %v2865 = vmul.f32 %v2780, 1.442695
      %v2866 = vpow.pop %v2865
      %v2867 = vmul.f32 %v2781, 1.442695
      %v2868 = vpow.pop %v2867
      %v2869 = vmul.f32 %v2782, 1.442695
      %v2870 = vpow.pop %v2869
      %v2871 = vmul.f32 %v2783, 1.442695
      %v2872 = vpow.pop %v2871
      %v2873 = vmul.f32 %v2784, 1.442695
      %v2874 = vpow.pop %v2873
      %v2875 = vmul.f32 %v2785, 1.442695
      %v2876 = vpow.pop %v2875
      %v2877 = vmul.f32 %v2786, 1.442695
      %v2878 = vpow.pop %v2877
      %v2879 = vmul.f32 %v2787, 1.442695
      %v2880 = vpow.pop %v2879
      %v2881 = vmul.f32 %v2788, 1.442695
      %v2882 = vpow.pop %v2881
      %v2883 = vmul.f32 %v2789, 1.442695
      %v2884 = vpow.pop %v2883
      %v2885 = vmul.f32 %v2790, 1.442695
      %v2886 = vpow.pop %v2885
      %v2887 = vmul.f32 %v2791, 1.442695
      %v2888 = vpow.pop %v2887
      %v2889 = vmul.f32 %v2792, 1.442695
      %v2890 = vpow.pop %v2889
      %v2891 = vmul.f32 %v2793, 1.442695
      %v2892 = vpow.pop %v2891
      %v2893 = vmul.f32 %v2794, 1.442695
      %v2894 = vpow.pop %v2893
      %v2895 = vmul.f32 %v2795, 1.442695
      %v2896 = vpow.pop %v2895
      %v2897 = vmul.f32 %v2796, 1.442695
      %v2898 = vpow.pop %v2897
      %v2899 = vmul.f32 %v2797, 1.442695
      %v2900 = vpow.pop %v2899
      %v2901 = vmul.f32 %v2798, 1.442695
      %v2902 = vpow.pop %v2901
      %v2903 = vmul.f32 %v2799, 1.442695
      %v2904 = vpow.pop %v2903
      %v2905 = vmul.f32 %v2800, 1.442695
      %v2906 = vpow.pop %v2905
      %v2907 = vmul.f32 %v2801, 1.442695
      %v2908 = vpow.pop %v2907
      %v2909 = vmul.f32 %v2802, 1.442695
      %v2910 = vpow.pop %v2909
      %v2911 = vmul.f32 %v2803, 1.442695
      %v2912 = vpow.pop %v2911
      %v2913 = vmul.f32 %v2804, 1.442695
      %v2914 = vpow.pop %v2913
      %v2915 = vmul.f32 %v2805, 1.442695
      %v2916 = vpow.pop %v2915
      %v2917 = vmul.f32 %v2806, 1.442695
      %v2918 = vpow.pop %v2917
      %v2919 = vmul.f32 %v2807, 1.442695
      %v2920 = vpow.pop %v2919
      %v2921 = vmul.f32 %v2808, 1.442695
      %v2922 = vpow.pop %v2921
      %v2923 = vmul.f32 %v2809, 1.442695
      %v2924 = vpow.pop %v2923
      %v2925 = vmul.f32 %v2810, 1.442695
      %v2926 = vpow.pop %v2925
      %v2927 = vmul.f32 %v2811, 1.442695
      %v2928 = vpow.pop %v2927
      %v2929 = vmul.f32 %v2812, 1.442695
      %v2930 = vpow.pop %v2929
      %v2931 = vmul.f32 %v2813, 1.442695
      %v2932 = vpow.pop %v2931
      %v2933 = vmul.f32 %v2814, 1.442695
      %v2934 = vpow.pop %v2933
      %v2935 = vmul.f32 %v2815, 1.442695
      %v2936 = vpow.pop %v2935
      %v2937 = vmul.f32 %v2816, 1.442695
      %v2938 = vpow.pop %v2937
      %v2939 = vmul.f32 %v2817, 1.442695
      %v2940 = vpow.pop %v2939
      %v2941 = vmul.f32 %v2818, 1.442695
      %v2942 = vpow.pop %v2941
      %v2943 = vmul.f32 %v2819, 1.442695
      %v2944 = vpow.pop %v2943
      %v2945 = vmul.f32 %v2820, 1.442695
      %v2946 = vpow.pop %v2945
      %v2947 = vmul.f32 %v2821, 1.442695
      %v2948 = vpow.pop %v2947
      %v2949 = vmul.f32 %v2822, 1.442695
      %v2950 = vpow.pop %v2949
      %v2951 = vadd.f32 %v2824, %v2826
      %2952 = vadd.xlane.f32.xlu0 %v2951
      %v2953 = vpop.xlane.xlu0 %2952
      %v2954 = vadd.f32 %v2828, %v2830
      %2955 = vadd.xlane.f32.xlu0 %v2954
      %v2956 = vpop.xlane.xlu0 %2955
      %v2957 = vadd.f32 %v2832, %v2834
      %2958 = vadd.xlane.f32.xlu0 %v2957
      %v2959 = vpop.xlane.xlu0 %2958
      %v2960 = vadd.f32 %v2836, %v2838
      %2961 = vadd.xlane.f32.xlu0 %v2960
      %v2962 = vpop.xlane.xlu0 %2961
      %v2963 = vadd.f32 %v2840, %v2842
      %2964 = vadd.xlane.f32.xlu0 %v2963
      %v2965 = vpop.xlane.xlu0 %2964
      %v2966 = vadd.f32 %v2844, %v2846
      %2967 = vadd.xlane.f32.xlu0 %v2966
      %v2968 = vpop.xlane.xlu0 %2967
      %v2969 = vadd.f32 %v2848, %v2850
      %2970 = vadd.xlane.f32.xlu0 %v2969
      %v2971 = vpop.xlane.xlu0 %2970
      %v2972 = vadd.f32 %v2852, %v2854
      %2973 = vadd.xlane.f32.xlu0 %v2972
      %v2974 = vpop.xlane.xlu0 %2973
      %v2975 = vadd.f32 %v2856, %v2858
      %2976 = vadd.xlane.f32.xlu0 %v2975
      %v2977 = vpop.xlane.xlu0 %2976
      %v2978 = vadd.f32 %v2860, %v2862
      %2979 = vadd.xlane.f32.xlu0 %v2978
      %v2980 = vpop.xlane.xlu0 %2979
      %v2981 = vadd.f32 %v2864, %v2866
      %2982 = vadd.xlane.f32.xlu0 %v2981
      %v2983 = vpop.xlane.xlu0 %2982
      %v2984 = vadd.f32 %v2868, %v2870
      %2985 = vadd.xlane.f32.xlu0 %v2984
      %v2986 = vpop.xlane.xlu0 %2985
      %v2987 = vadd.f32 %v2872, %v2874
      %2988 = vadd.xlane.f32.xlu0 %v2987
      %v2989 = vpop.xlane.xlu0 %2988
      %v2990 = vadd.f32 %v2876, %v2878
      %2991 = vadd.xlane.f32.xlu0 %v2990
      %v2992 = vpop.xlane.xlu0 %2991
      %v2993 = vadd.f32 %v2880, %v2882
      %2994 = vadd.xlane.f32.xlu0 %v2993
      %v2995 = vpop.xlane.xlu0 %2994
      %v2996 = vadd.f32 %v2884, %v2886
      %2997 = vadd.xlane.f32.xlu0 %v2996
      %v2998 = vpop.xlane.xlu0 %2997
      %v2999 = vadd.f32 %v2888, %v2890
      %3000 = vadd.xlane.f32.xlu0 %v2999
      %v3001 = vpop.xlane.xlu0 %3000
      %v3002 = vadd.f32 %v2892, %v2894
      %3003 = vadd.xlane.f32.xlu0 %v3002
      %v3004 = vpop.xlane.xlu0 %3003
      %v3005 = vadd.f32 %v2896, %v2898
      %3006 = vadd.xlane.f32.xlu0 %v3005
      %v3007 = vpop.xlane.xlu0 %3006
      %v3008 = vadd.f32 %v2900, %v2902
      %3009 = vadd.xlane.f32.xlu0 %v3008
      %v3010 = vpop.xlane.xlu0 %3009
      %v3011 = vadd.f32 %v2904, %v2906
      %3012 = vadd.xlane.f32.xlu0 %v3011
      %v3013 = vpop.xlane.xlu0 %3012
      %v3014 = vadd.f32 %v2908, %v2910
      %3015 = vadd.xlane.f32.xlu0 %v3014
      %v3016 = vpop.xlane.xlu0 %3015
      %v3017 = vadd.f32 %v2912, %v2914
      %3018 = vadd.xlane.f32.xlu0 %v3017
      %v3019 = vpop.xlane.xlu0 %3018
      %v3020 = vadd.f32 %v2916, %v2918
      %3021 = vadd.xlane.f32.xlu0 %v3020
      %v3022 = vpop.xlane.xlu0 %3021
      %v3023 = vadd.f32 %v2920, %v2922
      %3024 = vadd.xlane.f32.xlu0 %v3023
      %v3025 = vpop.xlane.xlu0 %3024
      %v3026 = vadd.f32 %v2924, %v2926
      %3027 = vadd.xlane.f32.xlu0 %v3026
      %v3028 = vpop.xlane.xlu0 %3027
      %v3029 = vadd.f32 %v2928, %v2930
      %3030 = vadd.xlane.f32.xlu0 %v3029
      %v3031 = vpop.xlane.xlu0 %3030
      %v3032 = vadd.f32 %v2932, %v2934
      %3033 = vadd.xlane.f32.xlu0 %v3032
      %v3034 = vpop.xlane.xlu0 %3033
      %v3035 = vadd.f32 %v2936, %v2938
      %3036 = vadd.xlane.f32.xlu0 %v3035
      %v3037 = vpop.xlane.xlu0 %3036
      %v3038 = vadd.f32 %v2940, %v2942
      %3039 = vadd.xlane.f32.xlu0 %v3038
      %v3040 = vpop.xlane.xlu0 %3039
      %v3041 = vadd.f32 %v2944, %v2946
      %3042 = vadd.xlane.f32.xlu0 %v3041
      %v3043 = vpop.xlane.xlu0 %3042
      %v3044 = vadd.f32 %v2948, %v2950
      %3045 = vadd.xlane.f32.xlu0 %v3044
      %v3046 = vpop.xlane.xlu0 %3045
      %v3047 = vrcp.pop %v2953
      %v3048 = vrcp.pop %v2956
      %v3049 = vrcp.pop %v2959
      %v3050 = vrcp.pop %v2962
      %v3051 = vrcp.pop %v2965
      %v3052 = vrcp.pop %v2968
      %v3053 = vrcp.pop %v2971
      %v3054 = vrcp.pop %v2974
      %v3055 = vrcp.pop %v2977
      %v3056 = vrcp.pop %v2980
      %v3057 = vrcp.pop %v2983
      %v3058 = vrcp.pop %v2986
      %v3059 = vrcp.pop %v2989
      %v3060 = vrcp.pop %v2992
      %v3061 = vrcp.pop %v2995
      %v3062 = vrcp.pop %v2998
      %v3063 = vrcp.pop %v3001
      %v3064 = vrcp.pop %v3004
      %v3065 = vrcp.pop %v3007
      %v3066 = vrcp.pop %v3010
      %v3067 = vrcp.pop %v3013
      %v3068 = vrcp.pop %v3016
      %v3069 = vrcp.pop %v3019
      %v3070 = vrcp.pop %v3022
      %v3071 = vrcp.pop %v3025
      %v3072 = vrcp.pop %v3028
      %v3073 = vrcp.pop %v3031
      %v3074 = vrcp.pop %v3034
      %v3075 = vrcp.pop %v3037
      %v3076 = vrcp.pop %v3040
      %v3077 = vrcp.pop %v3043
      %v3078 = vrcp.pop %v3046
      %v3079 = vmul.f32 %v2824, %v3047
      %v3080 = vmul.f32 %v2826, %v3047
      %v3081 = vmul.f32 %v2828, %v3048
      %v3082 = vmul.f32 %v2830, %v3048
      %v3083 = vmul.f32 %v2832, %v3049
      %v3084 = vmul.f32 %v2834, %v3049
      %v3085 = vmul.f32 %v2836, %v3050
      %v3086 = vmul.f32 %v2838, %v3050
      %v3087 = vmul.f32 %v2840, %v3051
      %v3088 = vmul.f32 %v2842, %v3051
      %v3089 = vmul.f32 %v2844, %v3052
      %v3090 = vmul.f32 %v2846, %v3052
      %v3091 = vmul.f32 %v2848, %v3053
      %v3092 = vmul.f32 %v2850, %v3053
      %v3093 = vmul.f32 %v2852, %v3054
      %v3094 = vmul.f32 %v2854, %v3054
      %v3095 = vmul.f32 %v2856, %v3055
      %v3096 = vmul.f32 %v2858, %v3055
      %v3097 = vmul.f32 %v2860, %v3056
      %v3098 = vmul.f32 %v2862, %v3056
      %v3099 = vmul.f32 %v2864, %v3057
      %v3100 = vmul.f32 %v2866, %v3057
      %v3101 = vmul.f32 %v2868, %v3058
      %v3102 = vmul.f32 %v2870, %v3058
      %v3103 = vmul.f32 %v2872, %v3059
      %v3104 = vmul.f32 %v2874, %v3059
      %v3105 = vmul.f32 %v2876, %v3060
      %v3106 = vmul.f32 %v2878, %v3060
      %v3107 = vmul.f32 %v2880, %v3061
      %v3108 = vmul.f32 %v2882, %v3061
      %v3109 = vmul.f32 %v2884, %v3062
      %v3110 = vmul.f32 %v2886, %v3062
      %v3111 = vmul.f32 %v2888, %v3063
      %v3112 = vmul.f32 %v2890, %v3063
      %v3113 = vmul.f32 %v2892, %v3064
      %v3114 = vmul.f32 %v2894, %v3064
      %v3115 = vmul.f32 %v2896, %v3065
      %v3116 = vmul.f32 %v2898, %v3065
      %v3117 = vmul.f32 %v2900, %v3066
      %v3118 = vmul.f32 %v2902, %v3066
      %v3119 = vmul.f32 %v2904, %v3067
      %v3120 = vmul.f32 %v2906, %v3067
      %v3121 = vmul.f32 %v2908, %v3068
      %v3122 = vmul.f32 %v2910, %v3068
      %v3123 = vmul.f32 %v2912, %v3069
      %v3124 = vmul.f32 %v2914, %v3069
      %v3125 = vmul.f32 %v2916, %v3070
      %v3126 = vmul.f32 %v2918, %v3070
      %v3127 = vmul.f32 %v2920, %v3071
      %v3128 = vmul.f32 %v2922, %v3071
      %v3129 = vmul.f32 %v2924, %v3072
      %v3130 = vmul.f32 %v2926, %v3072
      %v3131 = vmul.f32 %v2928, %v3073
      %v3132 = vmul.f32 %v2930, %v3073
      %v3133 = vmul.f32 %v2932, %v3074
      %v3134 = vmul.f32 %v2934, %v3074
      %v3135 = vmul.f32 %v2936, %v3075
      %v3136 = vmul.f32 %v2938, %v3075
      %v3137 = vmul.f32 %v2940, %v3076
      %v3138 = vmul.f32 %v2942, %v3076
      %v3139 = vmul.f32 %v2944, %v3077
      %v3140 = vmul.f32 %v2946, %v3077
      %v3141 = vmul.f32 %v2948, %v3078
      %v3142 = vmul.f32 %v2950, %v3078
      %v3143 = vpack.c.bf16 %v1594, %v1592
      %v3144 = vpack.c.bf16 %v1623, %v1621
      %v3145 = vpack.c.bf16 %v1599, %v1597
      %v3146 = vpack.c.bf16 %v1628, %v1626
      %v3147 = vpack.c.bf16 %v2601, %v2599
      %v3148 = vpack.c.bf16 %v2602, %v2600
      %v3149 = vpack.c.bf16 %v2605, %v2603
      %v3150 = vpack.c.bf16 %v2606, %v2604
      %v3151 = vpack.c.bf16 %v2609, %v2607
      %v3152 = vpack.c.bf16 %v2610, %v2608
      %v3153 = vpack.c.bf16 %v2613, %v2611
      %v3154 = vpack.c.bf16 %v2614, %v2612
      %v3155 = vpack.c.bf16 %v2617, %v2615
      %v3156 = vpack.c.bf16 %v2618, %v2616
      %v3157 = vpack.c.bf16 %v2621, %v2619
      %v3158 = vpack.c.bf16 %v2622, %v2620
      %v3159 = vpack.c.bf16 %v2625, %v2623
      %v3160 = vpack.c.bf16 %v2626, %v2624
      %v3161 = vpack.c.bf16 %v2629, %v2627
      %v3162 = vpack.c.bf16 %v2630, %v2628
      %v3163 = vpack.c.bf16 %v2633, %v2631
      %v3164 = vpack.c.bf16 %v2634, %v2632
      %v3165 = vpack.c.bf16 %v2637, %v2635
      %v3166 = vpack.c.bf16 %v2638, %v2636
      %v3167 = vpack.c.bf16 %v2641, %v2639
      %v3168 = vpack.c.bf16 %v2642, %v2640
      %v3169 = vpack.c.bf16 %v2645, %v2643
      %v3170 = vpack.c.bf16 %v2646, %v2644
      %v3171 = vpack.c.bf16 %v2649, %v2647
      %v3172 = vpack.c.bf16 %v2650, %v2648
      %v3173 = vpack.c.bf16 %v2653, %v2651
      %v3174 = vpack.c.bf16 %v2654, %v2652
      %v3175 = vpack.c.bf16 %v2657, %v2655
      %v3176 = vpack.c.bf16 %v2658, %v2656
      %v3177 = vpack.c.bf16 %v2661, %v2659
      %v3178 = vpack.c.bf16 %v2662, %v2660
      %3179 = vmatpush.bf16.xpose.msra.mxu0 %v3161
      %3180 = vmatpush.bf16.xpose.msra.mxu0 %v3159
      %3181 = vmatpush.bf16.xpose.msra.mxu0 %v3157
      %3182 = vmatpush.bf16.xpose.msra.mxu0 %v3155
      %3183 = vmatpush.bf16.xpose.msra.mxu0 %v3153
      %3184 = vmatpush.bf16.xpose.msra.mxu0 %v3151
      %3185 = vmatpush.bf16.xpose.msra.mxu0 %v3149
      %3186 = vmatpush.bf16.xpose.msra.mxu0 %v3147
      %3187 = vmatmul.bf16.gmra.mxu0 %v3143
      %v3188 = vpop.f32.mrf.mxu0
      %v3189 = vadd.f32 0.0, %v3188
      %v3190 = vpop.f32.mrf.mxu0
      %v3191 = vadd.f32 0.0, %v3190
      %3192 = vmatmul.bf16.gmra.mxu0 %v3145
      %v3193 = vpop.f32.mrf.mxu0
      %v3194 = vadd.f32 0.0, %v3193
      %v3195 = vpop.f32.mrf.mxu0
      %v3196 = vadd.f32 0.0, %v3195
      %3197 = vdwg.mxu0
      %3198 = vmatpush.bf16.xpose.msra.mxu0 %v3162
      %3199 = vmatpush.bf16.xpose.msra.mxu0 %v3160
      %3200 = vmatpush.bf16.xpose.msra.mxu0 %v3158
      %3201 = vmatpush.bf16.xpose.msra.mxu0 %v3156
      %3202 = vmatpush.bf16.xpose.msra.mxu0 %v3154
      %3203 = vmatpush.bf16.xpose.msra.mxu0 %v3152
      %3204 = vmatpush.bf16.xpose.msra.mxu0 %v3150
      %3205 = vmatpush.bf16.xpose.msra.mxu0 %v3148
      %3206 = vmatmul.bf16.gmra.mxu0 %v3144
      %v3207 = vpop.f32.mrf.mxu0
      %v3208 = vadd.f32 %v3189, %v3207
      %v3209 = vpop.f32.mrf.mxu0
      %v3210 = vadd.f32 %v3191, %v3209
      %3211 = vmatmul.bf16.gmra.mxu0 %v3146
      %v3212 = vpop.f32.mrf.mxu0
      %v3213 = vadd.f32 %v3194, %v3212
      %v3214 = vpop.f32.mrf.mxu0
      %v3215 = vadd.f32 %v3196, %v3214
      %3216 = vdwg.mxu0
      %3217 = vmatpush.bf16.xpose.msra.mxu0 %v3177
      %3218 = vmatpush.bf16.xpose.msra.mxu0 %v3175
      %3219 = vmatpush.bf16.xpose.msra.mxu0 %v3173
      %3220 = vmatpush.bf16.xpose.msra.mxu0 %v3171
      %3221 = vmatpush.bf16.xpose.msra.mxu0 %v3169
      %3222 = vmatpush.bf16.xpose.msra.mxu0 %v3167
      %3223 = vmatpush.bf16.xpose.msra.mxu0 %v3165
      %3224 = vmatpush.bf16.xpose.msra.mxu0 %v3163
      %3225 = vmatmul.bf16.gmra.mxu0 %v3143
      %v3226 = vpop.f32.mrf.mxu0
      %v3227 = vadd.f32 0.0, %v3226
      %v3228 = vpop.f32.mrf.mxu0
      %v3229 = vadd.f32 0.0, %v3228
      %3230 = vmatmul.bf16.gmra.mxu0 %v3145
      %v3231 = vpop.f32.mrf.mxu0
      %v3232 = vadd.f32 0.0, %v3231
      %v3233 = vpop.f32.mrf.mxu0
      %v3234 = vadd.f32 0.0, %v3233
      %3235 = vdwg.mxu0
      %3236 = vmatpush.bf16.xpose.msra.mxu0 %v3178
      %3237 = vmatpush.bf16.xpose.msra.mxu0 %v3176
      %3238 = vmatpush.bf16.xpose.msra.mxu0 %v3174
      %3239 = vmatpush.bf16.xpose.msra.mxu0 %v3172
      %3240 = vmatpush.bf16.xpose.msra.mxu0 %v3170
      %3241 = vmatpush.bf16.xpose.msra.mxu0 %v3168
      %3242 = vmatpush.bf16.xpose.msra.mxu0 %v3166
      %3243 = vmatpush.bf16.xpose.msra.mxu0 %v3164
      %3244 = vmatmul.bf16.gmra.mxu0 %v3144
      %v3245 = vpop.f32.mrf.mxu0
      %v3246 = vadd.f32 %v3227, %v3245
      %v3247 = vpop.f32.mrf.mxu0
      %v3248 = vadd.f32 %v3229, %v3247
      %3249 = vmatmul.bf16.gmra.mxu0 %v3146
      %v3250 = vpop.f32.mrf.mxu0
      %v3251 = vadd.f32 %v3232, %v3250
      %v3252 = vpop.f32.mrf.mxu0
      %v3253 = vadd.f32 %v3234, %v3252
      %3254 = vdwg.mxu0
      %v3255 = vpack.c.bf16 %v1717, %v1715
      %v3256 = vpack.c.bf16 %v1741, %v1739
      %v3257 = vpack.c.bf16 %v1722, %v1720
      %v3258 = vpack.c.bf16 %v1746, %v1744
      %v3259 = vpack.c.bf16 %v3081, %v3079
      %v3260 = vpack.c.bf16 %v3082, %v3080
      %v3261 = vpack.c.bf16 %v3085, %v3083
      %v3262 = vpack.c.bf16 %v3086, %v3084
      %v3263 = vpack.c.bf16 %v3089, %v3087
      %v3264 = vpack.c.bf16 %v3090, %v3088
      %v3265 = vpack.c.bf16 %v3093, %v3091
      %v3266 = vpack.c.bf16 %v3094, %v3092
      %v3267 = vpack.c.bf16 %v3097, %v3095
      %v3268 = vpack.c.bf16 %v3098, %v3096
      %v3269 = vpack.c.bf16 %v3101, %v3099
      %v3270 = vpack.c.bf16 %v3102, %v3100
      %v3271 = vpack.c.bf16 %v3105, %v3103
      %v3272 = vpack.c.bf16 %v3106, %v3104
      %v3273 = vpack.c.bf16 %v3109, %v3107
      %v3274 = vpack.c.bf16 %v3110, %v3108
      %v3275 = vpack.c.bf16 %v3113, %v3111
      %v3276 = vpack.c.bf16 %v3114, %v3112
      %v3277 = vpack.c.bf16 %v3117, %v3115
      %v3278 = vpack.c.bf16 %v3118, %v3116
      %v3279 = vpack.c.bf16 %v3121, %v3119
      %v3280 = vpack.c.bf16 %v3122, %v3120
      %v3281 = vpack.c.bf16 %v3125, %v3123
      %v3282 = vpack.c.bf16 %v3126, %v3124
      %v3283 = vpack.c.bf16 %v3129, %v3127
      %v3284 = vpack.c.bf16 %v3130, %v3128
      %v3285 = vpack.c.bf16 %v3133, %v3131
      %v3286 = vpack.c.bf16 %v3134, %v3132
      %v3287 = vpack.c.bf16 %v3137, %v3135
      %v3288 = vpack.c.bf16 %v3138, %v3136
      %v3289 = vpack.c.bf16 %v3141, %v3139
      %v3290 = vpack.c.bf16 %v3142, %v3140
      %3291 = vmatpush.bf16.xpose.msra.mxu0 %v3273
      %3292 = vmatpush.bf16.xpose.msra.mxu0 %v3271
      %3293 = vmatpush.bf16.xpose.msra.mxu0 %v3269
      %3294 = vmatpush.bf16.xpose.msra.mxu0 %v3267
      %3295 = vmatpush.bf16.xpose.msra.mxu0 %v3265
      %3296 = vmatpush.bf16.xpose.msra.mxu0 %v3263
      %3297 = vmatpush.bf16.xpose.msra.mxu0 %v3261
      %3298 = vmatpush.bf16.xpose.msra.mxu0 %v3259
      %3299 = vmatmul.bf16.gmra.mxu0 %v3255
      %v3300 = vpop.f32.mrf.mxu0
      %v3301 = vadd.f32 0.0, %v3300
      %v3302 = vpop.f32.mrf.mxu0
      %v3303 = vadd.f32 0.0, %v3302
      %3304 = vmatmul.bf16.gmra.mxu0 %v3257
      %v3305 = vpop.f32.mrf.mxu0
      %v3306 = vadd.f32 0.0, %v3305
      %v3307 = vpop.f32.mrf.mxu0
      %v3308 = vadd.f32 0.0, %v3307
      %3309 = vdwg.mxu0
      %3310 = vmatpush.bf16.xpose.msra.mxu0 %v3274
      %3311 = vmatpush.bf16.xpose.msra.mxu0 %v3272
      %3312 = vmatpush.bf16.xpose.msra.mxu0 %v3270
      %3313 = vmatpush.bf16.xpose.msra.mxu0 %v3268
      %3314 = vmatpush.bf16.xpose.msra.mxu0 %v3266
      %3315 = vmatpush.bf16.xpose.msra.mxu0 %v3264
      %3316 = vmatpush.bf16.xpose.msra.mxu0 %v3262
      %3317 = vmatpush.bf16.xpose.msra.mxu0 %v3260
      %3318 = vmatmul.bf16.gmra.mxu0 %v3256
      %v3319 = vpop.f32.mrf.mxu0
      %v3320 = vadd.f32 %v3301, %v3319
      %v3321 = vpop.f32.mrf.mxu0
      %v3322 = vadd.f32 %v3303, %v3321
      %3323 = vmatmul.bf16.gmra.mxu0 %v3258
      %v3324 = vpop.f32.mrf.mxu0
      %v3325 = vadd.f32 %v3306, %v3324
      %v3326 = vpop.f32.mrf.mxu0
      %v3327 = vadd.f32 %v3308, %v3326
      %3328 = vdwg.mxu0
      %3329 = vmatpush.bf16.xpose.msra.mxu0 %v3289
      %3330 = vmatpush.bf16.xpose.msra.mxu0 %v3287
      %3331 = vmatpush.bf16.xpose.msra.mxu0 %v3285
      %3332 = vmatpush.bf16.xpose.msra.mxu0 %v3283
      %3333 = vmatpush.bf16.xpose.msra.mxu0 %v3281
      %3334 = vmatpush.bf16.xpose.msra.mxu0 %v3279
      %3335 = vmatpush.bf16.xpose.msra.mxu0 %v3277
      %3336 = vmatpush.bf16.xpose.msra.mxu0 %v3275
      %3337 = vmatmul.bf16.gmra.mxu0 %v3255
      %v3338 = vpop.f32.mrf.mxu0
      %v3339 = vadd.f32 0.0, %v3338
      %v3340 = vpop.f32.mrf.mxu0
      %v3341 = vadd.f32 0.0, %v3340
      %3342 = vmatmul.bf16.gmra.mxu0 %v3257
      %v3343 = vpop.f32.mrf.mxu0
      %v3344 = vadd.f32 0.0, %v3343
      %v3345 = vpop.f32.mrf.mxu0
      %v3346 = vadd.f32 0.0, %v3345
      %3347 = vdwg.mxu0
      %3348 = vmatpush.bf16.xpose.msra.mxu0 %v3290
      %3349 = vmatpush.bf16.xpose.msra.mxu0 %v3288
      %3350 = vmatpush.bf16.xpose.msra.mxu0 %v3286
      %3351 = vmatpush.bf16.xpose.msra.mxu0 %v3284
      %3352 = vmatpush.bf16.xpose.msra.mxu0 %v3282
      %3353 = vmatpush.bf16.xpose.msra.mxu0 %v3280
      %3354 = vmatpush.bf16.xpose.msra.mxu0 %v3278
      %3355 = vmatpush.bf16.xpose.msra.mxu0 %v3276
      %3356 = vmatmul.bf16.gmra.mxu0 %v3256
      %v3357 = vpop.f32.mrf.mxu0
      %v3358 = vadd.f32 %v3339, %v3357
      %v3359 = vpop.f32.mrf.mxu0
      %v3360 = vadd.f32 %v3341, %v3359
      %3361 = vmatmul.bf16.gmra.mxu0 %v3258
      %v3362 = vpop.f32.mrf.mxu0
      %v3363 = vadd.f32 %v3344, %v3362
      %v3364 = vpop.f32.mrf.mxu0
      %v3365 = vadd.f32 %v3346, %v3364
      %3366 = vdwg.mxu0
      %v3367 = vld [vmem:[%s9] sm:$0xf]
      %v3368 = vld [vmem:[%s9 + $0x4] sm:$0xf]
      %v3369 = vld [vmem:[%s9 + $0x8] sm:$0xf]
      %v3370 = vld [vmem:[%s9 + $0xc] sm:$0xf]
      %v3371 = vpack.c.bf16 %v3210, %v3208
      %v3372 = vpack.c.bf16 %v3248, %v3246
      %v3373 = vpack.c.bf16 %v3215, %v3213
      %v3374 = vpack.c.bf16 %v3253, %v3251
      %v3375 = vld [vmem:[%s10] sm:$0xf]
      %v3376 = vld [vmem:[%s10 + $0x4] sm:$0xf]
      %v3377 = vld [vmem:[%s10 + $0x8] sm:$0xf]
      %v3378 = vld [vmem:[%s10 + $0xc] sm:$0xf]
      %v3379 = vpack.c.bf16 %v3322, %v3320
      %v3380 = vpack.c.bf16 %v3360, %v3358
      %v3381 = vpack.c.bf16 %v3327, %v3325
      %v3382 = vpack.c.bf16 %v3365, %v3363
      %v3387 = vunpack.c.l.b16 %v3375
      %v3388 = vunpack.c.l.b16 %v3376
      %v3389 = vunpack.c.l.b16 %v3377
      %v3390 = vunpack.c.l.b16 %v3378
      %v3391 = vpack.c.b16 %v3388, %v3387
      %v3392 = vpack.c.b16 %v3390, %v3389
      %v3394 = vsel %vm1559, %v3391, 0
      %v3397 = vsel %vm1559, %v3392, 0
      %3399 = vmatpush.bf16.msra.mxu0 0
      %3400 = vmatpush.bf16.msra.mxu0 0
      %3401 = vmatpush.bf16.msra.mxu0 0
      %3402 = vmatpush.bf16.msra.mxu0 0
      %3403 = vmatpush.bf16.msra.mxu0 0
      %3404 = vmatpush.bf16.msra.mxu0 0
      %3405 = vmatpush.bf16.msra.mxu0 %v3381
      %3406 = vmatpush.bf16.msra.mxu0 %v3379
      %3407 = vmatmul.bf16.gmra.mxu0 %v3394
      %v3408 = vpop.f32.mrf.mxu0
      %v3409 = vadd.f32 0.0, %v3408
      %v3410 = vpop.f32.mrf.mxu0
      %v3411 = vadd.f32 0.0, %v3410
      %3412 = vmatmul.bf16.gmra.mxu0 %v3397
      %v3413 = vpop.f32.mrf.mxu0
      %v3414 = vadd.f32 0.0, %v3413
      %v3415 = vpop.f32.mrf.mxu0
      %v3416 = vadd.f32 0.0, %v3415
      %3417 = vdwg.mxu0
      %3418 = vmatpush.bf16.msra.mxu0 0
      %3419 = vmatpush.bf16.msra.mxu0 0
      %3420 = vmatpush.bf16.msra.mxu0 0
      %3421 = vmatpush.bf16.msra.mxu0 0
      %3422 = vmatpush.bf16.msra.mxu0 0
      %3423 = vmatpush.bf16.msra.mxu0 0
      %3424 = vmatpush.bf16.msra.mxu0 %v3382
      %3425 = vmatpush.bf16.msra.mxu0 %v3380
      %3426 = vmatmul.bf16.gmra.mxu0 %v3394
      %v3427 = vpop.f32.mrf.mxu0
      %v3428 = vadd.f32 0.0, %v3427
      %v3429 = vpop.f32.mrf.mxu0
      %v3430 = vadd.f32 0.0, %v3429
      %3431 = vmatmul.bf16.gmra.mxu0 %v3397
      %v3432 = vpop.f32.mrf.mxu0
      %v3433 = vadd.f32 0.0, %v3432
      %v3434 = vpop.f32.mrf.mxu0
      %v3435 = vadd.f32 0.0, %v3434
      %3436 = vdwg.mxu0
      %v3441 = vunpack.c.l.b16 %v3367
      %v3442 = vunpack.c.l.b16 %v3368
      %v3443 = vunpack.c.l.b16 %v3369
      %v3444 = vunpack.c.l.b16 %v3370
      %v3445 = vpack.c.b16 %v3442, %v3441
      %v3446 = vpack.c.b16 %v3444, %v3443
      %v3448 = vsel %vm1559, %v3445, 0
      %v3451 = vsel %vm1559, %v3446, 0
      %3453 = vmatpush.bf16.msra.mxu0 0
      %3454 = vmatpush.bf16.msra.mxu0 0
      %3455 = vmatpush.bf16.msra.mxu0 0
      %3456 = vmatpush.bf16.msra.mxu0 0
      %3457 = vmatpush.bf16.msra.mxu0 0
      %3458 = vmatpush.bf16.msra.mxu0 0
      %3459 = vmatpush.bf16.msra.mxu0 %v3373
      %3460 = vmatpush.bf16.msra.mxu0 %v3371
      %3461 = vmatmul.bf16.gmra.mxu0 %v3448
      %v3462 = vpop.f32.mrf.mxu0
      %v3463 = vadd.f32 %v3409, %v3462
      %v3464 = vpop.f32.mrf.mxu0
      %v3465 = vadd.f32 %v3411, %v3464
      %3466 = vmatmul.bf16.gmra.mxu0 %v3451
      %v3467 = vpop.f32.mrf.mxu0
      %v3468 = vadd.f32 %v3414, %v3467
      %v3469 = vpop.f32.mrf.mxu0
      %v3470 = vadd.f32 %v3416, %v3469
      %3471 = vdwg.mxu0
      %3472 = vmatpush.bf16.msra.mxu0 0
      %3473 = vmatpush.bf16.msra.mxu0 0
      %3474 = vmatpush.bf16.msra.mxu0 0
      %3475 = vmatpush.bf16.msra.mxu0 0
      %3476 = vmatpush.bf16.msra.mxu0 0
      %3477 = vmatpush.bf16.msra.mxu0 0
      %3478 = vmatpush.bf16.msra.mxu0 %v3374
      %3479 = vmatpush.bf16.msra.mxu0 %v3372
      %3480 = vmatmul.bf16.gmra.mxu0 %v3448
      %v3481 = vpop.f32.mrf.mxu0
      %v3482 = vadd.f32 %v3428, %v3481
      %v3483 = vpop.f32.mrf.mxu0
      %v3484 = vadd.f32 %v3430, %v3483
      %3485 = vmatmul.bf16.gmra.mxu0 %v3451
      %v3486 = vpop.f32.mrf.mxu0
      %v3487 = vadd.f32 %v3433, %v3486
      %v3488 = vpop.f32.mrf.mxu0
      %v3489 = vadd.f32 %v3435, %v3488
      %3490 = vdwg.mxu0
      %v3491 = vld [vmem:[%s11] sm:$0xff]
      %v3492 = vld [vmem:[%s11 + $0x8] sm:$0xff]
      %v3493 = vld [vmem:[%s11 + $0x10] sm:$0xff]
      %v3494 = vld [vmem:[%s11 + $0x18] sm:$0xff]
      %3496 = vset.pattern.permute.xlu0 0
      %3497 = vperm.xlu0 %3496, %v3491
      %v3498 = vpop.permute.xlu0 %3497
      %3501 = vset.pattern.permute.xlu0 0
      %3502 = vperm.xlu0 %3501, %v3492
      %v3503 = vpop.permute.xlu0 %3502
      %3506 = vset.pattern.permute.xlu0 0
      %3507 = vperm.xlu0 %3506, %v3493
      %v3508 = vpop.permute.xlu0 %3507
      %3511 = vset.pattern.permute.xlu0 0
      %3512 = vperm.xlu0 %3511, %v3494
      %v3513 = vpop.permute.xlu0 %3512
      %v3515 = vadd.f32 %v3463, %v3498
      %v3516 = vadd.f32 %v3482, %v3498
      %v3517 = vadd.f32 %v3465, %v3503
      %v3518 = vadd.f32 %v3484, %v3503
      %v3519 = vadd.f32 %v3468, %v3508
      %v3520 = vadd.f32 %v3487, %v3508
      %v3521 = vadd.f32 %v3470, %v3513
      %v3522 = vadd.f32 %v3489, %v3513
      %v3523 = vld [vmem:[%s12] sm:$0xf]
      %v3524 = vld [vmem:[%s12 + $0x4] sm:$0xf]
      %v3525 = vld [vmem:[%s12 + $0x8] sm:$0xf]
      %v3526 = vld [vmem:[%s12 + $0xc] sm:$0xf]
      %v3527 = vld [vmem:[%s12 + $0x10] sm:$0xf]
      %v3528 = vld [vmem:[%s12 + $0x14] sm:$0xf]
      %v3529 = vld [vmem:[%s12 + $0x18] sm:$0xf]
      %v3530 = vld [vmem:[%s12 + $0x1c] sm:$0xf]
      %v3531 = vld [vmem:[%s12 + $0x20] sm:$0xf]
      %v3532 = vld [vmem:[%s12 + $0x24] sm:$0xf]
      %v3533 = vld [vmem:[%s12 + $0x28] sm:$0xf]
      %v3534 = vld [vmem:[%s12 + $0x2c] sm:$0xf]
      %v3535 = vpack.c.bf16 %v3517, %v3515
      %v3536 = vpack.c.bf16 %v3518, %v3516
      %v3537 = vpack.c.bf16 %v3521, %v3519
      %v3538 = vpack.c.bf16 %v3522, %v3520
      %v3539 = vld [vmem:[%s13] sm:$0xf]
      %v3540 = vld [vmem:[%s13 + $0x4] sm:$0xf]
      %v3541 = vld [vmem:[%s13 + $0x8] sm:$0xf]
      %v3542 = vld [vmem:[%s13 + $0xc] sm:$0xf]
      %v3543 = vld [vmem:[%s13 + $0x10] sm:$0xf]
      %v3544 = vld [vmem:[%s13 + $0x14] sm:$0xf]
      %v3545 = vld [vmem:[%s13 + $0x18] sm:$0xf]
      %v3546 = vld [vmem:[%s13 + $0x1c] sm:$0xf]
      %v3547 = vld [vmem:[%s13 + $0x20] sm:$0xf]
      %v3548 = vld [vmem:[%s13 + $0x24] sm:$0xf]
      %v3549 = vld [vmem:[%s13 + $0x28] sm:$0xf]
      %v3550 = vld [vmem:[%s13 + $0x2c] sm:$0xf]
      %v3563 = vunpack.c.l.b16 %v3539
      %v3564 = vunpack.c.l.b16 %v3540
      %v3565 = vunpack.c.l.b16 %v3541
      %v3566 = vunpack.c.l.b16 %v3542
      %v3567 = vunpack.c.l.b16 %v3543
      %v3568 = vunpack.c.l.b16 %v3544
      %v3569 = vunpack.c.l.b16 %v3545
      %v3570 = vunpack.c.l.b16 %v3546
      %v3571 = vunpack.c.l.b16 %v3547
      %v3572 = vunpack.c.l.b16 %v3548
      %v3573 = vunpack.c.l.b16 %v3549
      %v3574 = vunpack.c.l.b16 %v3550
      %v3575 = vpack.c.b16 %v3564, %v3563
      %v3576 = vpack.c.b16 %v3566, %v3565
      %v3577 = vpack.c.b16 %v3568, %v3567
      %v3578 = vpack.c.b16 %v3570, %v3569
      %v3579 = vpack.c.b16 %v3572, %v3571
      %v3580 = vpack.c.b16 %v3574, %v3573
      %v3582 = vsel %vm1559, %v3575, 0
      %v3585 = vsel %vm1559, %v3576, 0
      %v3588 = vsel %vm1559, %v3577, 0
      %v3591 = vsel %vm1559, %v3578, 0
      %v3594 = vsel %vm1559, %v3579, 0
      %v3597 = vsel %vm1559, %v3580, 0
      %3599 = vmatpush.bf16.msra.mxu0 0
      %3600 = vmatpush.bf16.msra.mxu0 0
      %3601 = vmatpush.bf16.msra.mxu0 0
      %3602 = vmatpush.bf16.msra.mxu0 0
      %3603 = vmatpush.bf16.msra.mxu0 0
      %3604 = vmatpush.bf16.msra.mxu0 0
      %3605 = vmatpush.bf16.msra.mxu0 %v1481
      %3606 = vmatpush.bf16.msra.mxu0 %v1479
      %3607 = vmatmul.bf16.gmra.mxu0 %v3582
      %v3608 = vpop.f32.mrf.mxu0
      %v3609 = vadd.f32 0.0, %v3608
      %v3610 = vpop.f32.mrf.mxu0
      %v3611 = vadd.f32 0.0, %v3610
      %3612 = vmatmul.bf16.gmra.mxu0 %v3585
      %v3613 = vpop.f32.mrf.mxu0
      %v3614 = vadd.f32 0.0, %v3613
      %v3615 = vpop.f32.mrf.mxu0
      %v3616 = vadd.f32 0.0, %v3615
      %3617 = vmatmul.bf16.gmra.mxu0 %v3588
      %v3618 = vpop.f32.mrf.mxu0
      %v3619 = vadd.f32 0.0, %v3618
      %v3620 = vpop.f32.mrf.mxu0
      %v3621 = vadd.f32 0.0, %v3620
      %3622 = vmatmul.bf16.gmra.mxu0 %v3591
      %v3623 = vpop.f32.mrf.mxu0
      %v3624 = vadd.f32 0.0, %v3623
      %v3625 = vpop.f32.mrf.mxu0
      %v3626 = vadd.f32 0.0, %v3625
      %3627 = vmatmul.bf16.gmra.mxu0 %v3594
      %v3628 = vpop.f32.mrf.mxu0
      %v3629 = vadd.f32 0.0, %v3628
      %v3630 = vpop.f32.mrf.mxu0
      %v3631 = vadd.f32 0.0, %v3630
      %3632 = vmatmul.bf16.gmra.mxu0 %v3597
      %v3633 = vpop.f32.mrf.mxu0
      %v3634 = vadd.f32 0.0, %v3633
      %v3635 = vpop.f32.mrf.mxu0
      %v3636 = vadd.f32 0.0, %v3635
      %3637 = vdwg.mxu0
      %3638 = vmatpush.bf16.msra.mxu0 0
      %3639 = vmatpush.bf16.msra.mxu0 0
      %3640 = vmatpush.bf16.msra.mxu0 0
      %3641 = vmatpush.bf16.msra.mxu0 0
      %3642 = vmatpush.bf16.msra.mxu0 0
      %3643 = vmatpush.bf16.msra.mxu0 0
      %3644 = vmatpush.bf16.msra.mxu0 %v1482
      %3645 = vmatpush.bf16.msra.mxu0 %v1480
      %3646 = vmatmul.bf16.gmra.mxu0 %v3582
      %v3647 = vpop.f32.mrf.mxu0
      %v3648 = vadd.f32 0.0, %v3647
      %v3649 = vpop.f32.mrf.mxu0
      %v3650 = vadd.f32 0.0, %v3649
      %3651 = vmatmul.bf16.gmra.mxu0 %v3585
      %v3652 = vpop.f32.mrf.mxu0
      %v3653 = vadd.f32 0.0, %v3652
      %v3654 = vpop.f32.mrf.mxu0
      %v3655 = vadd.f32 0.0, %v3654
      %3656 = vmatmul.bf16.gmra.mxu0 %v3588
      %v3657 = vpop.f32.mrf.mxu0
      %v3658 = vadd.f32 0.0, %v3657
      %v3659 = vpop.f32.mrf.mxu0
      %v3660 = vadd.f32 0.0, %v3659
      %3661 = vmatmul.bf16.gmra.mxu0 %v3591
      %v3662 = vpop.f32.mrf.mxu0
      %v3663 = vadd.f32 0.0, %v3662
      %v3664 = vpop.f32.mrf.mxu0
      %v3665 = vadd.f32 0.0, %v3664
      %3666 = vmatmul.bf16.gmra.mxu0 %v3594
      %v3667 = vpop.f32.mrf.mxu0
      %v3668 = vadd.f32 0.0, %v3667
      %v3669 = vpop.f32.mrf.mxu0
      %v3670 = vadd.f32 0.0, %v3669
      %3671 = vmatmul.bf16.gmra.mxu0 %v3597
      %v3672 = vpop.f32.mrf.mxu0
      %v3673 = vadd.f32 0.0, %v3672
      %v3674 = vpop.f32.mrf.mxu0
      %v3675 = vadd.f32 0.0, %v3674
      %3676 = vdwg.mxu0
      %v3689 = vunpack.c.l.b16 %v3523
      %v3690 = vunpack.c.l.b16 %v3524
      %v3691 = vunpack.c.l.b16 %v3525
      %v3692 = vunpack.c.l.b16 %v3526
      %v3693 = vunpack.c.l.b16 %v3527
      %v3694 = vunpack.c.l.b16 %v3528
      %v3695 = vunpack.c.l.b16 %v3529
      %v3696 = vunpack.c.l.b16 %v3530
      %v3697 = vunpack.c.l.b16 %v3531
      %v3698 = vunpack.c.l.b16 %v3532
      %v3699 = vunpack.c.l.b16 %v3533
      %v3700 = vunpack.c.l.b16 %v3534
      %v3701 = vpack.c.b16 %v3690, %v3689
      %v3702 = vpack.c.b16 %v3692, %v3691
      %v3703 = vpack.c.b16 %v3694, %v3693
      %v3704 = vpack.c.b16 %v3696, %v3695
      %v3705 = vpack.c.b16 %v3698, %v3697
      %v3706 = vpack.c.b16 %v3700, %v3699
      %v3708 = vsel %vm1559, %v3701, 0
      %v3711 = vsel %vm1559, %v3702, 0
      %v3714 = vsel %vm1559, %v3703, 0
      %v3717 = vsel %vm1559, %v3704, 0
      %v3720 = vsel %vm1559, %v3705, 0
      %v3723 = vsel %vm1559, %v3706, 0
      %3725 = vmatpush.bf16.msra.mxu0 0
      %3726 = vmatpush.bf16.msra.mxu0 0
      %3727 = vmatpush.bf16.msra.mxu0 0
      %3728 = vmatpush.bf16.msra.mxu0 0
      %3729 = vmatpush.bf16.msra.mxu0 0
      %3730 = vmatpush.bf16.msra.mxu0 0
      %3731 = vmatpush.bf16.msra.mxu0 %v3537
      %3732 = vmatpush.bf16.msra.mxu0 %v3535
      %3733 = vmatmul.bf16.gmra.mxu0 %v3708
      %v3734 = vpop.f32.mrf.mxu0
      %v3735 = vadd.f32 %v3609, %v3734
      %v3736 = vpop.f32.mrf.mxu0
      %v3737 = vadd.f32 %v3611, %v3736
      %3738 = vmatmul.bf16.gmra.mxu0 %v3711
      %v3739 = vpop.f32.mrf.mxu0
      %v3740 = vadd.f32 %v3614, %v3739
      %v3741 = vpop.f32.mrf.mxu0
      %v3742 = vadd.f32 %v3616, %v3741
      %3743 = vmatmul.bf16.gmra.mxu0 %v3714
      %v3744 = vpop.f32.mrf.mxu0
      %v3745 = vadd.f32 %v3619, %v3744
      %v3746 = vpop.f32.mrf.mxu0
      %v3747 = vadd.f32 %v3621, %v3746
      %3748 = vmatmul.bf16.gmra.mxu0 %v3717
      %v3749 = vpop.f32.mrf.mxu0
      %v3750 = vadd.f32 %v3624, %v3749
      %v3751 = vpop.f32.mrf.mxu0
      %v3752 = vadd.f32 %v3626, %v3751
      %3753 = vmatmul.bf16.gmra.mxu0 %v3720
      %v3754 = vpop.f32.mrf.mxu0
      %v3755 = vadd.f32 %v3629, %v3754
      %v3756 = vpop.f32.mrf.mxu0
      %v3757 = vadd.f32 %v3631, %v3756
      %3758 = vmatmul.bf16.gmra.mxu0 %v3723
      %v3759 = vpop.f32.mrf.mxu0
      %v3760 = vadd.f32 %v3634, %v3759
      %v3761 = vpop.f32.mrf.mxu0
      %v3762 = vadd.f32 %v3636, %v3761
      %3763 = vdwg.mxu0
      %3764 = vmatpush.bf16.msra.mxu0 0
      %3765 = vmatpush.bf16.msra.mxu0 0
      %3766 = vmatpush.bf16.msra.mxu0 0
      %3767 = vmatpush.bf16.msra.mxu0 0
      %3768 = vmatpush.bf16.msra.mxu0 0
      %3769 = vmatpush.bf16.msra.mxu0 0
      %3770 = vmatpush.bf16.msra.mxu0 %v3538
      %3771 = vmatpush.bf16.msra.mxu0 %v3536
      %3772 = vmatmul.bf16.gmra.mxu0 %v3708
      %v3773 = vpop.f32.mrf.mxu0
      %v3774 = vadd.f32 %v3648, %v3773
      %v3775 = vpop.f32.mrf.mxu0
      %v3776 = vadd.f32 %v3650, %v3775
      %3777 = vmatmul.bf16.gmra.mxu0 %v3711
      %v3778 = vpop.f32.mrf.mxu0
      %v3779 = vadd.f32 %v3653, %v3778
      %v3780 = vpop.f32.mrf.mxu0
      %v3781 = vadd.f32 %v3655, %v3780
      %3782 = vmatmul.bf16.gmra.mxu0 %v3714
      %v3783 = vpop.f32.mrf.mxu0
      %v3784 = vadd.f32 %v3658, %v3783
      %v3785 = vpop.f32.mrf.mxu0
      %v3786 = vadd.f32 %v3660, %v3785
      %3787 = vmatmul.bf16.gmra.mxu0 %v3717
      %v3788 = vpop.f32.mrf.mxu0
      %v3789 = vadd.f32 %v3663, %v3788
      %v3790 = vpop.f32.mrf.mxu0
      %v3791 = vadd.f32 %v3665, %v3790
      %3792 = vmatmul.bf16.gmra.mxu0 %v3720
      %v3793 = vpop.f32.mrf.mxu0
      %v3794 = vadd.f32 %v3668, %v3793
      %v3795 = vpop.f32.mrf.mxu0
      %v3796 = vadd.f32 %v3670, %v3795
      %3797 = vmatmul.bf16.gmra.mxu0 %v3723
      %v3798 = vpop.f32.mrf.mxu0
      %v3799 = vadd.f32 %v3673, %v3798
      %v3800 = vpop.f32.mrf.mxu0
      %v3801 = vadd.f32 %v3675, %v3800
      %3802 = vdwg.mxu0
      %v3803 = vld [vmem:[%s14] sm:$0xff]
      %v3804 = vld [vmem:[%s14 + $0x8] sm:$0xff]
      %v3805 = vld [vmem:[%s14 + $0x10] sm:$0xff]
      %v3806 = vld [vmem:[%s14 + $0x18] sm:$0xff]
      %v3807 = vld [vmem:[%s14 + $0x20] sm:$0xff]
      %v3808 = vld [vmem:[%s14 + $0x28] sm:$0xff]
      %v3809 = vld [vmem:[%s14 + $0x30] sm:$0xff]
      %v3810 = vld [vmem:[%s14 + $0x38] sm:$0xff]
      %v3811 = vld [vmem:[%s14 + $0x40] sm:$0xff]
      %v3812 = vld [vmem:[%s14 + $0x48] sm:$0xff]
      %v3813 = vld [vmem:[%s14 + $0x50] sm:$0xff]
      %v3814 = vld [vmem:[%s14 + $0x58] sm:$0xff]
      %3816 = vset.pattern.permute.xlu0 0
      %3817 = vperm.xlu0 %3816, %v3803
      %v3818 = vpop.permute.xlu0 %3817
      %3821 = vset.pattern.permute.xlu0 0
      %3822 = vperm.xlu0 %3821, %v3804
      %v3823 = vpop.permute.xlu0 %3822
      %3826 = vset.pattern.permute.xlu0 0
      %3827 = vperm.xlu0 %3826, %v3805
      %v3828 = vpop.permute.xlu0 %3827
      %3831 = vset.pattern.permute.xlu0 0
      %3832 = vperm.xlu0 %3831, %v3806
      %v3833 = vpop.permute.xlu0 %3832
      %3836 = vset.pattern.permute.xlu0 0
      %3837 = vperm.xlu0 %3836, %v3807
      %v3838 = vpop.permute.xlu0 %3837
      %3841 = vset.pattern.permute.xlu0 0
      %3842 = vperm.xlu0 %3841, %v3808
      %v3843 = vpop.permute.xlu0 %3842
      %3846 = vset.pattern.permute.xlu0 0
      %3847 = vperm.xlu0 %3846, %v3809
      %v3848 = vpop.permute.xlu0 %3847
      %3851 = vset.pattern.permute.xlu0 0
      %3852 = vperm.xlu0 %3851, %v3810
      %v3853 = vpop.permute.xlu0 %3852
      %3856 = vset.pattern.permute.xlu0 0
      %3857 = vperm.xlu0 %3856, %v3811
      %v3858 = vpop.permute.xlu0 %3857
      %3861 = vset.pattern.permute.xlu0 0
      %3862 = vperm.xlu0 %3861, %v3812
      %v3863 = vpop.permute.xlu0 %3862
      %3866 = vset.pattern.permute.xlu0 0
      %3867 = vperm.xlu0 %3866, %v3813
      %v3868 = vpop.permute.xlu0 %3867
      %3871 = vset.pattern.permute.xlu0 0
      %3872 = vperm.xlu0 %3871, %v3814
      %v3873 = vpop.permute.xlu0 %3872
      %v3875 = vadd.f32 %v3735, %v3818
      %v3876 = vadd.f32 %v3774, %v3818
      %v3877 = vadd.f32 %v3737, %v3823
      %v3878 = vadd.f32 %v3776, %v3823
      %v3879 = vadd.f32 %v3740, %v3828
      %v3880 = vadd.f32 %v3779, %v3828
      %v3881 = vadd.f32 %v3742, %v3833
      %v3882 = vadd.f32 %v3781, %v3833
      %v3883 = vadd.f32 %v3745, %v3838
      %v3884 = vadd.f32 %v3784, %v3838
      %v3885 = vadd.f32 %v3747, %v3843
      %v3886 = vadd.f32 %v3786, %v3843
      %v3887 = vadd.f32 %v3750, %v3848
      %v3888 = vadd.f32 %v3789, %v3848
      %v3889 = vadd.f32 %v3752, %v3853
      %v3890 = vadd.f32 %v3791, %v3853
      %v3891 = vadd.f32 %v3755, %v3858
      %v3892 = vadd.f32 %v3794, %v3858
      %v3893 = vadd.f32 %v3757, %v3863
      %v3894 = vadd.f32 %v3796, %v3863
      %v3895 = vadd.f32 %v3760, %v3868
      %v3896 = vadd.f32 %v3799, %v3868
      %v3897 = vadd.f32 %v3762, %v3873
      %v3898 = vadd.f32 %v3801, %v3873
      %v3899 = vxor.u32 %v3875, 2147483648
      %v3900 = vxor.u32 %v3876, 2147483648
      %v3901 = vxor.u32 %v3877, 2147483648
      %v3902 = vxor.u32 %v3878, 2147483648
      %v3903 = vxor.u32 %v3879, 2147483648
      %v3904 = vxor.u32 %v3880, 2147483648
      %v3905 = vxor.u32 %v3881, 2147483648
      %v3906 = vxor.u32 %v3882, 2147483648
      %v3907 = vmul.f32 %v3899, 1.442695
      %v3908 = vpow.pop %v3907
      %v3909 = vmul.f32 %v3900, 1.442695
      %v3910 = vpow.pop %v3909
      %v3911 = vmul.f32 %v3901, 1.442695
      %v3912 = vpow.pop %v3911
      %v3913 = vmul.f32 %v3902, 1.442695
      %v3914 = vpow.pop %v3913
      %v3915 = vmul.f32 %v3903, 1.442695
      %v3916 = vpow.pop %v3915
      %v3917 = vmul.f32 %v3904, 1.442695
      %v3918 = vpow.pop %v3917
      %v3919 = vmul.f32 %v3905, 1.442695
      %v3920 = vpow.pop %v3919
      %v3921 = vmul.f32 %v3906, 1.442695
      %v3922 = vpow.pop %v3921
      %v3923 = vadd.f32 %v3908, 1.0
      %v3924 = vadd.f32 %v3910, 1.0
      %v3925 = vadd.f32 %v3912, 1.0
      %v3926 = vadd.f32 %v3914, 1.0
      %v3927 = vadd.f32 %v3916, 1.0
      %v3928 = vadd.f32 %v3918, 1.0
      %v3929 = vadd.f32 %v3920, 1.0
      %v3930 = vadd.f32 %v3922, 1.0
      %v3931 = vrcp.pop %v3923
      %v3932 = vmul.f32 %v3923, %v3931
      %v3933 = vsub.f32 1.0, %v3932
      %v3934 = vmul.f32 %v3931, %v3933
      %v3935 = vadd.f32 %v3931, %v3934
      %vm3936 = vweird.f32 %v3923
      %vm3937 = vweird.f32 %v3931
      %vm3938 = vmor %vm3936, %vm3937
      %v3939 = vsel %vm3938, %v3931, %v3935
      %v3940 = vand.u32 2147483647, %v3923
      %vm3941 = vcmp.eq.f32.partialorder %v3940, 8.507059e+37
      %v3942 = vand.u32 %v3923, 2147483648
      %v3943 = vor.u32 1.1754944e-38, %v3942
      %v3944 = vsel %vm3941, %v3943, %v3939
      %v3945 = vmul.f32 1.0, %v3944
      %v3946 = vrcp.pop %v3924
      %v3947 = vmul.f32 %v3924, %v3946
      %v3948 = vsub.f32 1.0, %v3947
      %v3949 = vmul.f32 %v3946, %v3948
      %v3950 = vadd.f32 %v3946, %v3949
      %vm3951 = vweird.f32 %v3924
      %vm3952 = vweird.f32 %v3946
      %vm3953 = vmor %vm3951, %vm3952
      %v3954 = vsel %vm3953, %v3946, %v3950
      %v3955 = vand.u32 2147483647, %v3924
      %vm3956 = vcmp.eq.f32.partialorder %v3955, 8.507059e+37
      %v3957 = vand.u32 %v3924, 2147483648
      %v3958 = vor.u32 1.1754944e-38, %v3957
      %v3959 = vsel %vm3956, %v3958, %v3954
      %v3960 = vmul.f32 1.0, %v3959
      %v3961 = vrcp.pop %v3925
      %v3962 = vmul.f32 %v3925, %v3961
      %v3963 = vsub.f32 1.0, %v3962
      %v3964 = vmul.f32 %v3961, %v3963
      %v3965 = vadd.f32 %v3961, %v3964
      %vm3966 = vweird.f32 %v3925
      %vm3967 = vweird.f32 %v3961
      %vm3968 = vmor %vm3966, %vm3967
      %v3969 = vsel %vm3968, %v3961, %v3965
      %v3970 = vand.u32 2147483647, %v3925
      %vm3971 = vcmp.eq.f32.partialorder %v3970, 8.507059e+37
      %v3972 = vand.u32 %v3925, 2147483648
      %v3973 = vor.u32 1.1754944e-38, %v3972
      %v3974 = vsel %vm3971, %v3973, %v3969
      %v3975 = vmul.f32 1.0, %v3974
      %v3976 = vrcp.pop %v3926
      %v3977 = vmul.f32 %v3926, %v3976
      %v3978 = vsub.f32 1.0, %v3977
      %v3979 = vmul.f32 %v3976, %v3978
      %v3980 = vadd.f32 %v3976, %v3979
      %vm3981 = vweird.f32 %v3926
      %vm3982 = vweird.f32 %v3976
      %vm3983 = vmor %vm3981, %vm3982
      %v3984 = vsel %vm3983, %v3976, %v3980
      %v3985 = vand.u32 2147483647, %v3926
      %vm3986 = vcmp.eq.f32.partialorder %v3985, 8.507059e+37
      %v3987 = vand.u32 %v3926, 2147483648
      %v3988 = vor.u32 1.1754944e-38, %v3987
      %v3989 = vsel %vm3986, %v3988, %v3984
      %v3990 = vmul.f32 1.0, %v3989
      %v3991 = vrcp.pop %v3927
      %v3992 = vmul.f32 %v3927, %v3991
      %v3993 = vsub.f32 1.0, %v3992
      %v3994 = vmul.f32 %v3991, %v3993
      %v3995 = vadd.f32 %v3991, %v3994
      %vm3996 = vweird.f32 %v3927
      %vm3997 = vweird.f32 %v3991
      %vm3998 = vmor %vm3996, %vm3997
      %v3999 = vsel %vm3998, %v3991, %v3995
      %v4000 = vand.u32 2147483647, %v3927
      %vm4001 = vcmp.eq.f32.partialorder %v4000, 8.507059e+37
      %v4002 = vand.u32 %v3927, 2147483648
      %v4003 = vor.u32 1.1754944e-38, %v4002
      %v4004 = vsel %vm4001, %v4003, %v3999
      %v4005 = vmul.f32 1.0, %v4004
      %v4006 = vrcp.pop %v3928
      %v4007 = vmul.f32 %v3928, %v4006
      %v4008 = vsub.f32 1.0, %v4007
      %v4009 = vmul.f32 %v4006, %v4008
      %v4010 = vadd.f32 %v4006, %v4009
      %vm4011 = vweird.f32 %v3928
      %vm4012 = vweird.f32 %v4006
      %vm4013 = vmor %vm4011, %vm4012
      %v4014 = vsel %vm4013, %v4006, %v4010
      %v4015 = vand.u32 2147483647, %v3928
      %vm4016 = vcmp.eq.f32.partialorder %v4015, 8.507059e+37
      %v4017 = vand.u32 %v3928, 2147483648
      %v4018 = vor.u32 1.1754944e-38, %v4017
      %v4019 = vsel %vm4016, %v4018, %v4014
      %v4020 = vmul.f32 1.0, %v4019
      %v4021 = vrcp.pop %v3929
      %v4022 = vmul.f32 %v3929, %v4021
      %v4023 = vsub.f32 1.0, %v4022
      %v4024 = vmul.f32 %v4021, %v4023
      %v4025 = vadd.f32 %v4021, %v4024
      %vm4026 = vweird.f32 %v3929
      %vm4027 = vweird.f32 %v4021
      %vm4028 = vmor %vm4026, %vm4027
      %v4029 = vsel %vm4028, %v4021, %v4025
      %v4030 = vand.u32 2147483647, %v3929
      %vm4031 = vcmp.eq.f32.partialorder %v4030, 8.507059e+37
      %v4032 = vand.u32 %v3929, 2147483648
      %v4033 = vor.u32 1.1754944e-38, %v4032
      %v4034 = vsel %vm4031, %v4033, %v4029
      %v4035 = vmul.f32 1.0, %v4034
      %v4036 = vrcp.pop %v3930
      %v4037 = vmul.f32 %v3930, %v4036
      %v4038 = vsub.f32 1.0, %v4037
      %v4039 = vmul.f32 %v4036, %v4038
      %v4040 = vadd.f32 %v4036, %v4039
      %vm4041 = vweird.f32 %v3930
      %vm4042 = vweird.f32 %v4036
      %vm4043 = vmor %vm4041, %vm4042
      %v4044 = vsel %vm4043, %v4036, %v4040
      %v4045 = vand.u32 2147483647, %v3930
      %vm4046 = vcmp.eq.f32.partialorder %v4045, 8.507059e+37
      %v4047 = vand.u32 %v3930, 2147483648
      %v4048 = vor.u32 1.1754944e-38, %v4047
      %v4049 = vsel %vm4046, %v4048, %v4044
      %v4050 = vmul.f32 1.0, %v4049
      %v4051 = vtanh.pop %v3883
      %v4052 = vtanh.pop %v3884
      %v4053 = vtanh.pop %v3885
      %v4054 = vtanh.pop %v3886
      %v4055 = vtanh.pop %v3887
      %v4056 = vtanh.pop %v3888
      %v4057 = vtanh.pop %v3889
      %v4058 = vtanh.pop %v3890
      %v4059 = vxor.u32 %v3891, 2147483648
      %v4060 = vxor.u32 %v3892, 2147483648
      %v4061 = vxor.u32 %v3893, 2147483648
      %v4062 = vxor.u32 %v3894, 2147483648
      %v4063 = vxor.u32 %v3895, 2147483648
      %v4064 = vxor.u32 %v3896, 2147483648
      %v4065 = vxor.u32 %v3897, 2147483648
      %v4066 = vxor.u32 %v3898, 2147483648
      %v4067 = vmul.f32 %v4059, 1.442695
      %v4068 = vpow.pop %v4067
      %v4069 = vmul.f32 %v4060, 1.442695
      %v4070 = vpow.pop %v4069
      %v4071 = vmul.f32 %v4061, 1.442695
      %v4072 = vpow.pop %v4071
      %v4073 = vmul.f32 %v4062, 1.442695
      %v4074 = vpow.pop %v4073
      %v4075 = vmul.f32 %v4063, 1.442695
      %v4076 = vpow.pop %v4075
      %v4077 = vmul.f32 %v4064, 1.442695
      %v4078 = vpow.pop %v4077
      %v4079 = vmul.f32 %v4065, 1.442695
      %v4080 = vpow.pop %v4079
      %v4081 = vmul.f32 %v4066, 1.442695
      %v4082 = vpow.pop %v4081
      %v4083 = vadd.f32 %v4068, 1.0
      %v4084 = vadd.f32 %v4070, 1.0
      %v4085 = vadd.f32 %v4072, 1.0
      %v4086 = vadd.f32 %v4074, 1.0
      %v4087 = vadd.f32 %v4076, 1.0
      %v4088 = vadd.f32 %v4078, 1.0
      %v4089 = vadd.f32 %v4080, 1.0
      %v4090 = vadd.f32 %v4082, 1.0
      %v4091 = vrcp.pop %v4083
      %v4092 = vmul.f32 %v4083, %v4091
      %v4093 = vsub.f32 1.0, %v4092
      %v4094 = vmul.f32 %v4091, %v4093
      %v4095 = vadd.f32 %v4091, %v4094
      %vm4096 = vweird.f32 %v4083
      %vm4097 = vweird.f32 %v4091
      %vm4098 = vmor %vm4096, %vm4097
      %v4099 = vsel %vm4098, %v4091, %v4095
      %v4100 = vand.u32 2147483647, %v4083
      %vm4101 = vcmp.eq.f32.partialorder %v4100, 8.507059e+37
      %v4102 = vand.u32 %v4083, 2147483648
      %v4103 = vor.u32 1.1754944e-38, %v4102
      %v4104 = vsel %vm4101, %v4103, %v4099
      %v4105 = vmul.f32 1.0, %v4104
      %v4106 = vrcp.pop %v4084
      %v4107 = vmul.f32 %v4084, %v4106
      %v4108 = vsub.f32 1.0, %v4107
      %v4109 = vmul.f32 %v4106, %v4108
      %v4110 = vadd.f32 %v4106, %v4109
      %vm4111 = vweird.f32 %v4084
      %vm4112 = vweird.f32 %v4106
      %vm4113 = vmor %vm4111, %vm4112
      %v4114 = vsel %vm4113, %v4106, %v4110
      %v4115 = vand.u32 2147483647, %v4084
      %vm4116 = vcmp.eq.f32.partialorder %v4115, 8.507059e+37
      %v4117 = vand.u32 %v4084, 2147483648
      %v4118 = vor.u32 1.1754944e-38, %v4117
      %v4119 = vsel %vm4116, %v4118, %v4114
      %v4120 = vmul.f32 1.0, %v4119
      %v4121 = vrcp.pop %v4085
      %v4122 = vmul.f32 %v4085, %v4121
      %v4123 = vsub.f32 1.0, %v4122
      %v4124 = vmul.f32 %v4121, %v4123
      %v4125 = vadd.f32 %v4121, %v4124
      %vm4126 = vweird.f32 %v4085
      %vm4127 = vweird.f32 %v4121
      %vm4128 = vmor %vm4126, %vm4127
      %v4129 = vsel %vm4128, %v4121, %v4125
      %v4130 = vand.u32 2147483647, %v4085
      %vm4131 = vcmp.eq.f32.partialorder %v4130, 8.507059e+37
      %v4132 = vand.u32 %v4085, 2147483648
      %v4133 = vor.u32 1.1754944e-38, %v4132
      %v4134 = vsel %vm4131, %v4133, %v4129
      %v4135 = vmul.f32 1.0, %v4134
      %v4136 = vrcp.pop %v4086
      %v4137 = vmul.f32 %v4086, %v4136
      %v4138 = vsub.f32 1.0, %v4137
      %v4139 = vmul.f32 %v4136, %v4138
      %v4140 = vadd.f32 %v4136, %v4139
      %vm4141 = vweird.f32 %v4086
      %vm4142 = vweird.f32 %v4136
      %vm4143 = vmor %vm4141, %vm4142
      %v4144 = vsel %vm4143, %v4136, %v4140
      %v4145 = vand.u32 2147483647, %v4086
      %vm4146 = vcmp.eq.f32.partialorder %v4145, 8.507059e+37
      %v4147 = vand.u32 %v4086, 2147483648
      %v4148 = vor.u32 1.1754944e-38, %v4147
      %v4149 = vsel %vm4146, %v4148, %v4144
      %v4150 = vmul.f32 1.0, %v4149
      %v4151 = vrcp.pop %v4087
      %v4152 = vmul.f32 %v4087, %v4151
      %v4153 = vsub.f32 1.0, %v4152
      %v4154 = vmul.f32 %v4151, %v4153
      %v4155 = vadd.f32 %v4151, %v4154
      %vm4156 = vweird.f32 %v4087
      %vm4157 = vweird.f32 %v4151
      %vm4158 = vmor %vm4156, %vm4157
      %v4159 = vsel %vm4158, %v4151, %v4155
      %v4160 = vand.u32 2147483647, %v4087
      %vm4161 = vcmp.eq.f32.partialorder %v4160, 8.507059e+37
      %v4162 = vand.u32 %v4087, 2147483648
      %v4163 = vor.u32 1.1754944e-38, %v4162
      %v4164 = vsel %vm4161, %v4163, %v4159
      %v4165 = vmul.f32 1.0, %v4164
      %v4166 = vrcp.pop %v4088
      %v4167 = vmul.f32 %v4088, %v4166
      %v4168 = vsub.f32 1.0, %v4167
      %v4169 = vmul.f32 %v4166, %v4168
      %v4170 = vadd.f32 %v4166, %v4169
      %vm4171 = vweird.f32 %v4088
      %vm4172 = vweird.f32 %v4166
      %vm4173 = vmor %vm4171, %vm4172
      %v4174 = vsel %vm4173, %v4166, %v4170
      %v4175 = vand.u32 2147483647, %v4088
      %vm4176 = vcmp.eq.f32.partialorder %v4175, 8.507059e+37
      %v4177 = vand.u32 %v4088, 2147483648
      %v4178 = vor.u32 1.1754944e-38, %v4177
      %v4179 = vsel %vm4176, %v4178, %v4174
      %v4180 = vmul.f32 1.0, %v4179
      %v4181 = vrcp.pop %v4089
      %v4182 = vmul.f32 %v4089, %v4181
      %v4183 = vsub.f32 1.0, %v4182
      %v4184 = vmul.f32 %v4181, %v4183
      %v4185 = vadd.f32 %v4181, %v4184
      %vm4186 = vweird.f32 %v4089
      %vm4187 = vweird.f32 %v4181
      %vm4188 = vmor %vm4186, %vm4187
      %v4189 = vsel %vm4188, %v4181, %v4185
      %v4190 = vand.u32 2147483647, %v4089
      %vm4191 = vcmp.eq.f32.partialorder %v4190, 8.507059e+37
      %v4192 = vand.u32 %v4089, 2147483648
      %v4193 = vor.u32 1.1754944e-38, %v4192
      %v4194 = vsel %vm4191, %v4193, %v4189
      %v4195 = vmul.f32 1.0, %v4194
      %v4196 = vrcp.pop %v4090
      %v4197 = vmul.f32 %v4090, %v4196
      %v4198 = vsub.f32 1.0, %v4197
      %v4199 = vmul.f32 %v4196, %v4198
      %v4200 = vadd.f32 %v4196, %v4199
      %vm4201 = vweird.f32 %v4090
      %vm4202 = vweird.f32 %v4196
      %vm4203 = vmor %vm4201, %vm4202
      %v4204 = vsel %vm4203, %v4196, %v4200
      %v4205 = vand.u32 2147483647, %v4090
      %vm4206 = vcmp.eq.f32.partialorder %v4205, 8.507059e+37
      %v4207 = vand.u32 %v4090, 2147483648
      %v4208 = vor.u32 1.1754944e-38, %v4207
      %v4209 = vsel %vm4206, %v4208, %v4204
      %v4210 = vmul.f32 1.0, %v4209
      %v4211 = vsub.f32 1.0, %v3945
      %v4212 = vsub.f32 1.0, %v3960
      %v4213 = vsub.f32 1.0, %v3975
      %v4214 = vsub.f32 1.0, %v3990
      %v4215 = vsub.f32 1.0, %v4005
      %v4216 = vsub.f32 1.0, %v4020
      %v4217 = vsub.f32 1.0, %v4035
      %v4218 = vsub.f32 1.0, %v4050
      %v4219 = vmul.f32 %v4211, %v632
      %v4220 = vmul.f32 %v4212, %v633
      %v4221 = vmul.f32 %v4213, %v634
      %v4222 = vmul.f32 %v4214, %v635
      %v4223 = vmul.f32 %v4215, %v636
      %v4224 = vmul.f32 %v4216, %v637
      %v4225 = vmul.f32 %v4217, %v638
      %v4226 = vmul.f32 %v4218, %v639
      %v4227 = vmul.f32 %v3945, %v4051
      %v4228 = vmul.f32 %v3960, %v4052
      %v4229 = vmul.f32 %v3975, %v4053
      %v4230 = vmul.f32 %v3990, %v4054
      %v4231 = vmul.f32 %v4005, %v4055
      %v4232 = vmul.f32 %v4020, %v4056
      %v4233 = vmul.f32 %v4035, %v4057
      %v4234 = vmul.f32 %v4050, %v4058
      %v4235 = vadd.f32 %v4219, %v4227
      %v4236 = vadd.f32 %v4220, %v4228
      %v4237 = vadd.f32 %v4221, %v4229
      %v4238 = vadd.f32 %v4222, %v4230
      %v4239 = vadd.f32 %v4223, %v4231
      %v4240 = vadd.f32 %v4224, %v4232
      %v4241 = vadd.f32 %v4225, %v4233
      %v4242 = vadd.f32 %v4226, %v4234
      %v4243 = vmul.f32 %v4105, %v4235
      %v4244 = vmul.f32 %v4120, %v4236
      %v4245 = vmul.f32 %v4135, %v4237
      %v4246 = vmul.f32 %v4150, %v4238
      %v4247 = vmul.f32 %v4165, %v4239
      %v4248 = vmul.f32 %v4180, %v4240
      %v4249 = vmul.f32 %v4195, %v4241
      %v4250 = vmul.f32 %v4210, %v4242
      %4251 = vst [vmem:[%s608] sm:$0xff] %v4243
      %4252 = vst [vmem:[%s608 + $0x8] sm:$0xff] %v4244
      %4253 = vst [vmem:[%s608 + $0x10] sm:$0xff] %v4245
      %4254 = vst [vmem:[%s608 + $0x18] sm:$0xff] %v4246
      %4255 = vst [vmem:[%s608 + $0x20] sm:$0xff] %v4247
      %4256 = vst [vmem:[%s608 + $0x28] sm:$0xff] %v4248
      %4257 = vst [vmem:[%s608 + $0x30] sm:$0xff] %v4249
      %4258 = vst [vmem:[%s608 + $0x38] sm:$0xff] %v4250
      %4259 = vst [vmem:[%s613] sm:$0xff] %v4235
      %4260 = vst [vmem:[%s613 + $0x8] sm:$0xff] %v4236
      %4261 = vst [vmem:[%s613 + $0x10] sm:$0xff] %v4237
      %4262 = vst [vmem:[%s613 + $0x18] sm:$0xff] %v4238
      %4263 = vst [vmem:[%s613 + $0x20] sm:$0xff] %v4239
      %4264 = vst [vmem:[%s613 + $0x28] sm:$0xff] %v4240
      %4265 = vst [vmem:[%s613 + $0x30] sm:$0xff] %v4241
      %4266 = vst [vmem:[%s613 + $0x38] sm:$0xff] %v4242
      %p4267 = scmp.lt.s32.totalorder %s29, 1
      %s4268 = scalar_select %p4267, %s29, 1
      %s4269 = smul.addr %s4268, 8
      %s4270 = smul.addr %s4269, 8
      %s4271 = scalar_lea.vmem %s15, %s4270
      %p4272 = scmp.lt.s32.totalorder %s29, 1
      %s4273 = scalar_select %p4272, %s29, 1
      %s4274 = smul.addr %s4273, 8
      %s4275 = smul.addr %s4274, 8
      %s4276 = scalar_lea.vmem %s16, %s4275
      %p4277 = scmp.lt.s32.totalorder %s29, 1
      %s4278 = scalar_select %p4277, %s29, 1
      %s4279 = smul.addr %s4278, 8
      %s4280 = smul.addr %s4279, 8
      %s4281 = scalar_lea.vmem %s17, %s4280
      // Predicated region
      $region81: #{sa_convlstm_cell_pallas.1} parent=79 // pred_check
        %p4282 = pneg %p377
      $region82: #{sa_convlstm_cell_pallas.1} parent=79 // pred_check_branch
        %4284 = sbr.rel (%p4282) target = $region84
      $region83: #{sa_convlstm_cell_pallas.1} parent=79 // pred_region
        _
      $region84: #{sa_convlstm_cell_pallas.1} parent=79 // pred_fallthru
        _
      // Predicated region
      $region85: #{sa_convlstm_cell_pallas.1} parent=79 // pred_check
        %p4285 = pneg %p403
      $region86: #{sa_convlstm_cell_pallas.1} parent=79 // pred_check_branch
        %4287 = sbr.rel (%p4285) target = $region88
      $region87: #{sa_convlstm_cell_pallas.1} parent=79 // pred_region
        _
      $region88: #{sa_convlstm_cell_pallas.1} parent=79 // pred_fallthru
        _
      // Predicated region
      $region89: #{sa_convlstm_cell_pallas.1} parent=79 // pred_check
        %p4288 = pneg %p429
      $region90: #{sa_convlstm_cell_pallas.1} parent=79 // pred_check_branch
        %4290 = sbr.rel (%p4288) target = $region92
      $region91: #{sa_convlstm_cell_pallas.1} parent=79 // pred_region
        _
      $region92: #{sa_convlstm_cell_pallas.1} parent=79 // pred_fallthru
        _
    $region80: #{sa_convlstm_cell_pallas.1} parent=5 // pred_fallthru
      _
    %p4291 = scmp.le.s32.totalorder 2, %s24
    // Predicated region
    $region93: #{sa_convlstm_cell_pallas.1} parent=5 // pred_check
      %p4292 = pneg %p4291
    $region94: #{sa_convlstm_cell_pallas.1} parent=5 // pred_check_branch
      %4294 = sbr.rel (%p4292) target = $region96
    $region95: #{sa_convlstm_cell_pallas.1} parent=5 // pred_region
      %s4295 = ssub.s32 %s24, 2
      // Predicated region
      $region97: #{sa_convlstm_cell_pallas.1} parent=95 // pred_check
        %p4296 = pneg %p383
      $region98: #{sa_convlstm_cell_pallas.1} parent=95 // pred_check_branch
        %4298 = sbr.rel (%p4296) target = $region100
      $region99: #{sa_convlstm_cell_pallas.1} parent=95 // pred_region
        %p4299 = scmp.lt.s32.totalorder %s30, 1
        %s4300 = scalar_select %p4299, %s30, 1
        %s4301 = smul.addr %s4300, 8
        %s4302 = smul.addr %s4301, 8
        %s4303 = scalar_lea.vmem %s15, %s4302
      $region100: #{sa_convlstm_cell_pallas.1} parent=95 // pred_fallthru
        _
      // Predicated region
      $region101: #{sa_convlstm_cell_pallas.1} parent=95 // pred_check
        %p4304 = pneg %p409
      $region102: #{sa_convlstm_cell_pallas.1} parent=95 // pred_check_branch
        %4306 = sbr.rel (%p4304) target = $region104
      $region103: #{sa_convlstm_cell_pallas.1} parent=95 // pred_region
        %p4307 = scmp.lt.s32.totalorder %s30, 1
        %s4308 = scalar_select %p4307, %s30, 1
        %s4309 = smul.addr %s4308, 8
        %s4310 = smul.addr %s4309, 8
        %s4311 = scalar_lea.vmem %s16, %s4310
      $region104: #{sa_convlstm_cell_pallas.1} parent=95 // pred_fallthru
        _
      // Predicated region
      $region105: #{sa_convlstm_cell_pallas.1} parent=95 // pred_check
        %p4312 = pneg %p435
      $region106: #{sa_convlstm_cell_pallas.1} parent=95 // pred_check_branch
        %4314 = sbr.rel (%p4312) target = $region108
      $region107: #{sa_convlstm_cell_pallas.1} parent=95 // pred_region
        %p4315 = scmp.lt.s32.totalorder %s30, 1
        %s4316 = scalar_select %p4315, %s30, 1
        %s4317 = smul.addr %s4316, 8
        %s4318 = smul.addr %s4317, 8
        %s4319 = scalar_lea.vmem %s17, %s4318
      $region108: #{sa_convlstm_cell_pallas.1} parent=95 // pred_fallthru
        _
    $region96: #{sa_convlstm_cell_pallas.1} parent=5 // pred_fallthru
      _
  $region6: #{sa_convlstm_cell_pallas.1} parent=0 // loop_footer
    %s28 = sadd.s32 1, %s24
  $region7: #{sa_convlstm_cell_pallas.1} parent=0 // loop_footer_branch
    %23 = sbr.rel target = $region3
  $region8: #{sa_convlstm_cell_pallas.1} parent=0 // loop_exit
    _

</llo_original>
